<compile_context>
chip_gen: v7x
topology: tpu7x:2x2x1
jax: 0.10.0
libtpu: 0.0.40
codegen_flags: <defaults>
</compile_context>

<pallas_src>
import functools

import jax
import jax.numpy as jnp
from jax.experimental import pallas as pl
from jax.experimental.pallas import tpu as pltpu

DROPOUT = 0.2
N_EMB_D = 32
BLOCK_SIZE = 8
N_HEAD = 6
HEAD_SIZE = N_EMB_D // N_HEAD  # 5
LN_EPS = 1e-5


def _block_kernel(*refs, nh, hs, scale, p_drop, train):
    if train:
        seed_ref = refs[0]
        refs = refs[1:]
    (x_ref, g1_ref, be1_ref, wq_ref, wk_ref, wv_ref, wp_ref, bp_ref,
     g2_ref, be2_ref, w1_ref, c1_ref, w2_ref, c2_ref, o_ref) = refs

    BB, T, C = x_ref.shape
    BT = BB * T

    if train:
        # One seed per grid step (per batch tile), hoisted out of the head loop.
        pltpu.prng_seed(seed_ref[0] + pl.program_id(0))
        keep_thresh = jnp.uint32(min(int(p_drop * 4294967296.0), 4294967295))
        inv_keep = jnp.float32(1.0 / (1.0 - p_drop))

        def dropout(a):
            bits = pltpu.bitcast(pltpu.prng_random_bits(a.shape), jnp.uint32)
            return jnp.where(bits >= keep_thresh, a * inv_keep, 0.0)
    else:
        def dropout(a):  # nn.Dropout in eval mode is the identity
            return a

    def layer_norm(z, g, b):
        mu = jnp.mean(z, axis=-1, keepdims=True)
        zc = z - mu
        var = jnp.mean(zc * zc, axis=-1, keepdims=True)
        return zc * jax.lax.rsqrt(var + LN_EPS) * g + b

    x = x_ref[...].astype(jnp.float32).reshape(BT, C)

    # ---------- multi-head causal self-attention over ln1(x) ----------
    xn = layer_norm(x, g1_ref[...], be1_ref[...])              # (BT, C)

    row = jax.lax.broadcasted_iota(jnp.int32, (BB, T, T), 1)   # hoisted (shared by heads)
    col = jax.lax.broadcasted_iota(jnp.int32, (BB, T, T), 2)
    causal = col <= row

    sa = jnp.zeros((BT, C), jnp.float32)
    for i in range(nh):
        q = jnp.dot(xn, wq_ref[i], preferred_element_type=jnp.float32).reshape(BB, T, hs)
        k = jnp.dot(xn, wk_ref[i], preferred_element_type=jnp.float32).reshape(BB, T, hs)
        v = jnp.dot(xn, wv_ref[i], preferred_element_type=jnp.float32).reshape(BB, T, hs)

        # Contract the head dim of both operands: no materialized transpose of k.
        s = jnp.einsum('bqh,bkh->bqk', q, k,
                       preferred_element_type=jnp.float32) * scale      # (BB, T, T)
        s = jnp.where(causal, s, -1e30)          # finite large-negative causal mask
        s = s - jnp.max(s, axis=-1, keepdims=True)
        e = jnp.exp(s)
        att = e / jnp.sum(e, axis=-1, keepdims=True)
        att = dropout(att)

        ho = jnp.einsum('bqk,bkh->bqh', att, v,
                        preferred_element_type=jnp.float32)             # (BB, T, hs)
        # Accumulate directly into the output projection (== concat then proj).
        sa = sa + jnp.dot(ho.reshape(BT, hs), wp_ref[i],
                          preferred_element_type=jnp.float32)
    sa = dropout(sa + bp_ref[...])
    x = x + sa                                                   # first residual

    # ---------- feed-forward over ln2(x) ----------
    xn2 = layer_norm(x, g2_ref[...], be2_ref[...])
    h = jnp.maximum(
        jnp.dot(xn2, w1_ref[...], preferred_element_type=jnp.float32) + c1_ref[...], 0.0)
    f = jnp.dot(h, w2_ref[...], preferred_element_type=jnp.float32) + c2_ref[...]
    x = x + dropout(f)                                           # second residual

    o_ref[...] = x.reshape(BB, T, C).astype(o_ref.dtype)


def block_forward(x, params, *, train=False, p_drop=DROPOUT, seed=0, block_b=None):
    """Fused Block forward.

    x: (B, T, C) float32.
    params (PyTorch layouts):
      ln1_g, ln1_b, ln2_g, ln2_b : (C,)
      wq, wk, wv                 : (NH, HS, C)   per-head nn.Linear weights (no bias)
      proj_w (C, NH*HS), proj_b (C,)
      ffn_w1 (4C, C), ffn_b1 (4C,), ffn_w2 (C, 4C), ffn_b2 (C,)
    Returns (B, T, C).
    """
    B, T, C = x.shape
    NH, HS, _ = params['wq'].shape

    if block_b is None:
        block_b = B
        # Keep per-step intermediates comfortably inside VMEM (safe for v7x's 64 MiB).
        while block_b > 256 and block_b % 2 == 0:
            block_b //= 2
    assert B % block_b == 0, "batch must be divisible by the batch tile"

    f32 = lambda a: jnp.asarray(a, jnp.float32)
    # Kernel-layout parameters (row-major matmuls on the MXU).
    kparams = (
        f32(params['ln1_g']).reshape(1, C),
        f32(params['ln1_b']).reshape(1, C),
        jnp.transpose(f32(params['wq']), (0, 2, 1)),          # (NH, C, HS)
        jnp.transpose(f32(params['wk']), (0, 2, 1)),
        jnp.transpose(f32(params['wv']), (0, 2, 1)),
        f32(params['proj_w']).T.reshape(NH, HS, C),           # per-head proj blocks
        f32(params['proj_b']).reshape(1, C),
        f32(params['ln2_g']).reshape(1, C),
        f32(params['ln2_b']).reshape(1, C),
        f32(params['ffn_w1']).T,                              # (C, 4C)
        f32(params['ffn_b1']).reshape(1, 4 * C),
        f32(params['ffn_w2']).T,                              # (4C, C)
        f32(params['ffn_b2']).reshape(1, C),
    )

    def replicated_spec(arr):
        zeros = (0,) * arr.ndim
        return pl.BlockSpec(arr.shape, lambda *args: zeros)

    in_specs = [pl.BlockSpec((block_b, T, C), lambda b, *_: (b, 0, 0))]
    in_specs += [replicated_spec(p) for p in kparams]
    out_spec = pl.BlockSpec((block_b, T, C), lambda b, *_: (b, 0, 0))

    kernel = functools.partial(
        _block_kernel, nh=NH, hs=HS, scale=float(HS) ** -0.5,
        p_drop=float(p_drop), train=bool(train))

    prefetch_args = (jnp.array([seed], jnp.int32),) if train else ()

    return pl.pallas_call(
        kernel,
        out_shape=jax.ShapeDtypeStruct((B, T, C), jnp.float32),
        grid_spec=pltpu.PrefetchScalarGridSpec(
            num_scalar_prefetch=1 if train else 0,
            grid=(B // block_b,),
            in_specs=in_specs,
            out_specs=out_spec,
        ),
        compiler_params=pltpu.CompilerParams(
            dimension_semantics=("parallel",)),
    )(*prefetch_args, f32(x), *kparams)


def _block_ref(x, p):
    """Pure-JAX reference (eval mode: dropout is identity)."""
    def ln(z, g, b):
        mu = z.mean(-1, keepdims=True)
        var = ((z - mu) ** 2).mean(-1, keepdims=True)
        return (z - mu) / jnp.sqrt(var + LN_EPS) * g + b

    NH, HS, _ = p['wq'].shape
    T = x.shape[1]
    tril = jnp.tril(jnp.ones((T, T), bool))

    xn = ln(x, p['ln1_g'], p['ln1_b'])
    heads = []
    for i in range(NH):
        q = xn @ p['wq'][i].T
        k = xn @ p['wk'][i].T
        v = xn @ p['wv'][i].T
        wei = (q @ jnp.swapaxes(k, -2, -1)) * (HS ** -0.5)
        wei = jnp.where(tril, wei, -jnp.inf)
        wei = jax.nn.softmax(wei, axis=-1)
        heads.append(wei @ v)
    sa = jnp.concatenate(heads, -1) @ p['proj_w'].T + p['proj_b']
    x = x + sa

    xn2 = ln(x, p['ln2_g'], p['ln2_b'])
    h = jax.nn.relu(xn2 @ p['ffn_w1'].T + p['ffn_b1'])
    f = h @ p['ffn_w2'].T + p['ffn_b2']
    return x + f


if __name__ == "__main__":
    B, T, C = 2, BLOCK_SIZE, N_EMB_D
    NH, HS = N_HEAD, HEAD_SIZE

    key = jax.random.PRNGKey(0)
    ks = jax.random.split(key, 14)

    x = jax.random.normal(ks[0], (B, T, C), dtype=jnp.float32)

    def uni(k, shape, fan_in):
        bound = 1.0 / (fan_in ** 0.5)
        return jax.random.uniform(k, shape, jnp.float32, -bound, bound)

    params = {
        'ln1_g': 1.0 + 0.1 * jax.random.normal(ks[1], (C,), jnp.float32),
        'ln1_b': 0.1 * jax.random.normal(ks[2], (C,), jnp.float32),
        'ln2_g': 1.0 + 0.1 * jax.random.normal(ks[3], (C,), jnp.float32),
        'ln2_b': 0.1 * jax.random.normal(ks[4], (C,), jnp.float32),
        'wq': uni(ks[5], (NH, HS, C), C),
        'wk': uni(ks[6], (NH, HS, C), C),
        'wv': uni(ks[7], (NH, HS, C), C),
        'proj_w': uni(ks[8], (C, NH * HS), NH * HS),
        'proj_b': uni(ks[9], (C,), NH * HS),
        'ffn_w1': uni(ks[10], (4 * C, C), C),
        'ffn_b1': uni(ks[11], (4 * C,), C),
        'ffn_w2': uni(ks[12], (C, 4 * C), 4 * C),
        'ffn_b2': uni(ks[13], (C,), 4 * C),
    }

    out = block_forward(x, params, train=False)
    out = jax.block_until_ready(out)

    ref = _block_ref(x, params)
    assert out.shape == (B, T, C)
    err = float(jnp.max(jnp.abs(out - ref)))
    assert jnp.allclose(out, ref, atol=2e-4, rtol=2e-4), f"max abs err {err}"

    print("KERNEL_OK")
</pallas_src>

<mosaic_0001>
module attributes {stable_mosaic.version = 11 : i64} {
  func.func @_block_kernel(%arg0: i32, %arg1: memref<2x8x32xf32, #tpu.memory_space<vmem>>, %arg2: memref<1x32xf32, #tpu.memory_space<vmem>>, %arg3: memref<1x32xf32, #tpu.memory_space<vmem>>, %arg4: memref<6x32x5xf32, #tpu.memory_space<vmem>>, %arg5: memref<6x32x5xf32, #tpu.memory_space<vmem>>, %arg6: memref<6x32x5xf32, #tpu.memory_space<vmem>>, %arg7: memref<6x5x32xf32, #tpu.memory_space<vmem>>, %arg8: memref<1x32xf32, #tpu.memory_space<vmem>>, %arg9: memref<1x32xf32, #tpu.memory_space<vmem>>, %arg10: memref<1x32xf32, #tpu.memory_space<vmem>>, %arg11: memref<32x128xf32, #tpu.memory_space<vmem>>, %arg12: memref<1x128xf32, #tpu.memory_space<vmem>>, %arg13: memref<128x32xf32, #tpu.memory_space<vmem>>, %arg14: memref<1x32xf32, #tpu.memory_space<vmem>>, %arg15: memref<2x8x32xf32, #tpu.memory_space<vmem>>) attributes {dimension_semantics = [#tpu.dimension_semantics<parallel>], iteration_bounds = array<i64: 1>, scalar_prefetch = 0 : i64, scratch_operands = 0 : i64, tpu.core_type = #tpu.core_type<tc>, window_params = [{transform_indices = @transform_0, window_bounds = array<i64: 2, 8, 32>}, {pipeline_mode = #tpu.pipeline_mode<synchronous>, transform_indices = @transform_1, window_bounds = array<i64: 1, 32>}, {pipeline_mode = #tpu.pipeline_mode<synchronous>, transform_indices = @transform_2, window_bounds = array<i64: 1, 32>}, {pipeline_mode = #tpu.pipeline_mode<synchronous>, transform_indices = @transform_3, window_bounds = array<i64: 6, 32, 5>}, {pipeline_mode = #tpu.pipeline_mode<synchronous>, transform_indices = @transform_4, window_bounds = array<i64: 6, 32, 5>}, {pipeline_mode = #tpu.pipeline_mode<synchronous>, transform_indices = @transform_5, window_bounds = array<i64: 6, 32, 5>}, {pipeline_mode = #tpu.pipeline_mode<synchronous>, transform_indices = @transform_6, window_bounds = array<i64: 6, 5, 32>}, {pipeline_mode = #tpu.pipeline_mode<synchronous>, transform_indices = @transform_7, window_bounds = array<i64: 1, 32>}, {pipeline_mode = #tpu.pipeline_mode<synchronous>, transform_indices = @transform_8, window_bounds = array<i64: 1, 32>}, {pipeline_mode = #tpu.pipeline_mode<synchronous>, transform_indices = @transform_9, window_bounds = array<i64: 1, 32>}, {pipeline_mode = #tpu.pipeline_mode<synchronous>, transform_indices = @transform_10, window_bounds = array<i64: 32, 128>}, {pipeline_mode = #tpu.pipeline_mode<synchronous>, transform_indices = @transform_11, window_bounds = array<i64: 1, 128>}, {pipeline_mode = #tpu.pipeline_mode<synchronous>, transform_indices = @transform_12, window_bounds = array<i64: 128, 32>}, {pipeline_mode = #tpu.pipeline_mode<synchronous>, transform_indices = @transform_13, window_bounds = array<i64: 1, 32>}, {transform_indices = @transform_14, window_bounds = array<i64: 2, 8, 32>}]} {
    %c0 = arith.constant 0 : index
    %c0_0 = arith.constant 0 : index
    %c0_1 = arith.constant 0 : index
    %0 = vector.load %arg1[%c0, %c0_0, %c0_1] : memref<2x8x32xf32, #tpu.memory_space<vmem>>, vector<2x8x32xf32>
    %1 = vector.shape_cast %0 : vector<2x8x32xf32> to vector<16x32xf32>
    %c0_2 = arith.constant 0 : index
    %c0_3 = arith.constant 0 : index
    %2 = vector.load %arg2[%c0_2, %c0_3] : memref<1x32xf32, #tpu.memory_space<vmem>>, vector<1x32xf32>
    %c0_4 = arith.constant 0 : index
    %c0_5 = arith.constant 0 : index
    %3 = vector.load %arg3[%c0_4, %c0_5] : memref<1x32xf32, #tpu.memory_space<vmem>>, vector<1x32xf32>
    %cst = arith.constant dense<0.000000e+00> : vector<16xf32>
    %4 = vector.multi_reduction <add>, %1, %cst [1] : vector<16x32xf32> to vector<16xf32>
    %5 = vector.shape_cast %4 : vector<16xf32> to vector<16x1xf32>
    %cst_6 = arith.constant 3.200000e+01 : f32
    %6 = vector.broadcast %cst_6 : f32 to vector<16x1xf32>
    %7 = arith.divf %5, %6 : vector<16x1xf32>
    %8 = vector.broadcast %7 : vector<16x1xf32> to vector<16x32xf32>
    %9 = arith.subf %1, %8 : vector<16x32xf32>
    %10 = arith.mulf %9, %9 : vector<16x32xf32>
    %cst_7 = arith.constant dense<0.000000e+00> : vector<16xf32>
    %11 = vector.multi_reduction <add>, %10, %cst_7 [1] : vector<16x32xf32> to vector<16xf32>
    %12 = vector.shape_cast %11 : vector<16xf32> to vector<16x1xf32>
    %cst_8 = arith.constant 3.200000e+01 : f32
    %13 = vector.broadcast %cst_8 : f32 to vector<16x1xf32>
    %14 = arith.divf %12, %13 : vector<16x1xf32>
    %cst_9 = arith.constant 9.99999974E-6 : f32
    %15 = vector.broadcast %cst_9 : f32 to vector<16x1xf32>
    %16 = arith.addf %14, %15 : vector<16x1xf32>
    %17 = math.rsqrt %16 : vector<16x1xf32>
    %18 = vector.broadcast %17 : vector<16x1xf32> to vector<16x32xf32>
    %19 = arith.mulf %9, %18 : vector<16x32xf32>
    %20 = vector.broadcast %2 : vector<1x32xf32> to vector<16x32xf32>
    %21 = arith.mulf %19, %20 : vector<16x32xf32>
    %22 = vector.broadcast %3 : vector<1x32xf32> to vector<16x32xf32>
    %23 = arith.addf %21, %22 : vector<16x32xf32>
    %24 = tpu.iota {dimensions = array<i32: 1>} : vector<2x8x8xi32>
    %25 = tpu.iota {dimensions = array<i32: 2>} : vector<2x8x8xi32>
    %26 = arith.cmpi sle, %25, %24 : vector<2x8x8xi32>
    %cst_10 = arith.constant 0.000000e+00 : f32
    %27 = vector.broadcast %cst_10 : f32 to vector<16x32xf32>
    %c0_11 = arith.constant 0 : index
    %c0_12 = arith.constant 0 : index
    %c0_13 = arith.constant 0 : index
    %28 = vector.load %arg4[%c0_11, %c0_12, %c0_13] : memref<6x32x5xf32, #tpu.memory_space<vmem>>, vector<1x32x5xf32>
    %29 = vector.shape_cast %28 : vector<1x32x5xf32> to vector<32x5xf32>
    %cst_14 = arith.constant dense<0.000000e+00> : vector<16x5xf32>
    %30 = tpu.matmul %23, %29, %cst_14 {dimension_numbers = #tpu.dot_dimension_numbers<[1], [0], [0], [1], [0, 0, 1, 1], [], []>} : vector<16x32xf32>, vector<32x5xf32>, vector<16x5xf32> -> vector<16x5xf32>
    %31 = vector.shape_cast %30 : vector<16x5xf32> to vector<2x8x5xf32>
    %c0_15 = arith.constant 0 : index
    %c0_16 = arith.constant 0 : index
    %c0_17 = arith.constant 0 : index
    %32 = vector.load %arg5[%c0_15, %c0_16, %c0_17] : memref<6x32x5xf32, #tpu.memory_space<vmem>>, vector<1x32x5xf32>
    %33 = vector.shape_cast %32 : vector<1x32x5xf32> to vector<32x5xf32>
    %cst_18 = arith.constant dense<0.000000e+00> : vector<16x5xf32>
    %34 = tpu.matmul %23, %33, %cst_18 {dimension_numbers = #tpu.dot_dimension_numbers<[1], [0], [0], [1], [0, 0, 1, 1], [], []>} : vector<16x32xf32>, vector<32x5xf32>, vector<16x5xf32> -> vector<16x5xf32>
    %35 = vector.shape_cast %34 : vector<16x5xf32> to vector<2x8x5xf32>
    %c0_19 = arith.constant 0 : index
    %c0_20 = arith.constant 0 : index
    %c0_21 = arith.constant 0 : index
    %36 = vector.load %arg6[%c0_19, %c0_20, %c0_21] : memref<6x32x5xf32, #tpu.memory_space<vmem>>, vector<1x32x5xf32>
    %37 = vector.shape_cast %36 : vector<1x32x5xf32> to vector<32x5xf32>
    %cst_22 = arith.constant dense<0.000000e+00> : vector<16x5xf32>
    %38 = tpu.matmul %23, %37, %cst_22 {dimension_numbers = #tpu.dot_dimension_numbers<[1], [0], [0], [1], [0, 0, 1, 1], [], []>} : vector<16x32xf32>, vector<32x5xf32>, vector<16x5xf32> -> vector<16x5xf32>
    %39 = vector.shape_cast %38 : vector<16x5xf32> to vector<2x8x5xf32>
    "tpu.trace_start"() <{level = 10 : i32, message = "bqh,bkh->bqk"}> : () -> ()
    %cst_23 = arith.constant dense<0.000000e+00> : vector<2x8x8xf32>
    %40 = tpu.matmul %31, %35, %cst_23 {dimension_numbers = #tpu.dot_dimension_numbers<[2], [2], [1], [1], [0, 0, 0, 1, 1, 1], [0], [0]>} : vector<2x8x5xf32>, vector<2x8x5xf32>, vector<2x8x8xf32> -> vector<2x8x8xf32>
    "tpu.trace_stop"() : () -> ()
    %cst_24 = arith.constant 0.44721359 : f32
    %41 = vector.broadcast %cst_24 : f32 to vector<2x8x8xf32>
    %42 = arith.mulf %40, %41 : vector<2x8x8xf32>
    %cst_25 = arith.constant -1.000000e+30 : f32
    %43 = vector.broadcast %cst_25 : f32 to vector<2x8x8xf32>
    %44 = arith.select %26, %42, %43 : vector<2x8x8xi1>, vector<2x8x8xf32>
    %cst_26 = arith.constant dense<0xFF800000> : vector<2x8xf32>
    %45 = vector.multi_reduction <maximumf>, %44, %cst_26 [2] : vector<2x8x8xf32> to vector<2x8xf32>
    %46 = vector.shape_cast %45 : vector<2x8xf32> to vector<2x8x1xf32>
    %47 = vector.broadcast %46 : vector<2x8x1xf32> to vector<2x8x8xf32>
    %48 = arith.subf %44, %47 : vector<2x8x8xf32>
    %49 = math.exp %48 : vector<2x8x8xf32>
    %cst_27 = arith.constant dense<0.000000e+00> : vector<2x8xf32>
    %50 = vector.multi_reduction <add>, %49, %cst_27 [2] : vector<2x8x8xf32> to vector<2x8xf32>
    %51 = vector.shape_cast %50 : vector<2x8xf32> to vector<2x8x1xf32>
    %52 = vector.broadcast %51 : vector<2x8x1xf32> to vector<2x8x8xf32>
    %53 = arith.divf %49, %52 : vector<2x8x8xf32>
    "tpu.trace_start"() <{level = 10 : i32, message = "bqk,bkh->bqh"}> : () -> ()
    %cst_28 = arith.constant dense<0.000000e+00> : vector<2x8x5xf32>
    %54 = tpu.matmul %53, %39, %cst_28 {dimension_numbers = #tpu.dot_dimension_numbers<[2], [1], [1], [2], [0, 0, 0, 1, 1, 2], [0], [0]>} : vector<2x8x8xf32>, vector<2x8x5xf32>, vector<2x8x5xf32> -> vector<2x8x5xf32>
    "tpu.trace_stop"() : () -> ()
    %55 = vector.shape_cast %54 : vector<2x8x5xf32> to vector<16x5xf32>
    %c0_29 = arith.constant 0 : index
    %c0_30 = arith.constant 0 : index
    %c0_31 = arith.constant 0 : index
    %56 = vector.load %arg7[%c0_29, %c0_30, %c0_31] : memref<6x5x32xf32, #tpu.memory_space<vmem>>, vector<1x5x32xf32>
    %57 = vector.shape_cast %56 : vector<1x5x32xf32> to vector<5x32xf32>
    %cst_32 = arith.constant dense<0.000000e+00> : vector<16x32xf32>
    %58 = tpu.matmul %55, %57, %cst_32 {dimension_numbers = #tpu.dot_dimension_numbers<[1], [0], [0], [1], [0, 0, 1, 1], [], []>} : vector<16x5xf32>, vector<5x32xf32>, vector<16x32xf32> -> vector<16x32xf32>
    %59 = arith.addf %27, %58 : vector<16x32xf32>
    %c1 = arith.constant 1 : index
    %c0_33 = arith.constant 0 : index
    %c0_34 = arith.constant 0 : index
    %60 = vector.load %arg4[%c1, %c0_33, %c0_34] : memref<6x32x5xf32, #tpu.memory_space<vmem>>, vector<1x32x5xf32>
    %61 = vector.shape_cast %60 : vector<1x32x5xf32> to vector<32x5xf32>
    %cst_35 = arith.constant dense<0.000000e+00> : vector<16x5xf32>
    %62 = tpu.matmul %23, %61, %cst_35 {dimension_numbers = #tpu.dot_dimension_numbers<[1], [0], [0], [1], [0, 0, 1, 1], [], []>} : vector<16x32xf32>, vector<32x5xf32>, vector<16x5xf32> -> vector<16x5xf32>
    %63 = vector.shape_cast %62 : vector<16x5xf32> to vector<2x8x5xf32>
    %c1_36 = arith.constant 1 : index
    %c0_37 = arith.constant 0 : index
    %c0_38 = arith.constant 0 : index
    %64 = vector.load %arg5[%c1_36, %c0_37, %c0_38] : memref<6x32x5xf32, #tpu.memory_space<vmem>>, vector<1x32x5xf32>
    %65 = vector.shape_cast %64 : vector<1x32x5xf32> to vector<32x5xf32>
    %cst_39 = arith.constant dense<0.000000e+00> : vector<16x5xf32>
    %66 = tpu.matmul %23, %65, %cst_39 {dimension_numbers = #tpu.dot_dimension_numbers<[1], [0], [0], [1], [0, 0, 1, 1], [], []>} : vector<16x32xf32>, vector<32x5xf32>, vector<16x5xf32> -> vector<16x5xf32>
    %67 = vector.shape_cast %66 : vector<16x5xf32> to vector<2x8x5xf32>
    %c1_40 = arith.constant 1 : index
    %c0_41 = arith.constant 0 : index
    %c0_42 = arith.constant 0 : index
    %68 = vector.load %arg6[%c1_40, %c0_41, %c0_42] : memref<6x32x5xf32, #tpu.memory_space<vmem>>, vector<1x32x5xf32>
    %69 = vector.shape_cast %68 : vector<1x32x5xf32> to vector<32x5xf32>
    %cst_43 = arith.constant dense<0.000000e+00> : vector<16x5xf32>
    %70 = tpu.matmul %23, %69, %cst_43 {dimension_numbers = #tpu.dot_dimension_numbers<[1], [0], [0], [1], [0, 0, 1, 1], [], []>} : vector<16x32xf32>, vector<32x5xf32>, vector<16x5xf32> -> vector<16x5xf32>
    %71 = vector.shape_cast %70 : vector<16x5xf32> to vector<2x8x5xf32>
    "tpu.trace_start"() <{level = 10 : i32, message = "bqh,bkh->bqk"}> : () -> ()
    %cst_44 = arith.constant dense<0.000000e+00> : vector<2x8x8xf32>
    %72 = tpu.matmul %63, %67, %cst_44 {dimension_numbers = #tpu.dot_dimension_numbers<[2], [2], [1], [1], [0, 0, 0, 1, 1, 1], [0], [0]>} : vector<2x8x5xf32>, vector<2x8x5xf32>, vector<2x8x8xf32> -> vector<2x8x8xf32>
    "tpu.trace_stop"() : () -> ()
    %cst_45 = arith.constant 0.44721359 : f32
    %73 = vector.broadcast %cst_45 : f32 to vector<2x8x8xf32>
    %74 = arith.mulf %72, %73 : vector<2x8x8xf32>
    %cst_46 = arith.constant -1.000000e+30 : f32
    %75 = vector.broadcast %cst_46 : f32 to vector<2x8x8xf32>
    %76 = arith.select %26, %74, %75 : vector<2x8x8xi1>, vector<2x8x8xf32>
    %cst_47 = arith.constant dense<0xFF800000> : vector<2x8xf32>
    %77 = vector.multi_reduction <maximumf>, %76, %cst_47 [2] : vector<2x8x8xf32> to vector<2x8xf32>
    %78 = vector.shape_cast %77 : vector<2x8xf32> to vector<2x8x1xf32>
    %79 = vector.broadcast %78 : vector<2x8x1xf32> to vector<2x8x8xf32>
    %80 = arith.subf %76, %79 : vector<2x8x8xf32>
    %81 = math.exp %80 : vector<2x8x8xf32>
    %cst_48 = arith.constant dense<0.000000e+00> : vector<2x8xf32>
    %82 = vector.multi_reduction <add>, %81, %cst_48 [2] : vector<2x8x8xf32> to vector<2x8xf32>
    %83 = vector.shape_cast %82 : vector<2x8xf32> to vector<2x8x1xf32>
    %84 = vector.broadcast %83 : vector<2x8x1xf32> to vector<2x8x8xf32>
    %85 = arith.divf %81, %84 : vector<2x8x8xf32>
    "tpu.trace_start"() <{level = 10 : i32, message = "bqk,bkh->bqh"}> : () -> ()
    %cst_49 = arith.constant dense<0.000000e+00> : vector<2x8x5xf32>
    %86 = tpu.matmul %85, %71, %cst_49 {dimension_numbers = #tpu.dot_dimension_numbers<[2], [1], [1], [2], [0, 0, 0, 1, 1, 2], [0], [0]>} : vector<2x8x8xf32>, vector<2x8x5xf32>, vector<2x8x5xf32> -> vector<2x8x5xf32>
    "tpu.trace_stop"() : () -> ()
    %87 = vector.shape_cast %86 : vector<2x8x5xf32> to vector<16x5xf32>
    %c1_50 = arith.constant 1 : index
    %c0_51 = arith.constant 0 : index
    %c0_52 = arith.constant 0 : index
    %88 = vector.load %arg7[%c1_50, %c0_51, %c0_52] : memref<6x5x32xf32, #tpu.memory_space<vmem>>, vector<1x5x32xf32>
    %89 = vector.shape_cast %88 : vector<1x5x32xf32> to vector<5x32xf32>
    %cst_53 = arith.constant dense<0.000000e+00> : vector<16x32xf32>
    %90 = tpu.matmul %87, %89, %cst_53 {dimension_numbers = #tpu.dot_dimension_numbers<[1], [0], [0], [1], [0, 0, 1, 1], [], []>} : vector<16x5xf32>, vector<5x32xf32>, vector<16x32xf32> -> vector<16x32xf32>
    %91 = arith.addf %59, %90 : vector<16x32xf32>
    %c2 = arith.constant 2 : index
    %c0_54 = arith.constant 0 : index
    %c0_55 = arith.constant 0 : index
    %92 = vector.load %arg4[%c2, %c0_54, %c0_55] : memref<6x32x5xf32, #tpu.memory_space<vmem>>, vector<1x32x5xf32>
    %93 = vector.shape_cast %92 : vector<1x32x5xf32> to vector<32x5xf32>
    %cst_56 = arith.constant dense<0.000000e+00> : vector<16x5xf32>
    %94 = tpu.matmul %23, %93, %cst_56 {dimension_numbers = #tpu.dot_dimension_numbers<[1], [0], [0], [1], [0, 0, 1, 1], [], []>} : vector<16x32xf32>, vector<32x5xf32>, vector<16x5xf32> -> vector<16x5xf32>
    %95 = vector.shape_cast %94 : vector<16x5xf32> to vector<2x8x5xf32>
    %c2_57 = arith.constant 2 : index
    %c0_58 = arith.constant 0 : index
    %c0_59 = arith.constant 0 : index
    %96 = vector.load %arg5[%c2_57, %c0_58, %c0_59] : memref<6x32x5xf32, #tpu.memory_space<vmem>>, vector<1x32x5xf32>
    %97 = vector.shape_cast %96 : vector<1x32x5xf32> to vector<32x5xf32>
    %cst_60 = arith.constant dense<0.000000e+00> : vector<16x5xf32>
    %98 = tpu.matmul %23, %97, %cst_60 {dimension_numbers = #tpu.dot_dimension_numbers<[1], [0], [0], [1], [0, 0, 1, 1], [], []>} : vector<16x32xf32>, vector<32x5xf32>, vector<16x5xf32> -> vector<16x5xf32>
    %99 = vector.shape_cast %98 : vector<16x5xf32> to vector<2x8x5xf32>
    %c2_61 = arith.constant 2 : index
    %c0_62 = arith.constant 0 : index
    %c0_63 = arith.constant 0 : index
    %100 = vector.load %arg6[%c2_61, %c0_62, %c0_63] : memref<6x32x5xf32, #tpu.memory_space<vmem>>, vector<1x32x5xf32>
    %101 = vector.shape_cast %100 : vector<1x32x5xf32> to vector<32x5xf32>
    %cst_64 = arith.constant dense<0.000000e+00> : vector<16x5xf32>
    %102 = tpu.matmul %23, %101, %cst_64 {dimension_numbers = #tpu.dot_dimension_numbers<[1], [0], [0], [1], [0, 0, 1, 1], [], []>} : vector<16x32xf32>, vector<32x5xf32>, vector<16x5xf32> -> vector<16x5xf32>
    %103 = vector.shape_cast %102 : vector<16x5xf32> to vector<2x8x5xf32>
    "tpu.trace_start"() <{level = 10 : i32, message = "bqh,bkh->bqk"}> : () -> ()
    %cst_65 = arith.constant dense<0.000000e+00> : vector<2x8x8xf32>
    %104 = tpu.matmul %95, %99, %cst_65 {dimension_numbers = #tpu.dot_dimension_numbers<[2], [2], [1], [1], [0, 0, 0, 1, 1, 1], [0], [0]>} : vector<2x8x5xf32>, vector<2x8x5xf32>, vector<2x8x8xf32> -> vector<2x8x8xf32>
    "tpu.trace_stop"() : () -> ()
    %cst_66 = arith.constant 0.44721359 : f32
    %105 = vector.broadcast %cst_66 : f32 to vector<2x8x8xf32>
    %106 = arith.mulf %104, %105 : vector<2x8x8xf32>
    %cst_67 = arith.constant -1.000000e+30 : f32
    %107 = vector.broadcast %cst_67 : f32 to vector<2x8x8xf32>
    %108 = arith.select %26, %106, %107 : vector<2x8x8xi1>, vector<2x8x8xf32>
    %cst_68 = arith.constant dense<0xFF800000> : vector<2x8xf32>
    %109 = vector.multi_reduction <maximumf>, %108, %cst_68 [2] : vector<2x8x8xf32> to vector<2x8xf32>
    %110 = vector.shape_cast %109 : vector<2x8xf32> to vector<2x8x1xf32>
    %111 = vector.broadcast %110 : vector<2x8x1xf32> to vector<2x8x8xf32>
    %112 = arith.subf %108, %111 : vector<2x8x8xf32>
    %113 = math.exp %112 : vector<2x8x8xf32>
    %cst_69 = arith.constant dense<0.000000e+00> : vector<2x8xf32>
    %114 = vector.multi_reduction <add>, %113, %cst_69 [2] : vector<2x8x8xf32> to vector<2x8xf32>
    %115 = vector.shape_cast %114 : vector<2x8xf32> to vector<2x8x1xf32>
    %116 = vector.broadcast %115 : vector<2x8x1xf32> to vector<2x8x8xf32>
    %117 = arith.divf %113, %116 : vector<2x8x8xf32>
    "tpu.trace_start"() <{level = 10 : i32, message = "bqk,bkh->bqh"}> : () -> ()
    %cst_70 = arith.constant dense<0.000000e+00> : vector<2x8x5xf32>
    %118 = tpu.matmul %117, %103, %cst_70 {dimension_numbers = #tpu.dot_dimension_numbers<[2], [1], [1], [2], [0, 0, 0, 1, 1, 2], [0], [0]>} : vector<2x8x8xf32>, vector<2x8x5xf32>, vector<2x8x5xf32> -> vector<2x8x5xf32>
    "tpu.trace_stop"() : () -> ()
    %119 = vector.shape_cast %118 : vector<2x8x5xf32> to vector<16x5xf32>
    %c2_71 = arith.constant 2 : index
    %c0_72 = arith.constant 0 : index
    %c0_73 = arith.constant 0 : index
    %120 = vector.load %arg7[%c2_71, %c0_72, %c0_73] : memref<6x5x32xf32, #tpu.memory_space<vmem>>, vector<1x5x32xf32>
    %121 = vector.shape_cast %120 : vector<1x5x32xf32> to vector<5x32xf32>
    %cst_74 = arith.constant dense<0.000000e+00> : vector<16x32xf32>
    %122 = tpu.matmul %119, %121, %cst_74 {dimension_numbers = #tpu.dot_dimension_numbers<[1], [0], [0], [1], [0, 0, 1, 1], [], []>} : vector<16x5xf32>, vector<5x32xf32>, vector<16x32xf32> -> vector<16x32xf32>
    %123 = arith.addf %91, %122 : vector<16x32xf32>
    %c3 = arith.constant 3 : index
    %c0_75 = arith.constant 0 : index
    %c0_76 = arith.constant 0 : index
    %124 = vector.load %arg4[%c3, %c0_75, %c0_76] : memref<6x32x5xf32, #tpu.memory_space<vmem>>, vector<1x32x5xf32>
    %125 = vector.shape_cast %124 : vector<1x32x5xf32> to vector<32x5xf32>
    %cst_77 = arith.constant dense<0.000000e+00> : vector<16x5xf32>
    %126 = tpu.matmul %23, %125, %cst_77 {dimension_numbers = #tpu.dot_dimension_numbers<[1], [0], [0], [1], [0, 0, 1, 1], [], []>} : vector<16x32xf32>, vector<32x5xf32>, vector<16x5xf32> -> vector<16x5xf32>
    %127 = vector.shape_cast %126 : vector<16x5xf32> to vector<2x8x5xf32>
    %c3_78 = arith.constant 3 : index
    %c0_79 = arith.constant 0 : index
    %c0_80 = arith.constant 0 : index
    %128 = vector.load %arg5[%c3_78, %c0_79, %c0_80] : memref<6x32x5xf32, #tpu.memory_space<vmem>>, vector<1x32x5xf32>
    %129 = vector.shape_cast %128 : vector<1x32x5xf32> to vector<32x5xf32>
    %cst_81 = arith.constant dense<0.000000e+00> : vector<16x5xf32>
    %130 = tpu.matmul %23, %129, %cst_81 {dimension_numbers = #tpu.dot_dimension_numbers<[1], [0], [0], [1], [0, 0, 1, 1], [], []>} : vector<16x32xf32>, vector<32x5xf32>, vector<16x5xf32> -> vector<16x5xf32>
    %131 = vector.shape_cast %130 : vector<16x5xf32> to vector<2x8x5xf32>
    %c3_82 = arith.constant 3 : index
    %c0_83 = arith.constant 0 : index
    %c0_84 = arith.constant 0 : index
    %132 = vector.load %arg6[%c3_82, %c0_83, %c0_84] : memref<6x32x5xf32, #tpu.memory_space<vmem>>, vector<1x32x5xf32>
    %133 = vector.shape_cast %132 : vector<1x32x5xf32> to vector<32x5xf32>
    %cst_85 = arith.constant dense<0.000000e+00> : vector<16x5xf32>
    %134 = tpu.matmul %23, %133, %cst_85 {dimension_numbers = #tpu.dot_dimension_numbers<[1], [0], [0], [1], [0, 0, 1, 1], [], []>} : vector<16x32xf32>, vector<32x5xf32>, vector<16x5xf32> -> vector<16x5xf32>
    %135 = vector.shape_cast %134 : vector<16x5xf32> to vector<2x8x5xf32>
    "tpu.trace_start"() <{level = 10 : i32, message = "bqh,bkh->bqk"}> : () -> ()
    %cst_86 = arith.constant dense<0.000000e+00> : vector<2x8x8xf32>
    %136 = tpu.matmul %127, %131, %cst_86 {dimension_numbers = #tpu.dot_dimension_numbers<[2], [2], [1], [1], [0, 0, 0, 1, 1, 1], [0], [0]>} : vector<2x8x5xf32>, vector<2x8x5xf32>, vector<2x8x8xf32> -> vector<2x8x8xf32>
    "tpu.trace_stop"() : () -> ()
    %cst_87 = arith.constant 0.44721359 : f32
    %137 = vector.broadcast %cst_87 : f32 to vector<2x8x8xf32>
    %138 = arith.mulf %136, %137 : vector<2x8x8xf32>
    %cst_88 = arith.constant -1.000000e+30 : f32
    %139 = vector.broadcast %cst_88 : f32 to vector<2x8x8xf32>
    %140 = arith.select %26, %138, %139 : vector<2x8x8xi1>, vector<2x8x8xf32>
    %cst_89 = arith.constant dense<0xFF800000> : vector<2x8xf32>
    %141 = vector.multi_reduction <maximumf>, %140, %cst_89 [2] : vector<2x8x8xf32> to vector<2x8xf32>
    %142 = vector.shape_cast %141 : vector<2x8xf32> to vector<2x8x1xf32>
    %143 = vector.broadcast %142 : vector<2x8x1xf32> to vector<2x8x8xf32>
    %144 = arith.subf %140, %143 : vector<2x8x8xf32>
    %145 = math.exp %144 : vector<2x8x8xf32>
    %cst_90 = arith.constant dense<0.000000e+00> : vector<2x8xf32>
    %146 = vector.multi_reduction <add>, %145, %cst_90 [2] : vector<2x8x8xf32> to vector<2x8xf32>
    %147 = vector.shape_cast %146 : vector<2x8xf32> to vector<2x8x1xf32>
    %148 = vector.broadcast %147 : vector<2x8x1xf32> to vector<2x8x8xf32>
    %149 = arith.divf %145, %148 : vector<2x8x8xf32>
    "tpu.trace_start"() <{level = 10 : i32, message = "bqk,bkh->bqh"}> : () -> ()
    %cst_91 = arith.constant dense<0.000000e+00> : vector<2x8x5xf32>
    %150 = tpu.matmul %149, %135, %cst_91 {dimension_numbers = #tpu.dot_dimension_numbers<[2], [1], [1], [2], [0, 0, 0, 1, 1, 2], [0], [0]>} : vector<2x8x8xf32>, vector<2x8x5xf32>, vector<2x8x5xf32> -> vector<2x8x5xf32>
    "tpu.trace_stop"() : () -> ()
    %151 = vector.shape_cast %150 : vector<2x8x5xf32> to vector<16x5xf32>
    %c3_92 = arith.constant 3 : index
    %c0_93 = arith.constant 0 : index
    %c0_94 = arith.constant 0 : index
    %152 = vector.load %arg7[%c3_92, %c0_93, %c0_94] : memref<6x5x32xf32, #tpu.memory_space<vmem>>, vector<1x5x32xf32>
    %153 = vector.shape_cast %152 : vector<1x5x32xf32> to vector<5x32xf32>
    %cst_95 = arith.constant dense<0.000000e+00> : vector<16x32xf32>
    %154 = tpu.matmul %151, %153, %cst_95 {dimension_numbers = #tpu.dot_dimension_numbers<[1], [0], [0], [1], [0, 0, 1, 1], [], []>} : vector<16x5xf32>, vector<5x32xf32>, vector<16x32xf32> -> vector<16x32xf32>
    %155 = arith.addf %123, %154 : vector<16x32xf32>
    %c4 = arith.constant 4 : index
    %c0_96 = arith.constant 0 : index
    %c0_97 = arith.constant 0 : index
    %156 = vector.load %arg4[%c4, %c0_96, %c0_97] : memref<6x32x5xf32, #tpu.memory_space<vmem>>, vector<1x32x5xf32>
    %157 = vector.shape_cast %156 : vector<1x32x5xf32> to vector<32x5xf32>
    %cst_98 = arith.constant dense<0.000000e+00> : vector<16x5xf32>
    %158 = tpu.matmul %23, %157, %cst_98 {dimension_numbers = #tpu.dot_dimension_numbers<[1], [0], [0], [1], [0, 0, 1, 1], [], []>} : vector<16x32xf32>, vector<32x5xf32>, vector<16x5xf32> -> vector<16x5xf32>
    %159 = vector.shape_cast %158 : vector<16x5xf32> to vector<2x8x5xf32>
    %c4_99 = arith.constant 4 : index
    %c0_100 = arith.constant 0 : index
    %c0_101 = arith.constant 0 : index
    %160 = vector.load %arg5[%c4_99, %c0_100, %c0_101] : memref<6x32x5xf32, #tpu.memory_space<vmem>>, vector<1x32x5xf32>
    %161 = vector.shape_cast %160 : vector<1x32x5xf32> to vector<32x5xf32>
    %cst_102 = arith.constant dense<0.000000e+00> : vector<16x5xf32>
    %162 = tpu.matmul %23, %161, %cst_102 {dimension_numbers = #tpu.dot_dimension_numbers<[1], [0], [0], [1], [0, 0, 1, 1], [], []>} : vector<16x32xf32>, vector<32x5xf32>, vector<16x5xf32> -> vector<16x5xf32>
    %163 = vector.shape_cast %162 : vector<16x5xf32> to vector<2x8x5xf32>
    %c4_103 = arith.constant 4 : index
    %c0_104 = arith.constant 0 : index
    %c0_105 = arith.constant 0 : index
    %164 = vector.load %arg6[%c4_103, %c0_104, %c0_105] : memref<6x32x5xf32, #tpu.memory_space<vmem>>, vector<1x32x5xf32>
    %165 = vector.shape_cast %164 : vector<1x32x5xf32> to vector<32x5xf32>
    %cst_106 = arith.constant dense<0.000000e+00> : vector<16x5xf32>
    %166 = tpu.matmul %23, %165, %cst_106 {dimension_numbers = #tpu.dot_dimension_numbers<[1], [0], [0], [1], [0, 0, 1, 1], [], []>} : vector<16x32xf32>, vector<32x5xf32>, vector<16x5xf32> -> vector<16x5xf32>
    %167 = vector.shape_cast %166 : vector<16x5xf32> to vector<2x8x5xf32>
    "tpu.trace_start"() <{level = 10 : i32, message = "bqh,bkh->bqk"}> : () -> ()
    %cst_107 = arith.constant dense<0.000000e+00> : vector<2x8x8xf32>
    %168 = tpu.matmul %159, %163, %cst_107 {dimension_numbers = #tpu.dot_dimension_numbers<[2], [2], [1], [1], [0, 0, 0, 1, 1, 1], [0], [0]>} : vector<2x8x5xf32>, vector<2x8x5xf32>, vector<2x8x8xf32> -> vector<2x8x8xf32>
    "tpu.trace_stop"() : () -> ()
    %cst_108 = arith.constant 0.44721359 : f32
    %169 = vector.broadcast %cst_108 : f32 to vector<2x8x8xf32>
    %170 = arith.mulf %168, %169 : vector<2x8x8xf32>
    %cst_109 = arith.constant -1.000000e+30 : f32
    %171 = vector.broadcast %cst_109 : f32 to vector<2x8x8xf32>
    %172 = arith.select %26, %170, %171 : vector<2x8x8xi1>, vector<2x8x8xf32>
    %cst_110 = arith.constant dense<0xFF800000> : vector<2x8xf32>
    %173 = vector.multi_reduction <maximumf>, %172, %cst_110 [2] : vector<2x8x8xf32> to vector<2x8xf32>
    %174 = vector.shape_cast %173 : vector<2x8xf32> to vector<2x8x1xf32>
    %175 = vector.broadcast %174 : vector<2x8x1xf32> to vector<2x8x8xf32>
    %176 = arith.subf %172, %175 : vector<2x8x8xf32>
    %177 = math.exp %176 : vector<2x8x8xf32>
    %cst_111 = arith.constant dense<0.000000e+00> : vector<2x8xf32>
    %178 = vector.multi_reduction <add>, %177, %cst_111 [2] : vector<2x8x8xf32> to vector<2x8xf32>
    %179 = vector.shape_cast %178 : vector<2x8xf32> to vector<2x8x1xf32>
    %180 = vector.broadcast %179 : vector<2x8x1xf32> to vector<2x8x8xf32>
    %181 = arith.divf %177, %180 : vector<2x8x8xf32>
    "tpu.trace_start"() <{level = 10 : i32, message = "bqk,bkh->bqh"}> : () -> ()
    %cst_112 = arith.constant dense<0.000000e+00> : vector<2x8x5xf32>
    %182 = tpu.matmul %181, %167, %cst_112 {dimension_numbers = #tpu.dot_dimension_numbers<[2], [1], [1], [2], [0, 0, 0, 1, 1, 2], [0], [0]>} : vector<2x8x8xf32>, vector<2x8x5xf32>, vector<2x8x5xf32> -> vector<2x8x5xf32>
    "tpu.trace_stop"() : () -> ()
    %183 = vector.shape_cast %182 : vector<2x8x5xf32> to vector<16x5xf32>
    %c4_113 = arith.constant 4 : index
    %c0_114 = arith.constant 0 : index
    %c0_115 = arith.constant 0 : index
    %184 = vector.load %arg7[%c4_113, %c0_114, %c0_115] : memref<6x5x32xf32, #tpu.memory_space<vmem>>, vector<1x5x32xf32>
    %185 = vector.shape_cast %184 : vector<1x5x32xf32> to vector<5x32xf32>
    %cst_116 = arith.constant dense<0.000000e+00> : vector<16x32xf32>
    %186 = tpu.matmul %183, %185, %cst_116 {dimension_numbers = #tpu.dot_dimension_numbers<[1], [0], [0], [1], [0, 0, 1, 1], [], []>} : vector<16x5xf32>, vector<5x32xf32>, vector<16x32xf32> -> vector<16x32xf32>
    %187 = arith.addf %155, %186 : vector<16x32xf32>
    %c5 = arith.constant 5 : index
    %c0_117 = arith.constant 0 : index
    %c0_118 = arith.constant 0 : index
    %188 = vector.load %arg4[%c5, %c0_117, %c0_118] : memref<6x32x5xf32, #tpu.memory_space<vmem>>, vector<1x32x5xf32>
    %189 = vector.shape_cast %188 : vector<1x32x5xf32> to vector<32x5xf32>
    %cst_119 = arith.constant dense<0.000000e+00> : vector<16x5xf32>
    %190 = tpu.matmul %23, %189, %cst_119 {dimension_numbers = #tpu.dot_dimension_numbers<[1], [0], [0], [1], [0, 0, 1, 1], [], []>} : vector<16x32xf32>, vector<32x5xf32>, vector<16x5xf32> -> vector<16x5xf32>
    %191 = vector.shape_cast %190 : vector<16x5xf32> to vector<2x8x5xf32>
    %c5_120 = arith.constant 5 : index
    %c0_121 = arith.constant 0 : index
    %c0_122 = arith.constant 0 : index
    %192 = vector.load %arg5[%c5_120, %c0_121, %c0_122] : memref<6x32x5xf32, #tpu.memory_space<vmem>>, vector<1x32x5xf32>
    %193 = vector.shape_cast %192 : vector<1x32x5xf32> to vector<32x5xf32>
    %cst_123 = arith.constant dense<0.000000e+00> : vector<16x5xf32>
    %194 = tpu.matmul %23, %193, %cst_123 {dimension_numbers = #tpu.dot_dimension_numbers<[1], [0], [0], [1], [0, 0, 1, 1], [], []>} : vector<16x32xf32>, vector<32x5xf32>, vector<16x5xf32> -> vector<16x5xf32>
    %195 = vector.shape_cast %194 : vector<16x5xf32> to vector<2x8x5xf32>
    %c5_124 = arith.constant 5 : index
    %c0_125 = arith.constant 0 : index
    %c0_126 = arith.constant 0 : index
    %196 = vector.load %arg6[%c5_124, %c0_125, %c0_126] : memref<6x32x5xf32, #tpu.memory_space<vmem>>, vector<1x32x5xf32>
    %197 = vector.shape_cast %196 : vector<1x32x5xf32> to vector<32x5xf32>
    %cst_127 = arith.constant dense<0.000000e+00> : vector<16x5xf32>
    %198 = tpu.matmul %23, %197, %cst_127 {dimension_numbers = #tpu.dot_dimension_numbers<[1], [0], [0], [1], [0, 0, 1, 1], [], []>} : vector<16x32xf32>, vector<32x5xf32>, vector<16x5xf32> -> vector<16x5xf32>
    %199 = vector.shape_cast %198 : vector<16x5xf32> to vector<2x8x5xf32>
    "tpu.trace_start"() <{level = 10 : i32, message = "bqh,bkh->bqk"}> : () -> ()
    %cst_128 = arith.constant dense<0.000000e+00> : vector<2x8x8xf32>
    %200 = tpu.matmul %191, %195, %cst_128 {dimension_numbers = #tpu.dot_dimension_numbers<[2], [2], [1], [1], [0, 0, 0, 1, 1, 1], [0], [0]>} : vector<2x8x5xf32>, vector<2x8x5xf32>, vector<2x8x8xf32> -> vector<2x8x8xf32>
    "tpu.trace_stop"() : () -> ()
    %cst_129 = arith.constant 0.44721359 : f32
    %201 = vector.broadcast %cst_129 : f32 to vector<2x8x8xf32>
    %202 = arith.mulf %200, %201 : vector<2x8x8xf32>
    %cst_130 = arith.constant -1.000000e+30 : f32
    %203 = vector.broadcast %cst_130 : f32 to vector<2x8x8xf32>
    %204 = arith.select %26, %202, %203 : vector<2x8x8xi1>, vector<2x8x8xf32>
    %cst_131 = arith.constant dense<0xFF800000> : vector<2x8xf32>
    %205 = vector.multi_reduction <maximumf>, %204, %cst_131 [2] : vector<2x8x8xf32> to vector<2x8xf32>
    %206 = vector.shape_cast %205 : vector<2x8xf32> to vector<2x8x1xf32>
    %207 = vector.broadcast %206 : vector<2x8x1xf32> to vector<2x8x8xf32>
    %208 = arith.subf %204, %207 : vector<2x8x8xf32>
    %209 = math.exp %208 : vector<2x8x8xf32>
    %cst_132 = arith.constant dense<0.000000e+00> : vector<2x8xf32>
    %210 = vector.multi_reduction <add>, %209, %cst_132 [2] : vector<2x8x8xf32> to vector<2x8xf32>
    %211 = vector.shape_cast %210 : vector<2x8xf32> to vector<2x8x1xf32>
    %212 = vector.broadcast %211 : vector<2x8x1xf32> to vector<2x8x8xf32>
    %213 = arith.divf %209, %212 : vector<2x8x8xf32>
    "tpu.trace_start"() <{level = 10 : i32, message = "bqk,bkh->bqh"}> : () -> ()
    %cst_133 = arith.constant dense<0.000000e+00> : vector<2x8x5xf32>
    %214 = tpu.matmul %213, %199, %cst_133 {dimension_numbers = #tpu.dot_dimension_numbers<[2], [1], [1], [2], [0, 0, 0, 1, 1, 2], [0], [0]>} : vector<2x8x8xf32>, vector<2x8x5xf32>, vector<2x8x5xf32> -> vector<2x8x5xf32>
    "tpu.trace_stop"() : () -> ()
    %215 = vector.shape_cast %214 : vector<2x8x5xf32> to vector<16x5xf32>
    %c5_134 = arith.constant 5 : index
    %c0_135 = arith.constant 0 : index
    %c0_136 = arith.constant 0 : index
    %216 = vector.load %arg7[%c5_134, %c0_135, %c0_136] : memref<6x5x32xf32, #tpu.memory_space<vmem>>, vector<1x5x32xf32>
    %217 = vector.shape_cast %216 : vector<1x5x32xf32> to vector<5x32xf32>
    %cst_137 = arith.constant dense<0.000000e+00> : vector<16x32xf32>
    %218 = tpu.matmul %215, %217, %cst_137 {dimension_numbers = #tpu.dot_dimension_numbers<[1], [0], [0], [1], [0, 0, 1, 1], [], []>} : vector<16x5xf32>, vector<5x32xf32>, vector<16x32xf32> -> vector<16x32xf32>
    %219 = arith.addf %187, %218 : vector<16x32xf32>
    %c0_138 = arith.constant 0 : index
    %c0_139 = arith.constant 0 : index
    %220 = vector.load %arg8[%c0_138, %c0_139] : memref<1x32xf32, #tpu.memory_space<vmem>>, vector<1x32xf32>
    %221 = vector.broadcast %220 : vector<1x32xf32> to vector<16x32xf32>
    %222 = arith.addf %219, %221 : vector<16x32xf32>
    %223 = arith.addf %1, %222 : vector<16x32xf32>
    %c0_140 = arith.constant 0 : index
    %c0_141 = arith.constant 0 : index
    %224 = vector.load %arg9[%c0_140, %c0_141] : memref<1x32xf32, #tpu.memory_space<vmem>>, vector<1x32xf32>
    %c0_142 = arith.constant 0 : index
    %c0_143 = arith.constant 0 : index
    %225 = vector.load %arg10[%c0_142, %c0_143] : memref<1x32xf32, #tpu.memory_space<vmem>>, vector<1x32xf32>
    %cst_144 = arith.constant dense<0.000000e+00> : vector<16xf32>
    %226 = vector.multi_reduction <add>, %223, %cst_144 [1] : vector<16x32xf32> to vector<16xf32>
    %227 = vector.shape_cast %226 : vector<16xf32> to vector<16x1xf32>
    %cst_145 = arith.constant 3.200000e+01 : f32
    %228 = vector.broadcast %cst_145 : f32 to vector<16x1xf32>
    %229 = arith.divf %227, %228 : vector<16x1xf32>
    %230 = vector.broadcast %229 : vector<16x1xf32> to vector<16x32xf32>
    %231 = arith.subf %223, %230 : vector<16x32xf32>
    %232 = arith.mulf %231, %231 : vector<16x32xf32>
    %cst_146 = arith.constant dense<0.000000e+00> : vector<16xf32>
    %233 = vector.multi_reduction <add>, %232, %cst_146 [1] : vector<16x32xf32> to vector<16xf32>
    %234 = vector.shape_cast %233 : vector<16xf32> to vector<16x1xf32>
    %cst_147 = arith.constant 3.200000e+01 : f32
    %235 = vector.broadcast %cst_147 : f32 to vector<16x1xf32>
    %236 = arith.divf %234, %235 : vector<16x1xf32>
    %cst_148 = arith.constant 9.99999974E-6 : f32
    %237 = vector.broadcast %cst_148 : f32 to vector<16x1xf32>
    %238 = arith.addf %236, %237 : vector<16x1xf32>
    %239 = math.rsqrt %238 : vector<16x1xf32>
    %240 = vector.broadcast %239 : vector<16x1xf32> to vector<16x32xf32>
    %241 = arith.mulf %231, %240 : vector<16x32xf32>
    %242 = vector.broadcast %224 : vector<1x32xf32> to vector<16x32xf32>
    %243 = arith.mulf %241, %242 : vector<16x32xf32>
    %244 = vector.broadcast %225 : vector<1x32xf32> to vector<16x32xf32>
    %245 = arith.addf %243, %244 : vector<16x32xf32>
    %c0_149 = arith.constant 0 : index
    %c0_150 = arith.constant 0 : index
    %246 = vector.load %arg11[%c0_149, %c0_150] : memref<32x128xf32, #tpu.memory_space<vmem>>, vector<32x128xf32>
    %cst_151 = arith.constant dense<0.000000e+00> : vector<16x128xf32>
    %247 = tpu.matmul %245, %246, %cst_151 {dimension_numbers = #tpu.dot_dimension_numbers<[1], [0], [0], [1], [0, 0, 1, 1], [], []>} : vector<16x32xf32>, vector<32x128xf32>, vector<16x128xf32> -> vector<16x128xf32>
    %c0_152 = arith.constant 0 : index
    %c0_153 = arith.constant 0 : index
    %248 = vector.load %arg12[%c0_152, %c0_153] : memref<1x128xf32, #tpu.memory_space<vmem>>, vector<1x128xf32>
    %249 = vector.broadcast %248 : vector<1x128xf32> to vector<16x128xf32>
    %250 = arith.addf %247, %249 : vector<16x128xf32>
    %cst_154 = arith.constant 0.000000e+00 : f32
    %251 = vector.broadcast %cst_154 : f32 to vector<16x128xf32>
    %252 = arith.maximumf %250, %251 : vector<16x128xf32>
    %c0_155 = arith.constant 0 : index
    %c0_156 = arith.constant 0 : index
    %253 = vector.load %arg13[%c0_155, %c0_156] : memref<128x32xf32, #tpu.memory_space<vmem>>, vector<128x32xf32>
    %cst_157 = arith.constant dense<0.000000e+00> : vector<16x32xf32>
    %254 = tpu.matmul %252, %253, %cst_157 {dimension_numbers = #tpu.dot_dimension_numbers<[1], [0], [0], [1], [0, 0, 1, 1], [], []>} : vector<16x128xf32>, vector<128x32xf32>, vector<16x32xf32> -> vector<16x32xf32>
    %c0_158 = arith.constant 0 : index
    %c0_159 = arith.constant 0 : index
    %255 = vector.load %arg14[%c0_158, %c0_159] : memref<1x32xf32, #tpu.memory_space<vmem>>, vector<1x32xf32>
    %256 = vector.broadcast %255 : vector<1x32xf32> to vector<16x32xf32>
    %257 = arith.addf %254, %256 : vector<16x32xf32>
    %258 = arith.addf %223, %257 : vector<16x32xf32>
    %259 = vector.shape_cast %258 : vector<16x32xf32> to vector<2x8x32xf32>
    %c0_160 = arith.constant 0 : index
    %c0_161 = arith.constant 0 : index
    %c0_162 = arith.constant 0 : index
    %260 = vector.load %arg15[%c0_160, %c0_161, %c0_162] : memref<2x8x32xf32, #tpu.memory_space<vmem>>, vector<2x8x32xf32>
    tpu.vector_store %arg15[%c0_160, %c0_161, %c0_162], %259 {strides = array<i32>} : memref<2x8x32xf32, #tpu.memory_space<vmem>>, vector<2x8x32xf32>,
    return
  }
  func.func @transform_0(%arg0: i32) -> (i32, i32, i32) {
    %c0_i32 = arith.constant 0 : i32
    %c0_i32_0 = arith.constant 0 : i32
    %c0_i32_1 = arith.constant 0 : i32
    return %arg0, %c0_i32, %c0_i32_0 : i32, i32, i32
  }
  func.func @transform_1(%arg0: i32) -> (i32, i32) {
    %c0_i32 = arith.constant 0 : i32
    %c0_i32_0 = arith.constant 0 : i32
    %c0_i32_1 = arith.constant 0 : i32
    return %c0_i32, %c0_i32_0 : i32, i32
  }
  func.func @transform_2(%arg0: i32) -> (i32, i32) {
    %c0_i32 = arith.constant 0 : i32
    %c0_i32_0 = arith.constant 0 : i32
    %c0_i32_1 = arith.constant 0 : i32
    return %c0_i32, %c0_i32_0 : i32, i32
  }
  func.func @transform_3(%arg0: i32) -> (i32, i32, i32) {
    %c0_i32 = arith.constant 0 : i32
    %c0_i32_0 = arith.constant 0 : i32
    %c0_i32_1 = arith.constant 0 : i32
    %c0_i32_2 = arith.constant 0 : i32
    return %c0_i32, %c0_i32_0, %c0_i32_1 : i32, i32, i32
  }
  func.func @transform_4(%arg0: i32) -> (i32, i32, i32) {
    %c0_i32 = arith.constant 0 : i32
    %c0_i32_0 = arith.constant 0 : i32
    %c0_i32_1 = arith.constant 0 : i32
    %c0_i32_2 = arith.constant 0 : i32
    return %c0_i32, %c0_i32_0, %c0_i32_1 : i32, i32, i32
  }
  func.func @transform_5(%arg0: i32) -> (i32, i32, i32) {
    %c0_i32 = arith.constant 0 : i32
    %c0_i32_0 = arith.constant 0 : i32
    %c0_i32_1 = arith.constant 0 : i32
    %c0_i32_2 = arith.constant 0 : i32
    return %c0_i32, %c0_i32_0, %c0_i32_1 : i32, i32, i32
  }
  func.func @transform_6(%arg0: i32) -> (i32, i32, i32) {
    %c0_i32 = arith.constant 0 : i32
    %c0_i32_0 = arith.constant 0 : i32
    %c0_i32_1 = arith.constant 0 : i32
    %c0_i32_2 = arith.constant 0 : i32
    return %c0_i32, %c0_i32_0, %c0_i32_1 : i32, i32, i32
  }
  func.func @transform_7(%arg0: i32) -> (i32, i32) {
    %c0_i32 = arith.constant 0 : i32
    %c0_i32_0 = arith.constant 0 : i32
    %c0_i32_1 = arith.constant 0 : i32
    return %c0_i32, %c0_i32_0 : i32, i32
  }
  func.func @transform_8(%arg0: i32) -> (i32, i32) {
    %c0_i32 = arith.constant 0 : i32
    %c0_i32_0 = arith.constant 0 : i32
    %c0_i32_1 = arith.constant 0 : i32
    return %c0_i32, %c0_i32_0 : i32, i32
  }
  func.func @transform_9(%arg0: i32) -> (i32, i32) {
    %c0_i32 = arith.constant 0 : i32
    %c0_i32_0 = arith.constant 0 : i32
    %c0_i32_1 = arith.constant 0 : i32
    return %c0_i32, %c0_i32_0 : i32, i32
  }
  func.func @transform_10(%arg0: i32) -> (i32, i32) {
    %c0_i32 = arith.constant 0 : i32
    %c0_i32_0 = arith.constant 0 : i32
    %c0_i32_1 = arith.constant 0 : i32
    return %c0_i32, %c0_i32_0 : i32, i32
  }
  func.func @transform_11(%arg0: i32) -> (i32, i32) {
    %c0_i32 = arith.constant 0 : i32
    %c0_i32_0 = arith.constant 0 : i32
    %c0_i32_1 = arith.constant 0 : i32
    return %c0_i32, %c0_i32_0 : i32, i32
  }
  func.func @transform_12(%arg0: i32) -> (i32, i32) {
    %c0_i32 = arith.constant 0 : i32
    %c0_i32_0 = arith.constant 0 : i32
    %c0_i32_1 = arith.constant 0 : i32
    return %c0_i32, %c0_i32_0 : i32, i32
  }
  func.func @transform_13(%arg0: i32) -> (i32, i32) {
    %c0_i32 = arith.constant 0 : i32
    %c0_i32_0 = arith.constant 0 : i32
    %c0_i32_1 = arith.constant 0 : i32
    return %c0_i32, %c0_i32_0 : i32, i32
  }
  func.func @transform_14(%arg0: i32) -> (i32, i32, i32) {
    %c0_i32 = arith.constant 0 : i32
    %c0_i32_0 = arith.constant 0 : i32
    %c0_i32_1 = arith.constant 0 : i32
    return %arg0, %c0_i32, %c0_i32_0 : i32, i32, i32
  }
}

</mosaic_0001>

<llo_original>
// kernel: tpu_custom_call.1
$region0: #{tpu_custom_call.1}
  #allocation0 [shape = 'u32[]', space=smem, size = 0x4, offset = 0x4, fixed_abs, tag = 'smem constant byte address 0x4 - core index']
  #allocation1 [shape = 'u32[144,128]{1,0:T(1,128)}', space=vmem, size = 0x12000, scoped, tag = 'internal scratch']
  %s0 = inlined_call_operand.vmem [shape: f32[2,8,32], index: 0, kind: input, shape index: {}]
  %s1 = inlined_call_operand.vmem [shape: f32[1,32], index: 1, kind: input, shape index: {}]
  %s2 = inlined_call_operand.vmem [shape: f32[1,32], index: 2, kind: input, shape index: {}]
  %s3 = inlined_call_operand.vmem [shape: f32[6,32,5], index: 3, kind: input, shape index: {}]
  %s4 = inlined_call_operand.vmem [shape: f32[6,32,5], index: 4, kind: input, shape index: {}]
  %s5 = inlined_call_operand.vmem [shape: f32[6,32,5], index: 5, kind: input, shape index: {}]
  %s6 = inlined_call_operand.vmem [shape: f32[6,5,32], index: 6, kind: input, shape index: {}]
  %s7 = inlined_call_operand.vmem [shape: f32[1,32], index: 7, kind: input, shape index: {}]
  %s8 = inlined_call_operand.vmem [shape: f32[1,32], index: 8, kind: input, shape index: {}]
  %s9 = inlined_call_operand.vmem [shape: f32[1,32], index: 9, kind: input, shape index: {}]
  %s10 = inlined_call_operand.vmem [shape: f32[32,128], index: 10, kind: input, shape index: {}]
  %s11 = inlined_call_operand.vmem [shape: f32[1,128], index: 11, kind: input, shape index: {}]
  %s12 = inlined_call_operand.vmem [shape: f32[128,32], index: 12, kind: input, shape index: {}]
  %s13 = inlined_call_operand.vmem [shape: f32[1,32], index: 13, kind: input, shape index: {}]
  %s14 = inlined_call_operand.hbm [shape: f32[2,8,32], index: 14, kind: output, shape index: {}]
  %s15 = sld [smem:[#allocation0]]
  $region66: #{tpu_custom_call.1} parent=0
    _
  %s17 = ssub.s32 1, %s15
  %s18 = scalar_select 0, %s17, %s15
  $region1: #{tpu_custom_call.1} parent=0
    #allocation2 [shape = 'u8[8192]{0}', space=vmem, size = 0x2000, scoped, tag = 'output window, operand 0, single buffered']
    #allocation3 [shape = 's32[1]{0}', space=sflag, size = 0x4, scoped, tag = 'scoped memory for tpu_custom_call.1']
    %19 = vsyncpa [#allocation3], 0
    // Predicated region
    $region2: #{tpu_custom_call.1} parent=1 // pred_check
      _
    $region3: #{tpu_custom_call.1} parent=1 // pred_check_branch
      %21 = sbr.rel (0) target = $region5
    $region4: #{tpu_custom_call.1} parent=1 // pred_region
      _
    $region5: #{tpu_custom_call.1} parent=1 // pred_fallthru
      _
    // Predicated region
    $region6: #{tpu_custom_call.1} parent=1 // pred_check
      _
    $region7: #{tpu_custom_call.1} parent=1 // pred_check_branch
      %23 = sbr.rel (0) target = $region9
    $region8: #{tpu_custom_call.1} parent=1 // pred_region
      _
    $region9: #{tpu_custom_call.1} parent=1 // pred_fallthru
      _
    // Predicated region
    $region10: #{tpu_custom_call.1} parent=1 // pred_check
      _
    $region11: #{tpu_custom_call.1} parent=1 // pred_check_branch
      %25 = sbr.rel (0) target = $region13
    $region12: #{tpu_custom_call.1} parent=1 // pred_region
      _
    $region13: #{tpu_custom_call.1} parent=1 // pred_fallthru
      _
    // Predicated region
    $region14: #{tpu_custom_call.1} parent=1 // pred_check
      _
    $region15: #{tpu_custom_call.1} parent=1 // pred_check_branch
      %27 = sbr.rel (0) target = $region17
    $region16: #{tpu_custom_call.1} parent=1 // pred_region
      _
    $region17: #{tpu_custom_call.1} parent=1 // pred_fallthru
      _
    // Predicated region
    $region18: #{tpu_custom_call.1} parent=1 // pred_check
      _
    $region19: #{tpu_custom_call.1} parent=1 // pred_check_branch
      %29 = sbr.rel (0) target = $region21
    $region20: #{tpu_custom_call.1} parent=1 // pred_region
      _
    $region21: #{tpu_custom_call.1} parent=1 // pred_fallthru
      _
    // Predicated region
    $region22: #{tpu_custom_call.1} parent=1 // pred_check
      _
    $region23: #{tpu_custom_call.1} parent=1 // pred_check_branch
      %31 = sbr.rel (0) target = $region25
    $region24: #{tpu_custom_call.1} parent=1 // pred_region
      _
    $region25: #{tpu_custom_call.1} parent=1 // pred_fallthru
      _
    // Predicated region
    $region26: #{tpu_custom_call.1} parent=1 // pred_check
      _
    $region27: #{tpu_custom_call.1} parent=1 // pred_check_branch
      %33 = sbr.rel (0) target = $region29
    $region28: #{tpu_custom_call.1} parent=1 // pred_region
      _
    $region29: #{tpu_custom_call.1} parent=1 // pred_fallthru
      _
    // Predicated region
    $region30: #{tpu_custom_call.1} parent=1 // pred_check
      _
    $region31: #{tpu_custom_call.1} parent=1 // pred_check_branch
      %35 = sbr.rel (0) target = $region33
    $region32: #{tpu_custom_call.1} parent=1 // pred_region
      _
    $region33: #{tpu_custom_call.1} parent=1 // pred_fallthru
      _
    // Predicated region
    $region34: #{tpu_custom_call.1} parent=1 // pred_check
      _
    $region35: #{tpu_custom_call.1} parent=1 // pred_check_branch
      %37 = sbr.rel (0) target = $region37
    $region36: #{tpu_custom_call.1} parent=1 // pred_region
      _
    $region37: #{tpu_custom_call.1} parent=1 // pred_fallthru
      _
    // Predicated region
    $region38: #{tpu_custom_call.1} parent=1 // pred_check
      _
    $region39: #{tpu_custom_call.1} parent=1 // pred_check_branch
      %39 = sbr.rel (0) target = $region41
    $region40: #{tpu_custom_call.1} parent=1 // pred_region
      _
    $region41: #{tpu_custom_call.1} parent=1 // pred_fallthru
      _
    // Predicated region
    $region42: #{tpu_custom_call.1} parent=1 // pred_check
      _
    $region43: #{tpu_custom_call.1} parent=1 // pred_check_branch
      %41 = sbr.rel (0) target = $region45
    $region44: #{tpu_custom_call.1} parent=1 // pred_region
      _
    $region45: #{tpu_custom_call.1} parent=1 // pred_fallthru
      _
    // Predicated region
    $region46: #{tpu_custom_call.1} parent=1 // pred_check
      _
    $region47: #{tpu_custom_call.1} parent=1 // pred_check_branch
      %43 = sbr.rel (0) target = $region49
    $region48: #{tpu_custom_call.1} parent=1 // pred_region
      _
    $region49: #{tpu_custom_call.1} parent=1 // pred_fallthru
      _
    // Predicated region
    $region50: #{tpu_custom_call.1} parent=1 // pred_check
      _
    $region51: #{tpu_custom_call.1} parent=1 // pred_check_branch
      %45 = sbr.rel (0) target = $region53
    $region52: #{tpu_custom_call.1} parent=1 // pred_region
      _
    $region53: #{tpu_custom_call.1} parent=1 // pred_fallthru
      _
    // Predicated region
    $region54: #{tpu_custom_call.1} parent=1 // pred_check
      _
    $region55: #{tpu_custom_call.1} parent=1 // pred_check_branch
      %47 = sbr.rel (0) target = $region57
    $region56: #{tpu_custom_call.1} parent=1 // pred_region
      _
    $region57: #{tpu_custom_call.1} parent=1 // pred_fallthru
      _
    %v48 = vld [vmem:[%s0] sm:$0xff]
    %v49 = vld [vmem:[%s0 + $0x8] sm:$0xff]
    %v50 = vld [vmem:[%s1] sm:$0x1]
    %v51 = vld [vmem:[%s2] sm:$0x1]
    %vm52 = vcmask 261120
    %v53 = vsel %vm52, %v48, 0.0
    %54 = vadd.xlane.f32.xlu0 %v53
    %v55 = vpop.xlane.xlu0 %54
    %v56 = vsel %vm52, %v49, 0.0
    %57 = vadd.xlane.f32.xlu0 %v56
    %v58 = vpop.xlane.xlu0 %57
    %v59 = vrcp.pop 32.0
    %v60 = vmul.f32 %v55, %v59
    %v61 = vmul.f32 %v58, %v59
    %v62 = vsub.f32 %v48, %v60
    %v63 = vsub.f32 %v49, %v61
    %v64 = vmul.f32 %v62, %v62
    %v65 = vmul.f32 %v63, %v63
    %v66 = vsel %vm52, %v64, 0.0
    %67 = vadd.xlane.f32.xlu0 %v66
    %v68 = vpop.xlane.xlu0 %67
    %v69 = vsel %vm52, %v65, 0.0
    %70 = vadd.xlane.f32.xlu0 %v69
    %v71 = vpop.xlane.xlu0 %70
    %v72 = vmul.f32 %v68, %v59
    %v73 = vmul.f32 %v71, %v59
    %v74 = vadd.f32 %v72, 1e-05
    %v75 = vadd.f32 %v73, 1e-05
    %v76 = vrsqrt.pop %v74
    %v77 = vrsqrt.pop %v75
    %v78 = vmul.f32 %v62, %v76
    %v79 = vmul.f32 %v63, %v77
    %v81 = vlaneseq
    %v82 = vshrl.u32 %v81, 7
    %v83 = vsub.s32 0, %v82
    %v84 = vrot.slane %v50, %v83
    %v86 = vmul.f32 %v78, %v84
    %v87 = vmul.f32 %v79, %v84
    %v89 = vlaneseq
    %v90 = vshrl.u32 %v89, 7
    %v91 = vsub.s32 0, %v90
    %v92 = vrot.slane %v51, %v91
    %v94 = vadd.f32 %v86, %v92
    %v95 = vadd.f32 %v87, %v92
    %v96 = vlaneseq
    %v97 = vshrl.u32 %v96, 7
    %v98 = vlaneseq
    %v99 = vand.u32 %v98, 127
    %vm100 = vcmp.le.s32.totalorder %v99, %v97
    %v101 = vld [vmem:[%s3] sm:$0xff]
    %v102 = vld [vmem:[%s3 + $0x8] sm:$0xff]
    %v103 = vld [vmem:[%s3 + $0x10] sm:$0xff]
    %v104 = vld [vmem:[%s3 + $0x18] sm:$0xff]
    %v106 = vsel %vm52, %v94, 0
    %v109 = vsel %vm52, %v95, 0
    %111 = vmatprep.subr.mxu0 0.0
    %112 = vmatpush1.msra.mxu0 %v101
    %113 = vmatprep.subr.mxu0 0.0
    %114 = vmatpush1.msra.mxu0 %v102
    %115 = vmatprep.subr.mxu0 0.0
    %116 = vmatpush1.msra.mxu0 %v103
    %117 = vmatprep.subr.mxu0 0.0
    %118 = vmatpush1.msra.mxu0 %v104
    %119 = vmatprep.subr.mxu0 0.0
    %120 = vmatpush1.msra.mxu0 0.0
    %121 = vmatprep.subr.mxu0 0.0
    %122 = vmatpush1.msra.mxu0 0.0
    %123 = vmatprep.subr.mxu0 0.0
    %124 = vmatpush1.msra.mxu0 0.0
    %125 = vmatprep.subr.mxu0 0.0
    %126 = vmatpush1.msra.mxu0 0.0
    %127 = vmatprep.subr.mxu0 0.0
    %128 = vmatpush1.msra.mxu0 0.0
    %129 = vmatprep.subr.mxu0 0.0
    %130 = vmatpush1.msra.mxu0 0.0
    %131 = vmatprep.subr.mxu0 0.0
    %132 = vmatpush1.msra.mxu0 0.0
    %133 = vmatprep.subr.mxu0 0.0
    %134 = vmatpush1.msra.mxu0 0.0
    %135 = vmatprep.subr.mxu0 0.0
    %136 = vmatpush1.msra.mxu0 0.0
    %137 = vmatprep.subr.mxu0 0.0
    %138 = vmatpush1.msra.mxu0 0.0
    %139 = vmatprep.subr.mxu0 0.0
    %140 = vmatpush1.msra.mxu0 0.0
    %141 = vmatprep.subr.mxu0 0.0
    %142 = vmatpush1.msra.mxu0 0.0
    %143 = vmatprep.subr.mxu0 0.0
    %144 = vmatpush1.msra.mxu0 0.0
    %145 = vmatprep.subr.mxu0 0.0
    %146 = vmatpush1.msra.mxu0 0.0
    %147 = vmatprep.subr.mxu0 0.0
    %148 = vmatpush1.msra.mxu0 0.0
    %149 = vmatprep.subr.mxu0 0.0
    %150 = vmatpush1.msra.mxu0 0.0
    %151 = vmatprep.subr.mxu0 0.0
    %152 = vmatpush1.msra.mxu0 0.0
    %153 = vmatprep.subr.mxu0 0.0
    %154 = vmatpush1.msra.mxu0 0.0
    %155 = vmatprep.subr.mxu0 0.0
    %156 = vmatpush1.msra.mxu0 0.0
    %157 = vmatprep.subr.mxu0 0.0
    %158 = vmatpush1.msra.mxu0 0.0
    %159 = vmatprep.subr.mxu0 0.0
    %160 = vmatpush1.msra.mxu0 0.0
    %161 = vmatprep.subr.mxu0 0.0
    %162 = vmatpush1.msra.mxu0 0.0
    %163 = vmatprep.subr.mxu0 0.0
    %164 = vmatpush1.msra.mxu0 0.0
    %165 = vmatprep.subr.mxu0 0.0
    %166 = vmatpush1.msra.mxu0 0.0
    %167 = vmatprep.subr.mxu0 0.0
    %168 = vmatpush1.msra.mxu0 0.0
    %169 = vmatprep.subr.mxu0 0.0
    %170 = vmatpush1.msra.mxu0 0.0
    %171 = vmatprep.subr.mxu0 0.0
    %172 = vmatpush1.msra.mxu0 0.0
    %173 = vmatprep.subr.mxu0 0.0
    %174 = vmatpush1.msra.mxu0 0.0
    %175 = vmatprep.mubr.f32.mxu0 0.0
    %176 = vmatmul.mubr.f32.gmra.mrb[0].mxu0 %v106
    %v177 = vpop.f32.mrb[0].mxu0
    %v178 = vadd.f32 0.0, %v177
    %v179 = vpop.f32.mrb[0].mxu0
    %180 = vmatprep.mubr.f32.mxu0 0.0
    %181 = vmatmul.mubr.f32.gmra.mrb[0].mxu0 %v109
    %v182 = vpop.f32.mrb[0].mxu0
    %v183 = vadd.f32 0.0, %v182
    %v184 = vpop.f32.mrb[0].mxu0
    %185 = vdwg.mxu0
    %v186 = vld [vmem:[%s4] sm:$0xff]
    %v187 = vld [vmem:[%s4 + $0x8] sm:$0xff]
    %v188 = vld [vmem:[%s4 + $0x10] sm:$0xff]
    %v189 = vld [vmem:[%s4 + $0x18] sm:$0xff]
    %190 = vmatprep.subr.mxu0 0.0
    %191 = vmatpush1.msra.mxu0 %v186
    %192 = vmatprep.subr.mxu0 0.0
    %193 = vmatpush1.msra.mxu0 %v187
    %194 = vmatprep.subr.mxu0 0.0
    %195 = vmatpush1.msra.mxu0 %v188
    %196 = vmatprep.subr.mxu0 0.0
    %197 = vmatpush1.msra.mxu0 %v189
    %198 = vmatprep.subr.mxu0 0.0
    %199 = vmatpush1.msra.mxu0 0.0
    %200 = vmatprep.subr.mxu0 0.0
    %201 = vmatpush1.msra.mxu0 0.0
    %202 = vmatprep.subr.mxu0 0.0
    %203 = vmatpush1.msra.mxu0 0.0
    %204 = vmatprep.subr.mxu0 0.0
    %205 = vmatpush1.msra.mxu0 0.0
    %206 = vmatprep.subr.mxu0 0.0
    %207 = vmatpush1.msra.mxu0 0.0
    %208 = vmatprep.subr.mxu0 0.0
    %209 = vmatpush1.msra.mxu0 0.0
    %210 = vmatprep.subr.mxu0 0.0
    %211 = vmatpush1.msra.mxu0 0.0
    %212 = vmatprep.subr.mxu0 0.0
    %213 = vmatpush1.msra.mxu0 0.0
    %214 = vmatprep.subr.mxu0 0.0
    %215 = vmatpush1.msra.mxu0 0.0
    %216 = vmatprep.subr.mxu0 0.0
    %217 = vmatpush1.msra.mxu0 0.0
    %218 = vmatprep.subr.mxu0 0.0
    %219 = vmatpush1.msra.mxu0 0.0
    %220 = vmatprep.subr.mxu0 0.0
    %221 = vmatpush1.msra.mxu0 0.0
    %222 = vmatprep.subr.mxu0 0.0
    %223 = vmatpush1.msra.mxu0 0.0
    %224 = vmatprep.subr.mxu0 0.0
    %225 = vmatpush1.msra.mxu0 0.0
    %226 = vmatprep.subr.mxu0 0.0
    %227 = vmatpush1.msra.mxu0 0.0
    %228 = vmatprep.subr.mxu0 0.0
    %229 = vmatpush1.msra.mxu0 0.0
    %230 = vmatprep.subr.mxu0 0.0
    %231 = vmatpush1.msra.mxu0 0.0
    %232 = vmatprep.subr.mxu0 0.0
    %233 = vmatpush1.msra.mxu0 0.0
    %234 = vmatprep.subr.mxu0 0.0
    %235 = vmatpush1.msra.mxu0 0.0
    %236 = vmatprep.subr.mxu0 0.0
    %237 = vmatpush1.msra.mxu0 0.0
    %238 = vmatprep.subr.mxu0 0.0
    %239 = vmatpush1.msra.mxu0 0.0
    %240 = vmatprep.subr.mxu0 0.0
    %241 = vmatpush1.msra.mxu0 0.0
    %242 = vmatprep.subr.mxu0 0.0
    %243 = vmatpush1.msra.mxu0 0.0
    %244 = vmatprep.subr.mxu0 0.0
    %245 = vmatpush1.msra.mxu0 0.0
    %246 = vmatprep.subr.mxu0 0.0
    %247 = vmatpush1.msra.mxu0 0.0
    %248 = vmatprep.subr.mxu0 0.0
    %249 = vmatpush1.msra.mxu0 0.0
    %250 = vmatprep.subr.mxu0 0.0
    %251 = vmatpush1.msra.mxu0 0.0
    %252 = vmatprep.subr.mxu0 0.0
    %253 = vmatpush1.msra.mxu0 0.0
    %254 = vmatprep.mubr.f32.mxu0 0.0
    %255 = vmatmul.mubr.f32.gmra.mrb[0].mxu0 %v106
    %v256 = vpop.f32.mrb[0].mxu0
    %v257 = vadd.f32 0.0, %v256
    %v258 = vpop.f32.mrb[0].mxu0
    %259 = vmatprep.mubr.f32.mxu0 0.0
    %260 = vmatmul.mubr.f32.gmra.mrb[0].mxu0 %v109
    %v261 = vpop.f32.mrb[0].mxu0
    %v262 = vadd.f32 0.0, %v261
    %v263 = vpop.f32.mrb[0].mxu0
    %264 = vdwg.mxu0
    %v265 = vld [vmem:[%s5] sm:$0xff]
    %v266 = vld [vmem:[%s5 + $0x8] sm:$0xff]
    %v267 = vld [vmem:[%s5 + $0x10] sm:$0xff]
    %v268 = vld [vmem:[%s5 + $0x18] sm:$0xff]
    %269 = vmatprep.subr.mxu0 0.0
    %270 = vmatpush1.msra.mxu0 %v265
    %271 = vmatprep.subr.mxu0 0.0
    %272 = vmatpush1.msra.mxu0 %v266
    %273 = vmatprep.subr.mxu0 0.0
    %274 = vmatpush1.msra.mxu0 %v267
    %275 = vmatprep.subr.mxu0 0.0
    %276 = vmatpush1.msra.mxu0 %v268
    %277 = vmatprep.subr.mxu0 0.0
    %278 = vmatpush1.msra.mxu0 0.0
    %279 = vmatprep.subr.mxu0 0.0
    %280 = vmatpush1.msra.mxu0 0.0
    %281 = vmatprep.subr.mxu0 0.0
    %282 = vmatpush1.msra.mxu0 0.0
    %283 = vmatprep.subr.mxu0 0.0
    %284 = vmatpush1.msra.mxu0 0.0
    %285 = vmatprep.subr.mxu0 0.0
    %286 = vmatpush1.msra.mxu0 0.0
    %287 = vmatprep.subr.mxu0 0.0
    %288 = vmatpush1.msra.mxu0 0.0
    %289 = vmatprep.subr.mxu0 0.0
    %290 = vmatpush1.msra.mxu0 0.0
    %291 = vmatprep.subr.mxu0 0.0
    %292 = vmatpush1.msra.mxu0 0.0
    %293 = vmatprep.subr.mxu0 0.0
    %294 = vmatpush1.msra.mxu0 0.0
    %295 = vmatprep.subr.mxu0 0.0
    %296 = vmatpush1.msra.mxu0 0.0
    %297 = vmatprep.subr.mxu0 0.0
    %298 = vmatpush1.msra.mxu0 0.0
    %299 = vmatprep.subr.mxu0 0.0
    %300 = vmatpush1.msra.mxu0 0.0
    %301 = vmatprep.subr.mxu0 0.0
    %302 = vmatpush1.msra.mxu0 0.0
    %303 = vmatprep.subr.mxu0 0.0
    %304 = vmatpush1.msra.mxu0 0.0
    %305 = vmatprep.subr.mxu0 0.0
    %306 = vmatpush1.msra.mxu0 0.0
    %307 = vmatprep.subr.mxu0 0.0
    %308 = vmatpush1.msra.mxu0 0.0
    %309 = vmatprep.subr.mxu0 0.0
    %310 = vmatpush1.msra.mxu0 0.0
    %311 = vmatprep.subr.mxu0 0.0
    %312 = vmatpush1.msra.mxu0 0.0
    %313 = vmatprep.subr.mxu0 0.0
    %314 = vmatpush1.msra.mxu0 0.0
    %315 = vmatprep.subr.mxu0 0.0
    %316 = vmatpush1.msra.mxu0 0.0
    %317 = vmatprep.subr.mxu0 0.0
    %318 = vmatpush1.msra.mxu0 0.0
    %319 = vmatprep.subr.mxu0 0.0
    %320 = vmatpush1.msra.mxu0 0.0
    %321 = vmatprep.subr.mxu0 0.0
    %322 = vmatpush1.msra.mxu0 0.0
    %323 = vmatprep.subr.mxu0 0.0
    %324 = vmatpush1.msra.mxu0 0.0
    %325 = vmatprep.subr.mxu0 0.0
    %326 = vmatpush1.msra.mxu0 0.0
    %327 = vmatprep.subr.mxu0 0.0
    %328 = vmatpush1.msra.mxu0 0.0
    %329 = vmatprep.subr.mxu0 0.0
    %330 = vmatpush1.msra.mxu0 0.0
    %331 = vmatprep.subr.mxu0 0.0
    %332 = vmatpush1.msra.mxu0 0.0
    %333 = vmatprep.mubr.f32.mxu0 0.0
    %334 = vmatmul.mubr.f32.gmra.mrb[0].mxu0 %v106
    %v335 = vpop.f32.mrb[0].mxu0
    %v336 = vadd.f32 0.0, %v335
    %v337 = vpop.f32.mrb[0].mxu0
    %338 = vmatprep.mubr.f32.mxu0 0.0
    %339 = vmatmul.mubr.f32.gmra.mrb[0].mxu0 %v109
    %v340 = vpop.f32.mrb[0].mxu0
    %v341 = vadd.f32 0.0, %v340
    %v342 = vpop.f32.mrb[0].mxu0
    %343 = vdwg.mxu0
    %vm344 = vcmask 39936
    %v346 = vsel %vm344, %v178, 0
    %v349 = vsel %vm344, %v257, 0
    %351 = vmatprep.subr.mxu0 0.0
    %352 = vmatpush1.xpose.msra.mxu0 %v349
    %353 = vmatprep.subr.mxu0 0.0
    %354 = vmatpush1.xpose.msra.mxu0 0.0
    %355 = vmatprep.subr.mxu0 0.0
    %356 = vmatpush1.xpose.msra.mxu0 0.0
    %357 = vmatprep.subr.mxu0 0.0
    %358 = vmatpush1.xpose.msra.mxu0 0.0
    %359 = vmatprep.subr.mxu0 0.0
    %360 = vmatpush1.xpose.msra.mxu0 0.0
    %361 = vmatprep.subr.mxu0 0.0
    %362 = vmatpush1.xpose.msra.mxu0 0.0
    %363 = vmatprep.subr.mxu0 0.0
    %364 = vmatpush1.xpose.msra.mxu0 0.0
    %365 = vmatprep.subr.mxu0 0.0
    %366 = vmatpush1.xpose.msra.mxu0 0.0
    %367 = vmatprep.subr.mxu0 0.0
    %368 = vmatpush1.xpose.msra.mxu0 0.0
    %369 = vmatprep.subr.mxu0 0.0
    %370 = vmatpush1.xpose.msra.mxu0 0.0
    %371 = vmatprep.subr.mxu0 0.0
    %372 = vmatpush1.xpose.msra.mxu0 0.0
    %373 = vmatprep.subr.mxu0 0.0
    %374 = vmatpush1.xpose.msra.mxu0 0.0
    %375 = vmatprep.subr.mxu0 0.0
    %376 = vmatpush1.xpose.msra.mxu0 0.0
    %377 = vmatprep.subr.mxu0 0.0
    %378 = vmatpush1.xpose.msra.mxu0 0.0
    %379 = vmatprep.subr.mxu0 0.0
    %380 = vmatpush1.xpose.msra.mxu0 0.0
    %381 = vmatprep.subr.mxu0 0.0
    %382 = vmatpush1.xpose.msra.mxu0 0.0
    %383 = vmatprep.subr.mxu0 0.0
    %384 = vmatpush1.xpose.msra.mxu0 0.0
    %385 = vmatprep.subr.mxu0 0.0
    %386 = vmatpush1.xpose.msra.mxu0 0.0
    %387 = vmatprep.subr.mxu0 0.0
    %388 = vmatpush1.xpose.msra.mxu0 0.0
    %389 = vmatprep.subr.mxu0 0.0
    %390 = vmatpush1.xpose.msra.mxu0 0.0
    %391 = vmatprep.subr.mxu0 0.0
    %392 = vmatpush1.xpose.msra.mxu0 0.0
    %393 = vmatprep.subr.mxu0 0.0
    %394 = vmatpush1.xpose.msra.mxu0 0.0
    %395 = vmatprep.subr.mxu0 0.0
    %396 = vmatpush1.xpose.msra.mxu0 0.0
    %397 = vmatprep.subr.mxu0 0.0
    %398 = vmatpush1.xpose.msra.mxu0 0.0
    %399 = vmatprep.subr.mxu0 0.0
    %400 = vmatpush1.xpose.msra.mxu0 0.0
    %401 = vmatprep.subr.mxu0 0.0
    %402 = vmatpush1.xpose.msra.mxu0 0.0
    %403 = vmatprep.subr.mxu0 0.0
    %404 = vmatpush1.xpose.msra.mxu0 0.0
    %405 = vmatprep.subr.mxu0 0.0
    %406 = vmatpush1.xpose.msra.mxu0 0.0
    %407 = vmatprep.subr.mxu0 0.0
    %408 = vmatpush1.xpose.msra.mxu0 0.0
    %409 = vmatprep.subr.mxu0 0.0
    %410 = vmatpush1.xpose.msra.mxu0 0.0
    %411 = vmatprep.subr.mxu0 0.0
    %412 = vmatpush1.xpose.msra.mxu0 0.0
    %413 = vmatprep.subr.mxu0 0.0
    %414 = vmatpush1.xpose.msra.mxu0 0.0
    %415 = vmatprep.mubr.f32.mxu0 0.0
    %416 = vmatmul.mubr.f32.gmra.mrb[0].mxu0 %v346
    %v417 = vpop.f32.mrb[0].mxu0
    %v418 = vadd.f32 0.0, %v417
    %v419 = vpop.f32.mrb[0].mxu0
    %420 = vdwg.mxu0
    %v422 = vsel %vm344, %v183, 0
    %v425 = vsel %vm344, %v262, 0
    %427 = vmatprep.subr.mxu0 0.0
    %428 = vmatpush1.xpose.msra.mxu0 %v425
    %429 = vmatprep.subr.mxu0 0.0
    %430 = vmatpush1.xpose.msra.mxu0 0.0
    %431 = vmatprep.subr.mxu0 0.0
    %432 = vmatpush1.xpose.msra.mxu0 0.0
    %433 = vmatprep.subr.mxu0 0.0
    %434 = vmatpush1.xpose.msra.mxu0 0.0
    %435 = vmatprep.subr.mxu0 0.0
    %436 = vmatpush1.xpose.msra.mxu0 0.0
    %437 = vmatprep.subr.mxu0 0.0
    %438 = vmatpush1.xpose.msra.mxu0 0.0
    %439 = vmatprep.subr.mxu0 0.0
    %440 = vmatpush1.xpose.msra.mxu0 0.0
    %441 = vmatprep.subr.mxu0 0.0
    %442 = vmatpush1.xpose.msra.mxu0 0.0
    %443 = vmatprep.subr.mxu0 0.0
    %444 = vmatpush1.xpose.msra.mxu0 0.0
    %445 = vmatprep.subr.mxu0 0.0
    %446 = vmatpush1.xpose.msra.mxu0 0.0
    %447 = vmatprep.subr.mxu0 0.0
    %448 = vmatpush1.xpose.msra.mxu0 0.0
    %449 = vmatprep.subr.mxu0 0.0
    %450 = vmatpush1.xpose.msra.mxu0 0.0
    %451 = vmatprep.subr.mxu0 0.0
    %452 = vmatpush1.xpose.msra.mxu0 0.0
    %453 = vmatprep.subr.mxu0 0.0
    %454 = vmatpush1.xpose.msra.mxu0 0.0
    %455 = vmatprep.subr.mxu0 0.0
    %456 = vmatpush1.xpose.msra.mxu0 0.0
    %457 = vmatprep.subr.mxu0 0.0
    %458 = vmatpush1.xpose.msra.mxu0 0.0
    %459 = vmatprep.subr.mxu0 0.0
    %460 = vmatpush1.xpose.msra.mxu0 0.0
    %461 = vmatprep.subr.mxu0 0.0
    %462 = vmatpush1.xpose.msra.mxu0 0.0
    %463 = vmatprep.subr.mxu0 0.0
    %464 = vmatpush1.xpose.msra.mxu0 0.0
    %465 = vmatprep.subr.mxu0 0.0
    %466 = vmatpush1.xpose.msra.mxu0 0.0
    %467 = vmatprep.subr.mxu0 0.0
    %468 = vmatpush1.xpose.msra.mxu0 0.0
    %469 = vmatprep.subr.mxu0 0.0
    %470 = vmatpush1.xpose.msra.mxu0 0.0
    %471 = vmatprep.subr.mxu0 0.0
    %472 = vmatpush1.xpose.msra.mxu0 0.0
    %473 = vmatprep.subr.mxu0 0.0
    %474 = vmatpush1.xpose.msra.mxu0 0.0
    %475 = vmatprep.subr.mxu0 0.0
    %476 = vmatpush1.xpose.msra.mxu0 0.0
    %477 = vmatprep.subr.mxu0 0.0
    %478 = vmatpush1.xpose.msra.mxu0 0.0
    %479 = vmatprep.subr.mxu0 0.0
    %480 = vmatpush1.xpose.msra.mxu0 0.0
    %481 = vmatprep.subr.mxu0 0.0
    %482 = vmatpush1.xpose.msra.mxu0 0.0
    %483 = vmatprep.subr.mxu0 0.0
    %484 = vmatpush1.xpose.msra.mxu0 0.0
    %485 = vmatprep.subr.mxu0 0.0
    %486 = vmatpush1.xpose.msra.mxu0 0.0
    %487 = vmatprep.subr.mxu0 0.0
    %488 = vmatpush1.xpose.msra.mxu0 0.0
    %489 = vmatprep.subr.mxu0 0.0
    %490 = vmatpush1.xpose.msra.mxu0 0.0
    %491 = vmatprep.mubr.f32.mxu0 0.0
    %492 = vmatmul.mubr.f32.gmra.mrb[0].mxu0 %v422
    %v493 = vpop.f32.mrb[0].mxu0
    %v494 = vadd.f32 0.0, %v493
    %v495 = vpop.f32.mrb[0].mxu0
    %496 = vdwg.mxu0
    %v497 = vmul.f32 %v418, 0.4472136
    %v498 = vmul.f32 %v494, 0.4472136
    %v499 = vsel %vm100, %v497, -1e+30
    %v500 = vsel %vm100, %v498, -1e+30
    %vm501 = vcmask 64512
    %v502 = vsel %vm501, %v499, -inf
    %503 = vmax.xlane.f32.xlu0 %v502
    %v504 = vpop.xlane.xlu0 %503
    %v505 = vsel %vm501, %v500, -inf
    %506 = vmax.xlane.f32.xlu0 %v505
    %v507 = vpop.xlane.xlu0 %506
    %v508 = vsub.f32 %v499, %v504
    %v509 = vsub.f32 %v500, %v507
    %v510 = vmul.f32 %v508, 1.442695
    %v511 = vpow.pop %v510
    %v512 = vmul.f32 %v509, 1.442695
    %v513 = vpow.pop %v512
    %v514 = vsel %vm501, %v511, 0.0
    %515 = vadd.xlane.f32.xlu0 %v514
    %v516 = vpop.xlane.xlu0 %515
    %v517 = vsel %vm501, %v513, 0.0
    %518 = vadd.xlane.f32.xlu0 %v517
    %v519 = vpop.xlane.xlu0 %518
    %v520 = vrcp.pop %v516
    %v521 = vmul.f32 %v511, %v520
    %v522 = vrcp.pop %v519
    %v523 = vmul.f32 %v513, %v522
    %v525 = vsel %vm501, %v521, 0
    %527 = vmatprep.subr.mxu0 0.0
    %528 = vmatpush1.msra.mxu0 %v336
    %529 = vmatprep.subr.mxu0 0.0
    %530 = vmatpush1.msra.mxu0 0.0
    %531 = vmatprep.subr.mxu0 0.0
    %532 = vmatpush1.msra.mxu0 0.0
    %533 = vmatprep.subr.mxu0 0.0
    %534 = vmatpush1.msra.mxu0 0.0
    %535 = vmatprep.subr.mxu0 0.0
    %536 = vmatpush1.msra.mxu0 0.0
    %537 = vmatprep.subr.mxu0 0.0
    %538 = vmatpush1.msra.mxu0 0.0
    %539 = vmatprep.subr.mxu0 0.0
    %540 = vmatpush1.msra.mxu0 0.0
    %541 = vmatprep.subr.mxu0 0.0
    %542 = vmatpush1.msra.mxu0 0.0
    %543 = vmatprep.subr.mxu0 0.0
    %544 = vmatpush1.msra.mxu0 0.0
    %545 = vmatprep.subr.mxu0 0.0
    %546 = vmatpush1.msra.mxu0 0.0
    %547 = vmatprep.subr.mxu0 0.0
    %548 = vmatpush1.msra.mxu0 0.0
    %549 = vmatprep.subr.mxu0 0.0
    %550 = vmatpush1.msra.mxu0 0.0
    %551 = vmatprep.subr.mxu0 0.0
    %552 = vmatpush1.msra.mxu0 0.0
    %553 = vmatprep.subr.mxu0 0.0
    %554 = vmatpush1.msra.mxu0 0.0
    %555 = vmatprep.subr.mxu0 0.0
    %556 = vmatpush1.msra.mxu0 0.0
    %557 = vmatprep.subr.mxu0 0.0
    %558 = vmatpush1.msra.mxu0 0.0
    %559 = vmatprep.subr.mxu0 0.0
    %560 = vmatpush1.msra.mxu0 0.0
    %561 = vmatprep.subr.mxu0 0.0
    %562 = vmatpush1.msra.mxu0 0.0
    %563 = vmatprep.subr.mxu0 0.0
    %564 = vmatpush1.msra.mxu0 0.0
    %565 = vmatprep.subr.mxu0 0.0
    %566 = vmatpush1.msra.mxu0 0.0
    %567 = vmatprep.subr.mxu0 0.0
    %568 = vmatpush1.msra.mxu0 0.0
    %569 = vmatprep.subr.mxu0 0.0
    %570 = vmatpush1.msra.mxu0 0.0
    %571 = vmatprep.subr.mxu0 0.0
    %572 = vmatpush1.msra.mxu0 0.0
    %573 = vmatprep.subr.mxu0 0.0
    %574 = vmatpush1.msra.mxu0 0.0
    %575 = vmatprep.subr.mxu0 0.0
    %576 = vmatpush1.msra.mxu0 0.0
    %577 = vmatprep.subr.mxu0 0.0
    %578 = vmatpush1.msra.mxu0 0.0
    %579 = vmatprep.subr.mxu0 0.0
    %580 = vmatpush1.msra.mxu0 0.0
    %581 = vmatprep.subr.mxu0 0.0
    %582 = vmatpush1.msra.mxu0 0.0
    %583 = vmatprep.subr.mxu0 0.0
    %584 = vmatpush1.msra.mxu0 0.0
    %585 = vmatprep.subr.mxu0 0.0
    %586 = vmatpush1.msra.mxu0 0.0
    %587 = vmatprep.subr.mxu0 0.0
    %588 = vmatpush1.msra.mxu0 0.0
    %589 = vmatprep.subr.mxu0 0.0
    %590 = vmatpush1.msra.mxu0 0.0
    %591 = vmatprep.mubr.f32.mxu0 0.0
    %592 = vmatmul.mubr.f32.gmra.mrb[0].mxu0 %v525
    %v593 = vpop.f32.mrb[0].mxu0
    %v594 = vadd.f32 0.0, %v593
    %v595 = vpop.f32.mrb[0].mxu0
    %596 = vdwg.mxu0
    %v598 = vsel %vm501, %v523, 0
    %600 = vmatprep.subr.mxu0 0.0
    %601 = vmatpush1.msra.mxu0 %v341
    %602 = vmatprep.subr.mxu0 0.0
    %603 = vmatpush1.msra.mxu0 0.0
    %604 = vmatprep.subr.mxu0 0.0
    %605 = vmatpush1.msra.mxu0 0.0
    %606 = vmatprep.subr.mxu0 0.0
    %607 = vmatpush1.msra.mxu0 0.0
    %608 = vmatprep.subr.mxu0 0.0
    %609 = vmatpush1.msra.mxu0 0.0
    %610 = vmatprep.subr.mxu0 0.0
    %611 = vmatpush1.msra.mxu0 0.0
    %612 = vmatprep.subr.mxu0 0.0
    %613 = vmatpush1.msra.mxu0 0.0
    %614 = vmatprep.subr.mxu0 0.0
    %615 = vmatpush1.msra.mxu0 0.0
    %616 = vmatprep.subr.mxu0 0.0
    %617 = vmatpush1.msra.mxu0 0.0
    %618 = vmatprep.subr.mxu0 0.0
    %619 = vmatpush1.msra.mxu0 0.0
    %620 = vmatprep.subr.mxu0 0.0
    %621 = vmatpush1.msra.mxu0 0.0
    %622 = vmatprep.subr.mxu0 0.0
    %623 = vmatpush1.msra.mxu0 0.0
    %624 = vmatprep.subr.mxu0 0.0
    %625 = vmatpush1.msra.mxu0 0.0
    %626 = vmatprep.subr.mxu0 0.0
    %627 = vmatpush1.msra.mxu0 0.0
    %628 = vmatprep.subr.mxu0 0.0
    %629 = vmatpush1.msra.mxu0 0.0
    %630 = vmatprep.subr.mxu0 0.0
    %631 = vmatpush1.msra.mxu0 0.0
    %632 = vmatprep.subr.mxu0 0.0
    %633 = vmatpush1.msra.mxu0 0.0
    %634 = vmatprep.subr.mxu0 0.0
    %635 = vmatpush1.msra.mxu0 0.0
    %636 = vmatprep.subr.mxu0 0.0
    %637 = vmatpush1.msra.mxu0 0.0
    %638 = vmatprep.subr.mxu0 0.0
    %639 = vmatpush1.msra.mxu0 0.0
    %640 = vmatprep.subr.mxu0 0.0
    %641 = vmatpush1.msra.mxu0 0.0
    %642 = vmatprep.subr.mxu0 0.0
    %643 = vmatpush1.msra.mxu0 0.0
    %644 = vmatprep.subr.mxu0 0.0
    %645 = vmatpush1.msra.mxu0 0.0
    %646 = vmatprep.subr.mxu0 0.0
    %647 = vmatpush1.msra.mxu0 0.0
    %648 = vmatprep.subr.mxu0 0.0
    %649 = vmatpush1.msra.mxu0 0.0
    %650 = vmatprep.subr.mxu0 0.0
    %651 = vmatpush1.msra.mxu0 0.0
    %652 = vmatprep.subr.mxu0 0.0
    %653 = vmatpush1.msra.mxu0 0.0
    %654 = vmatprep.subr.mxu0 0.0
    %655 = vmatpush1.msra.mxu0 0.0
    %656 = vmatprep.subr.mxu0 0.0
    %657 = vmatpush1.msra.mxu0 0.0
    %658 = vmatprep.subr.mxu0 0.0
    %659 = vmatpush1.msra.mxu0 0.0
    %660 = vmatprep.subr.mxu0 0.0
    %661 = vmatpush1.msra.mxu0 0.0
    %662 = vmatprep.subr.mxu0 0.0
    %663 = vmatpush1.msra.mxu0 0.0
    %664 = vmatprep.mubr.f32.mxu0 0.0
    %665 = vmatmul.mubr.f32.gmra.mrb[0].mxu0 %v598
    %v666 = vpop.f32.mrb[0].mxu0
    %v667 = vadd.f32 0.0, %v666
    %v668 = vpop.f32.mrb[0].mxu0
    %669 = vdwg.mxu0
    %v670 = vld [vmem:[%s6] sm:$0x1f]
    %s671 = scalar_lea.vmem %s3, 32
    %v672 = vld [vmem:[%s671] sm:$0xff]
    %v673 = vld [vmem:[%s671 + $0x8] sm:$0xff]
    %v674 = vld [vmem:[%s671 + $0x10] sm:$0xff]
    %v675 = vld [vmem:[%s671 + $0x18] sm:$0xff]
    %676 = vmatprep.subr.mxu0 0.0
    %677 = vmatpush1.msra.mxu0 %v672
    %678 = vmatprep.subr.mxu0 0.0
    %679 = vmatpush1.msra.mxu0 %v673
    %680 = vmatprep.subr.mxu0 0.0
    %681 = vmatpush1.msra.mxu0 %v674
    %682 = vmatprep.subr.mxu0 0.0
    %683 = vmatpush1.msra.mxu0 %v675
    %684 = vmatprep.subr.mxu0 0.0
    %685 = vmatpush1.msra.mxu0 0.0
    %686 = vmatprep.subr.mxu0 0.0
    %687 = vmatpush1.msra.mxu0 0.0
    %688 = vmatprep.subr.mxu0 0.0
    %689 = vmatpush1.msra.mxu0 0.0
    %690 = vmatprep.subr.mxu0 0.0
    %691 = vmatpush1.msra.mxu0 0.0
    %692 = vmatprep.subr.mxu0 0.0
    %693 = vmatpush1.msra.mxu0 0.0
    %694 = vmatprep.subr.mxu0 0.0
    %695 = vmatpush1.msra.mxu0 0.0
    %696 = vmatprep.subr.mxu0 0.0
    %697 = vmatpush1.msra.mxu0 0.0
    %698 = vmatprep.subr.mxu0 0.0
    %699 = vmatpush1.msra.mxu0 0.0
    %700 = vmatprep.subr.mxu0 0.0
    %701 = vmatpush1.msra.mxu0 0.0
    %702 = vmatprep.subr.mxu0 0.0
    %703 = vmatpush1.msra.mxu0 0.0
    %704 = vmatprep.subr.mxu0 0.0
    %705 = vmatpush1.msra.mxu0 0.0
    %706 = vmatprep.subr.mxu0 0.0
    %707 = vmatpush1.msra.mxu0 0.0
    %708 = vmatprep.subr.mxu0 0.0
    %709 = vmatpush1.msra.mxu0 0.0
    %710 = vmatprep.subr.mxu0 0.0
    %711 = vmatpush1.msra.mxu0 0.0
    %712 = vmatprep.subr.mxu0 0.0
    %713 = vmatpush1.msra.mxu0 0.0
    %714 = vmatprep.subr.mxu0 0.0
    %715 = vmatpush1.msra.mxu0 0.0
    %716 = vmatprep.subr.mxu0 0.0
    %717 = vmatpush1.msra.mxu0 0.0
    %718 = vmatprep.subr.mxu0 0.0
    %719 = vmatpush1.msra.mxu0 0.0
    %720 = vmatprep.subr.mxu0 0.0
    %721 = vmatpush1.msra.mxu0 0.0
    %722 = vmatprep.subr.mxu0 0.0
    %723 = vmatpush1.msra.mxu0 0.0
    %724 = vmatprep.subr.mxu0 0.0
    %725 = vmatpush1.msra.mxu0 0.0
    %726 = vmatprep.subr.mxu0 0.0
    %727 = vmatpush1.msra.mxu0 0.0
    %728 = vmatprep.subr.mxu0 0.0
    %729 = vmatpush1.msra.mxu0 0.0
    %730 = vmatprep.subr.mxu0 0.0
    %731 = vmatpush1.msra.mxu0 0.0
    %732 = vmatprep.subr.mxu0 0.0
    %733 = vmatpush1.msra.mxu0 0.0
    %734 = vmatprep.subr.mxu0 0.0
    %735 = vmatpush1.msra.mxu0 0.0
    %736 = vmatprep.subr.mxu0 0.0
    %737 = vmatpush1.msra.mxu0 0.0
    %738 = vmatprep.subr.mxu0 0.0
    %739 = vmatpush1.msra.mxu0 0.0
    %740 = vmatprep.mubr.f32.mxu0 0.0
    %741 = vmatmul.mubr.f32.gmra.mrb[0].mxu0 %v106
    %v742 = vpop.f32.mrb[0].mxu0
    %v743 = vadd.f32 0.0, %v742
    %v744 = vpop.f32.mrb[0].mxu0
    %745 = vmatprep.mubr.f32.mxu0 0.0
    %746 = vmatmul.mubr.f32.gmra.mrb[0].mxu0 %v109
    %v747 = vpop.f32.mrb[0].mxu0
    %v748 = vadd.f32 0.0, %v747
    %v749 = vpop.f32.mrb[0].mxu0
    %750 = vdwg.mxu0
    %s751 = scalar_lea.vmem %s4, 32
    %v752 = vld [vmem:[%s751] sm:$0xff]
    %v753 = vld [vmem:[%s751 + $0x8] sm:$0xff]
    %v754 = vld [vmem:[%s751 + $0x10] sm:$0xff]
    %v755 = vld [vmem:[%s751 + $0x18] sm:$0xff]
    %756 = vmatprep.subr.mxu0 0.0
    %757 = vmatpush1.msra.mxu0 %v752
    %758 = vmatprep.subr.mxu0 0.0
    %759 = vmatpush1.msra.mxu0 %v753
    %760 = vmatprep.subr.mxu0 0.0
    %761 = vmatpush1.msra.mxu0 %v754
    %762 = vmatprep.subr.mxu0 0.0
    %763 = vmatpush1.msra.mxu0 %v755
    %764 = vmatprep.subr.mxu0 0.0
    %765 = vmatpush1.msra.mxu0 0.0
    %766 = vmatprep.subr.mxu0 0.0
    %767 = vmatpush1.msra.mxu0 0.0
    %768 = vmatprep.subr.mxu0 0.0
    %769 = vmatpush1.msra.mxu0 0.0
    %770 = vmatprep.subr.mxu0 0.0
    %771 = vmatpush1.msra.mxu0 0.0
    %772 = vmatprep.subr.mxu0 0.0
    %773 = vmatpush1.msra.mxu0 0.0
    %774 = vmatprep.subr.mxu0 0.0
    %775 = vmatpush1.msra.mxu0 0.0
    %776 = vmatprep.subr.mxu0 0.0
    %777 = vmatpush1.msra.mxu0 0.0
    %778 = vmatprep.subr.mxu0 0.0
    %779 = vmatpush1.msra.mxu0 0.0
    %780 = vmatprep.subr.mxu0 0.0
    %781 = vmatpush1.msra.mxu0 0.0
    %782 = vmatprep.subr.mxu0 0.0
    %783 = vmatpush1.msra.mxu0 0.0
    %784 = vmatprep.subr.mxu0 0.0
    %785 = vmatpush1.msra.mxu0 0.0
    %786 = vmatprep.subr.mxu0 0.0
    %787 = vmatpush1.msra.mxu0 0.0
    %788 = vmatprep.subr.mxu0 0.0
    %789 = vmatpush1.msra.mxu0 0.0
    %790 = vmatprep.subr.mxu0 0.0
    %791 = vmatpush1.msra.mxu0 0.0
    %792 = vmatprep.subr.mxu0 0.0
    %793 = vmatpush1.msra.mxu0 0.0
    %794 = vmatprep.subr.mxu0 0.0
    %795 = vmatpush1.msra.mxu0 0.0
    %796 = vmatprep.subr.mxu0 0.0
    %797 = vmatpush1.msra.mxu0 0.0
    %798 = vmatprep.subr.mxu0 0.0
    %799 = vmatpush1.msra.mxu0 0.0
    %800 = vmatprep.subr.mxu0 0.0
    %801 = vmatpush1.msra.mxu0 0.0
    %802 = vmatprep.subr.mxu0 0.0
    %803 = vmatpush1.msra.mxu0 0.0
    %804 = vmatprep.subr.mxu0 0.0
    %805 = vmatpush1.msra.mxu0 0.0
    %806 = vmatprep.subr.mxu0 0.0
    %807 = vmatpush1.msra.mxu0 0.0
    %808 = vmatprep.subr.mxu0 0.0
    %809 = vmatpush1.msra.mxu0 0.0
    %810 = vmatprep.subr.mxu0 0.0
    %811 = vmatpush1.msra.mxu0 0.0
    %812 = vmatprep.subr.mxu0 0.0
    %813 = vmatpush1.msra.mxu0 0.0
    %814 = vmatprep.subr.mxu0 0.0
    %815 = vmatpush1.msra.mxu0 0.0
    %816 = vmatprep.subr.mxu0 0.0
    %817 = vmatpush1.msra.mxu0 0.0
    %818 = vmatprep.subr.mxu0 0.0
    %819 = vmatpush1.msra.mxu0 0.0
    %820 = vmatprep.mubr.f32.mxu0 0.0
    %821 = vmatmul.mubr.f32.gmra.mrb[0].mxu0 %v106
    %v822 = vpop.f32.mrb[0].mxu0
    %v823 = vadd.f32 0.0, %v822
    %v824 = vpop.f32.mrb[0].mxu0
    %825 = vmatprep.mubr.f32.mxu0 0.0
    %826 = vmatmul.mubr.f32.gmra.mrb[0].mxu0 %v109
    %v827 = vpop.f32.mrb[0].mxu0
    %v828 = vadd.f32 0.0, %v827
    %v829 = vpop.f32.mrb[0].mxu0
    %830 = vdwg.mxu0
    %s831 = scalar_lea.vmem %s5, 32
    %v832 = vld [vmem:[%s831] sm:$0xff]
    %v833 = vld [vmem:[%s831 + $0x8] sm:$0xff]
    %v834 = vld [vmem:[%s831 + $0x10] sm:$0xff]
    %v835 = vld [vmem:[%s831 + $0x18] sm:$0xff]
    %836 = vmatprep.subr.mxu0 0.0
    %837 = vmatpush1.msra.mxu0 %v832
    %838 = vmatprep.subr.mxu0 0.0
    %839 = vmatpush1.msra.mxu0 %v833
    %840 = vmatprep.subr.mxu0 0.0
    %841 = vmatpush1.msra.mxu0 %v834
    %842 = vmatprep.subr.mxu0 0.0
    %843 = vmatpush1.msra.mxu0 %v835
    %844 = vmatprep.subr.mxu0 0.0
    %845 = vmatpush1.msra.mxu0 0.0
    %846 = vmatprep.subr.mxu0 0.0
    %847 = vmatpush1.msra.mxu0 0.0
    %848 = vmatprep.subr.mxu0 0.0
    %849 = vmatpush1.msra.mxu0 0.0
    %850 = vmatprep.subr.mxu0 0.0
    %851 = vmatpush1.msra.mxu0 0.0
    %852 = vmatprep.subr.mxu0 0.0
    %853 = vmatpush1.msra.mxu0 0.0
    %854 = vmatprep.subr.mxu0 0.0
    %855 = vmatpush1.msra.mxu0 0.0
    %856 = vmatprep.subr.mxu0 0.0
    %857 = vmatpush1.msra.mxu0 0.0
    %858 = vmatprep.subr.mxu0 0.0
    %859 = vmatpush1.msra.mxu0 0.0
    %860 = vmatprep.subr.mxu0 0.0
    %861 = vmatpush1.msra.mxu0 0.0
    %862 = vmatprep.subr.mxu0 0.0
    %863 = vmatpush1.msra.mxu0 0.0
    %864 = vmatprep.subr.mxu0 0.0
    %865 = vmatpush1.msra.mxu0 0.0
    %866 = vmatprep.subr.mxu0 0.0
    %867 = vmatpush1.msra.mxu0 0.0
    %868 = vmatprep.subr.mxu0 0.0
    %869 = vmatpush1.msra.mxu0 0.0
    %870 = vmatprep.subr.mxu0 0.0
    %871 = vmatpush1.msra.mxu0 0.0
    %872 = vmatprep.subr.mxu0 0.0
    %873 = vmatpush1.msra.mxu0 0.0
    %874 = vmatprep.subr.mxu0 0.0
    %875 = vmatpush1.msra.mxu0 0.0
    %876 = vmatprep.subr.mxu0 0.0
    %877 = vmatpush1.msra.mxu0 0.0
    %878 = vmatprep.subr.mxu0 0.0
    %879 = vmatpush1.msra.mxu0 0.0
    %880 = vmatprep.subr.mxu0 0.0
    %881 = vmatpush1.msra.mxu0 0.0
    %882 = vmatprep.subr.mxu0 0.0
    %883 = vmatpush1.msra.mxu0 0.0
    %884 = vmatprep.subr.mxu0 0.0
    %885 = vmatpush1.msra.mxu0 0.0
    %886 = vmatprep.subr.mxu0 0.0
    %887 = vmatpush1.msra.mxu0 0.0
    %888 = vmatprep.subr.mxu0 0.0
    %889 = vmatpush1.msra.mxu0 0.0
    %890 = vmatprep.subr.mxu0 0.0
    %891 = vmatpush1.msra.mxu0 0.0
    %892 = vmatprep.subr.mxu0 0.0
    %893 = vmatpush1.msra.mxu0 0.0
    %894 = vmatprep.subr.mxu0 0.0
    %895 = vmatpush1.msra.mxu0 0.0
    %896 = vmatprep.subr.mxu0 0.0
    %897 = vmatpush1.msra.mxu0 0.0
    %898 = vmatprep.subr.mxu0 0.0
    %899 = vmatpush1.msra.mxu0 0.0
    %900 = vmatprep.mubr.f32.mxu0 0.0
    %901 = vmatmul.mubr.f32.gmra.mrb[0].mxu0 %v106
    %v902 = vpop.f32.mrb[0].mxu0
    %v903 = vadd.f32 0.0, %v902
    %v904 = vpop.f32.mrb[0].mxu0
    %905 = vmatprep.mubr.f32.mxu0 0.0
    %906 = vmatmul.mubr.f32.gmra.mrb[0].mxu0 %v109
    %v907 = vpop.f32.mrb[0].mxu0
    %v908 = vadd.f32 0.0, %v907
    %v909 = vpop.f32.mrb[0].mxu0
    %910 = vdwg.mxu0
    %v912 = vsel %vm344, %v743, 0
    %v915 = vsel %vm344, %v823, 0
    %917 = vmatprep.subr.mxu0 0.0
    %918 = vmatpush1.xpose.msra.mxu0 %v915
    %919 = vmatprep.subr.mxu0 0.0
    %920 = vmatpush1.xpose.msra.mxu0 0.0
    %921 = vmatprep.subr.mxu0 0.0
    %922 = vmatpush1.xpose.msra.mxu0 0.0
    %923 = vmatprep.subr.mxu0 0.0
    %924 = vmatpush1.xpose.msra.mxu0 0.0
    %925 = vmatprep.subr.mxu0 0.0
    %926 = vmatpush1.xpose.msra.mxu0 0.0
    %927 = vmatprep.subr.mxu0 0.0
    %928 = vmatpush1.xpose.msra.mxu0 0.0
    %929 = vmatprep.subr.mxu0 0.0
    %930 = vmatpush1.xpose.msra.mxu0 0.0
    %931 = vmatprep.subr.mxu0 0.0
    %932 = vmatpush1.xpose.msra.mxu0 0.0
    %933 = vmatprep.subr.mxu0 0.0
    %934 = vmatpush1.xpose.msra.mxu0 0.0
    %935 = vmatprep.subr.mxu0 0.0
    %936 = vmatpush1.xpose.msra.mxu0 0.0
    %937 = vmatprep.subr.mxu0 0.0
    %938 = vmatpush1.xpose.msra.mxu0 0.0
    %939 = vmatprep.subr.mxu0 0.0
    %940 = vmatpush1.xpose.msra.mxu0 0.0
    %941 = vmatprep.subr.mxu0 0.0
    %942 = vmatpush1.xpose.msra.mxu0 0.0
    %943 = vmatprep.subr.mxu0 0.0
    %944 = vmatpush1.xpose.msra.mxu0 0.0
    %945 = vmatprep.subr.mxu0 0.0
    %946 = vmatpush1.xpose.msra.mxu0 0.0
    %947 = vmatprep.subr.mxu0 0.0
    %948 = vmatpush1.xpose.msra.mxu0 0.0
    %949 = vmatprep.subr.mxu0 0.0
    %950 = vmatpush1.xpose.msra.mxu0 0.0
    %951 = vmatprep.subr.mxu0 0.0
    %952 = vmatpush1.xpose.msra.mxu0 0.0
    %953 = vmatprep.subr.mxu0 0.0
    %954 = vmatpush1.xpose.msra.mxu0 0.0
    %955 = vmatprep.subr.mxu0 0.0
    %956 = vmatpush1.xpose.msra.mxu0 0.0
    %957 = vmatprep.subr.mxu0 0.0
    %958 = vmatpush1.xpose.msra.mxu0 0.0
    %959 = vmatprep.subr.mxu0 0.0
    %960 = vmatpush1.xpose.msra.mxu0 0.0
    %961 = vmatprep.subr.mxu0 0.0
    %962 = vmatpush1.xpose.msra.mxu0 0.0
    %963 = vmatprep.subr.mxu0 0.0
    %964 = vmatpush1.xpose.msra.mxu0 0.0
    %965 = vmatprep.subr.mxu0 0.0
    %966 = vmatpush1.xpose.msra.mxu0 0.0
    %967 = vmatprep.subr.mxu0 0.0
    %968 = vmatpush1.xpose.msra.mxu0 0.0
    %969 = vmatprep.subr.mxu0 0.0
    %970 = vmatpush1.xpose.msra.mxu0 0.0
    %971 = vmatprep.subr.mxu0 0.0
    %972 = vmatpush1.xpose.msra.mxu0 0.0
    %973 = vmatprep.subr.mxu0 0.0
    %974 = vmatpush1.xpose.msra.mxu0 0.0
    %975 = vmatprep.subr.mxu0 0.0
    %976 = vmatpush1.xpose.msra.mxu0 0.0
    %977 = vmatprep.subr.mxu0 0.0
    %978 = vmatpush1.xpose.msra.mxu0 0.0
    %979 = vmatprep.subr.mxu0 0.0
    %980 = vmatpush1.xpose.msra.mxu0 0.0
    %981 = vmatprep.mubr.f32.mxu0 0.0
    %982 = vmatmul.mubr.f32.gmra.mrb[0].mxu0 %v912
    %v983 = vpop.f32.mrb[0].mxu0
    %v984 = vadd.f32 0.0, %v983
    %v985 = vpop.f32.mrb[0].mxu0
    %986 = vdwg.mxu0
    %v988 = vsel %vm344, %v748, 0
    %v991 = vsel %vm344, %v828, 0
    %993 = vmatprep.subr.mxu0 0.0
    %994 = vmatpush1.xpose.msra.mxu0 %v991
    %995 = vmatprep.subr.mxu0 0.0
    %996 = vmatpush1.xpose.msra.mxu0 0.0
    %997 = vmatprep.subr.mxu0 0.0
    %998 = vmatpush1.xpose.msra.mxu0 0.0
    %999 = vmatprep.subr.mxu0 0.0
    %1000 = vmatpush1.xpose.msra.mxu0 0.0
    %1001 = vmatprep.subr.mxu0 0.0
    %1002 = vmatpush1.xpose.msra.mxu0 0.0
    %1003 = vmatprep.subr.mxu0 0.0
    %1004 = vmatpush1.xpose.msra.mxu0 0.0
    %1005 = vmatprep.subr.mxu0 0.0
    %1006 = vmatpush1.xpose.msra.mxu0 0.0
    %1007 = vmatprep.subr.mxu0 0.0
    %1008 = vmatpush1.xpose.msra.mxu0 0.0
    %1009 = vmatprep.subr.mxu0 0.0
    %1010 = vmatpush1.xpose.msra.mxu0 0.0
    %1011 = vmatprep.subr.mxu0 0.0
    %1012 = vmatpush1.xpose.msra.mxu0 0.0
    %1013 = vmatprep.subr.mxu0 0.0
    %1014 = vmatpush1.xpose.msra.mxu0 0.0
    %1015 = vmatprep.subr.mxu0 0.0
    %1016 = vmatpush1.xpose.msra.mxu0 0.0
    %1017 = vmatprep.subr.mxu0 0.0
    %1018 = vmatpush1.xpose.msra.mxu0 0.0
    %1019 = vmatprep.subr.mxu0 0.0
    %1020 = vmatpush1.xpose.msra.mxu0 0.0
    %1021 = vmatprep.subr.mxu0 0.0
    %1022 = vmatpush1.xpose.msra.mxu0 0.0
    %1023 = vmatprep.subr.mxu0 0.0
    %1024 = vmatpush1.xpose.msra.mxu0 0.0
    %1025 = vmatprep.subr.mxu0 0.0
    %1026 = vmatpush1.xpose.msra.mxu0 0.0
    %1027 = vmatprep.subr.mxu0 0.0
    %1028 = vmatpush1.xpose.msra.mxu0 0.0
    %1029 = vmatprep.subr.mxu0 0.0
    %1030 = vmatpush1.xpose.msra.mxu0 0.0
    %1031 = vmatprep.subr.mxu0 0.0
    %1032 = vmatpush1.xpose.msra.mxu0 0.0
    %1033 = vmatprep.subr.mxu0 0.0
    %1034 = vmatpush1.xpose.msra.mxu0 0.0
    %1035 = vmatprep.subr.mxu0 0.0
    %1036 = vmatpush1.xpose.msra.mxu0 0.0
    %1037 = vmatprep.subr.mxu0 0.0
    %1038 = vmatpush1.xpose.msra.mxu0 0.0
    %1039 = vmatprep.subr.mxu0 0.0
    %1040 = vmatpush1.xpose.msra.mxu0 0.0
    %1041 = vmatprep.subr.mxu0 0.0
    %1042 = vmatpush1.xpose.msra.mxu0 0.0
    %1043 = vmatprep.subr.mxu0 0.0
    %1044 = vmatpush1.xpose.msra.mxu0 0.0
    %1045 = vmatprep.subr.mxu0 0.0
    %1046 = vmatpush1.xpose.msra.mxu0 0.0
    %1047 = vmatprep.subr.mxu0 0.0
    %1048 = vmatpush1.xpose.msra.mxu0 0.0
    %1049 = vmatprep.subr.mxu0 0.0
    %1050 = vmatpush1.xpose.msra.mxu0 0.0
    %1051 = vmatprep.subr.mxu0 0.0
    %1052 = vmatpush1.xpose.msra.mxu0 0.0
    %1053 = vmatprep.subr.mxu0 0.0
    %1054 = vmatpush1.xpose.msra.mxu0 0.0
    %1055 = vmatprep.subr.mxu0 0.0
    %1056 = vmatpush1.xpose.msra.mxu0 0.0
    %1057 = vmatprep.mubr.f32.mxu0 0.0
    %1058 = vmatmul.mubr.f32.gmra.mrb[0].mxu0 %v988
    %v1059 = vpop.f32.mrb[0].mxu0
    %v1060 = vadd.f32 0.0, %v1059
    %v1061 = vpop.f32.mrb[0].mxu0
    %1062 = vdwg.mxu0
    %v1063 = vmul.f32 %v984, 0.4472136
    %v1064 = vmul.f32 %v1060, 0.4472136
    %v1065 = vsel %vm100, %v1063, -1e+30
    %v1066 = vsel %vm100, %v1064, -1e+30
    %v1067 = vsel %vm501, %v1065, -inf
    %1068 = vmax.xlane.f32.xlu0 %v1067
    %v1069 = vpop.xlane.xlu0 %1068
    %v1070 = vsel %vm501, %v1066, -inf
    %1071 = vmax.xlane.f32.xlu0 %v1070
    %v1072 = vpop.xlane.xlu0 %1071
    %v1073 = vsub.f32 %v1065, %v1069
    %v1074 = vsub.f32 %v1066, %v1072
    %v1075 = vmul.f32 %v1073, 1.442695
    %v1076 = vpow.pop %v1075
    %v1077 = vmul.f32 %v1074, 1.442695
    %v1078 = vpow.pop %v1077
    %v1079 = vsel %vm501, %v1076, 0.0
    %1080 = vadd.xlane.f32.xlu0 %v1079
    %v1081 = vpop.xlane.xlu0 %1080
    %v1082 = vsel %vm501, %v1078, 0.0
    %1083 = vadd.xlane.f32.xlu0 %v1082
    %v1084 = vpop.xlane.xlu0 %1083
    %v1085 = vrcp.pop %v1081
    %v1086 = vmul.f32 %v1076, %v1085
    %v1087 = vrcp.pop %v1084
    %v1088 = vmul.f32 %v1078, %v1087
    %v1090 = vsel %vm501, %v1086, 0
    %1092 = vmatprep.subr.mxu0 0.0
    %1093 = vmatpush1.msra.mxu0 %v903
    %1094 = vmatprep.subr.mxu0 0.0
    %1095 = vmatpush1.msra.mxu0 0.0
    %1096 = vmatprep.subr.mxu0 0.0
    %1097 = vmatpush1.msra.mxu0 0.0
    %1098 = vmatprep.subr.mxu0 0.0
    %1099 = vmatpush1.msra.mxu0 0.0
    %1100 = vmatprep.subr.mxu0 0.0
    %1101 = vmatpush1.msra.mxu0 0.0
    %1102 = vmatprep.subr.mxu0 0.0
    %1103 = vmatpush1.msra.mxu0 0.0
    %1104 = vmatprep.subr.mxu0 0.0
    %1105 = vmatpush1.msra.mxu0 0.0
    %1106 = vmatprep.subr.mxu0 0.0
    %1107 = vmatpush1.msra.mxu0 0.0
    %1108 = vmatprep.subr.mxu0 0.0
    %1109 = vmatpush1.msra.mxu0 0.0
    %1110 = vmatprep.subr.mxu0 0.0
    %1111 = vmatpush1.msra.mxu0 0.0
    %1112 = vmatprep.subr.mxu0 0.0
    %1113 = vmatpush1.msra.mxu0 0.0
    %1114 = vmatprep.subr.mxu0 0.0
    %1115 = vmatpush1.msra.mxu0 0.0
    %1116 = vmatprep.subr.mxu0 0.0
    %1117 = vmatpush1.msra.mxu0 0.0
    %1118 = vmatprep.subr.mxu0 0.0
    %1119 = vmatpush1.msra.mxu0 0.0
    %1120 = vmatprep.subr.mxu0 0.0
    %1121 = vmatpush1.msra.mxu0 0.0
    %1122 = vmatprep.subr.mxu0 0.0
    %1123 = vmatpush1.msra.mxu0 0.0
    %1124 = vmatprep.subr.mxu0 0.0
    %1125 = vmatpush1.msra.mxu0 0.0
    %1126 = vmatprep.subr.mxu0 0.0
    %1127 = vmatpush1.msra.mxu0 0.0
    %1128 = vmatprep.subr.mxu0 0.0
    %1129 = vmatpush1.msra.mxu0 0.0
    %1130 = vmatprep.subr.mxu0 0.0
    %1131 = vmatpush1.msra.mxu0 0.0
    %1132 = vmatprep.subr.mxu0 0.0
    %1133 = vmatpush1.msra.mxu0 0.0
    %1134 = vmatprep.subr.mxu0 0.0
    %1135 = vmatpush1.msra.mxu0 0.0
    %1136 = vmatprep.subr.mxu0 0.0
    %1137 = vmatpush1.msra.mxu0 0.0
    %1138 = vmatprep.subr.mxu0 0.0
    %1139 = vmatpush1.msra.mxu0 0.0
    %1140 = vmatprep.subr.mxu0 0.0
    %1141 = vmatpush1.msra.mxu0 0.0
    %1142 = vmatprep.subr.mxu0 0.0
    %1143 = vmatpush1.msra.mxu0 0.0
    %1144 = vmatprep.subr.mxu0 0.0
    %1145 = vmatpush1.msra.mxu0 0.0
    %1146 = vmatprep.subr.mxu0 0.0
    %1147 = vmatpush1.msra.mxu0 0.0
    %1148 = vmatprep.subr.mxu0 0.0
    %1149 = vmatpush1.msra.mxu0 0.0
    %1150 = vmatprep.subr.mxu0 0.0
    %1151 = vmatpush1.msra.mxu0 0.0
    %1152 = vmatprep.subr.mxu0 0.0
    %1153 = vmatpush1.msra.mxu0 0.0
    %1154 = vmatprep.subr.mxu0 0.0
    %1155 = vmatpush1.msra.mxu0 0.0
    %1156 = vmatprep.mubr.f32.mxu0 0.0
    %1157 = vmatmul.mubr.f32.gmra.mrb[0].mxu0 %v1090
    %v1158 = vpop.f32.mrb[0].mxu0
    %v1159 = vadd.f32 0.0, %v1158
    %v1160 = vpop.f32.mrb[0].mxu0
    %1161 = vdwg.mxu0
    %v1163 = vsel %vm501, %v1088, 0
    %1165 = vmatprep.subr.mxu0 0.0
    %1166 = vmatpush1.msra.mxu0 %v908
    %1167 = vmatprep.subr.mxu0 0.0
    %1168 = vmatpush1.msra.mxu0 0.0
    %1169 = vmatprep.subr.mxu0 0.0
    %1170 = vmatpush1.msra.mxu0 0.0
    %1171 = vmatprep.subr.mxu0 0.0
    %1172 = vmatpush1.msra.mxu0 0.0
    %1173 = vmatprep.subr.mxu0 0.0
    %1174 = vmatpush1.msra.mxu0 0.0
    %1175 = vmatprep.subr.mxu0 0.0
    %1176 = vmatpush1.msra.mxu0 0.0
    %1177 = vmatprep.subr.mxu0 0.0
    %1178 = vmatpush1.msra.mxu0 0.0
    %1179 = vmatprep.subr.mxu0 0.0
    %1180 = vmatpush1.msra.mxu0 0.0
    %1181 = vmatprep.subr.mxu0 0.0
    %1182 = vmatpush1.msra.mxu0 0.0
    %1183 = vmatprep.subr.mxu0 0.0
    %1184 = vmatpush1.msra.mxu0 0.0
    %1185 = vmatprep.subr.mxu0 0.0
    %1186 = vmatpush1.msra.mxu0 0.0
    %1187 = vmatprep.subr.mxu0 0.0
    %1188 = vmatpush1.msra.mxu0 0.0
    %1189 = vmatprep.subr.mxu0 0.0
    %1190 = vmatpush1.msra.mxu0 0.0
    %1191 = vmatprep.subr.mxu0 0.0
    %1192 = vmatpush1.msra.mxu0 0.0
    %1193 = vmatprep.subr.mxu0 0.0
    %1194 = vmatpush1.msra.mxu0 0.0
    %1195 = vmatprep.subr.mxu0 0.0
    %1196 = vmatpush1.msra.mxu0 0.0
    %1197 = vmatprep.subr.mxu0 0.0
    %1198 = vmatpush1.msra.mxu0 0.0
    %1199 = vmatprep.subr.mxu0 0.0
    %1200 = vmatpush1.msra.mxu0 0.0
    %1201 = vmatprep.subr.mxu0 0.0
    %1202 = vmatpush1.msra.mxu0 0.0
    %1203 = vmatprep.subr.mxu0 0.0
    %1204 = vmatpush1.msra.mxu0 0.0
    %1205 = vmatprep.subr.mxu0 0.0
    %1206 = vmatpush1.msra.mxu0 0.0
    %1207 = vmatprep.subr.mxu0 0.0
    %1208 = vmatpush1.msra.mxu0 0.0
    %1209 = vmatprep.subr.mxu0 0.0
    %1210 = vmatpush1.msra.mxu0 0.0
    %1211 = vmatprep.subr.mxu0 0.0
    %1212 = vmatpush1.msra.mxu0 0.0
    %1213 = vmatprep.subr.mxu0 0.0
    %1214 = vmatpush1.msra.mxu0 0.0
    %1215 = vmatprep.subr.mxu0 0.0
    %1216 = vmatpush1.msra.mxu0 0.0
    %1217 = vmatprep.subr.mxu0 0.0
    %1218 = vmatpush1.msra.mxu0 0.0
    %1219 = vmatprep.subr.mxu0 0.0
    %1220 = vmatpush1.msra.mxu0 0.0
    %1221 = vmatprep.subr.mxu0 0.0
    %1222 = vmatpush1.msra.mxu0 0.0
    %1223 = vmatprep.subr.mxu0 0.0
    %1224 = vmatpush1.msra.mxu0 0.0
    %1225 = vmatprep.subr.mxu0 0.0
    %1226 = vmatpush1.msra.mxu0 0.0
    %1227 = vmatprep.subr.mxu0 0.0
    %1228 = vmatpush1.msra.mxu0 0.0
    %1229 = vmatprep.mubr.f32.mxu0 0.0
    %1230 = vmatmul.mubr.f32.gmra.mrb[0].mxu0 %v1163
    %v1231 = vpop.f32.mrb[0].mxu0
    %v1232 = vadd.f32 0.0, %v1231
    %v1233 = vpop.f32.mrb[0].mxu0
    %1234 = vdwg.mxu0
    %s1235 = scalar_lea.vmem %s6, 8
    %v1236 = vld [vmem:[%s1235] sm:$0x1f]
    %v1238 = vsel %vm344, %v1159, 0
    %v1241 = vsel %vm344, %v1232, 0
    %vm1243 = vcmask 1044480
    %v1245 = vsel %vm1243, %v1236, 0
    %1247 = vmatprep.subr.mxu0 0.0
    %1248 = vmatpush1.msra.mxu0 %v1245
    %1249 = vmatprep.subr.mxu0 0.0
    %1250 = vmatpush1.msra.mxu0 0.0
    %1251 = vmatprep.subr.mxu0 0.0
    %1252 = vmatpush1.msra.mxu0 0.0
    %1253 = vmatprep.subr.mxu0 0.0
    %1254 = vmatpush1.msra.mxu0 0.0
    %1255 = vmatprep.subr.mxu0 0.0
    %1256 = vmatpush1.msra.mxu0 0.0
    %1257 = vmatprep.subr.mxu0 0.0
    %1258 = vmatpush1.msra.mxu0 0.0
    %1259 = vmatprep.subr.mxu0 0.0
    %1260 = vmatpush1.msra.mxu0 0.0
    %1261 = vmatprep.subr.mxu0 0.0
    %1262 = vmatpush1.msra.mxu0 0.0
    %1263 = vmatprep.subr.mxu0 0.0
    %1264 = vmatpush1.msra.mxu0 0.0
    %1265 = vmatprep.subr.mxu0 0.0
    %1266 = vmatpush1.msra.mxu0 0.0
    %1267 = vmatprep.subr.mxu0 0.0
    %1268 = vmatpush1.msra.mxu0 0.0
    %1269 = vmatprep.subr.mxu0 0.0
    %1270 = vmatpush1.msra.mxu0 0.0
    %1271 = vmatprep.subr.mxu0 0.0
    %1272 = vmatpush1.msra.mxu0 0.0
    %1273 = vmatprep.subr.mxu0 0.0
    %1274 = vmatpush1.msra.mxu0 0.0
    %1275 = vmatprep.subr.mxu0 0.0
    %1276 = vmatpush1.msra.mxu0 0.0
    %1277 = vmatprep.subr.mxu0 0.0
    %1278 = vmatpush1.msra.mxu0 0.0
    %1279 = vmatprep.subr.mxu0 0.0
    %1280 = vmatpush1.msra.mxu0 0.0
    %1281 = vmatprep.subr.mxu0 0.0
    %1282 = vmatpush1.msra.mxu0 0.0
    %1283 = vmatprep.subr.mxu0 0.0
    %1284 = vmatpush1.msra.mxu0 0.0
    %1285 = vmatprep.subr.mxu0 0.0
    %1286 = vmatpush1.msra.mxu0 0.0
    %1287 = vmatprep.subr.mxu0 0.0
    %1288 = vmatpush1.msra.mxu0 0.0
    %1289 = vmatprep.subr.mxu0 0.0
    %1290 = vmatpush1.msra.mxu0 0.0
    %1291 = vmatprep.subr.mxu0 0.0
    %1292 = vmatpush1.msra.mxu0 0.0
    %1293 = vmatprep.subr.mxu0 0.0
    %1294 = vmatpush1.msra.mxu0 0.0
    %1295 = vmatprep.subr.mxu0 0.0
    %1296 = vmatpush1.msra.mxu0 0.0
    %1297 = vmatprep.subr.mxu0 0.0
    %1298 = vmatpush1.msra.mxu0 0.0
    %1299 = vmatprep.subr.mxu0 0.0
    %1300 = vmatpush1.msra.mxu0 0.0
    %1301 = vmatprep.subr.mxu0 0.0
    %1302 = vmatpush1.msra.mxu0 0.0
    %1303 = vmatprep.subr.mxu0 0.0
    %1304 = vmatpush1.msra.mxu0 0.0
    %1305 = vmatprep.subr.mxu0 0.0
    %1306 = vmatpush1.msra.mxu0 0.0
    %1307 = vmatprep.subr.mxu0 0.0
    %1308 = vmatpush1.msra.mxu0 0.0
    %1309 = vmatprep.subr.mxu0 0.0
    %1310 = vmatpush1.msra.mxu0 0.0
    %1311 = vmatprep.mubr.f32.mxu0 0.0
    %1312 = vmatmul.mubr.f32.gmra.mrb[0].mxu0 %v1238
    %v1313 = vpop.f32.mrb[0].mxu0
    %v1314 = vadd.f32 0.0, %v1313
    %v1315 = vpop.f32.mrb[0].mxu0
    %1316 = vmatprep.mubr.f32.mxu0 0.0
    %1317 = vmatmul.mubr.f32.gmra.mrb[0].mxu0 %v1241
    %v1318 = vpop.f32.mrb[0].mxu0
    %v1319 = vadd.f32 0.0, %v1318
    %v1320 = vpop.f32.mrb[0].mxu0
    %1321 = vdwg.mxu0
    %v1323 = vsel %vm344, %v594, 0
    %v1326 = vsel %vm344, %v667, 0
    %v1329 = vsel %vm1243, %v670, 0
    %1331 = vmatprep.subr.mxu0 0.0
    %1332 = vmatpush1.msra.mxu0 %v1329
    %1333 = vmatprep.subr.mxu0 0.0
    %1334 = vmatpush1.msra.mxu0 0.0
    %1335 = vmatprep.subr.mxu0 0.0
    %1336 = vmatpush1.msra.mxu0 0.0
    %1337 = vmatprep.subr.mxu0 0.0
    %1338 = vmatpush1.msra.mxu0 0.0
    %1339 = vmatprep.subr.mxu0 0.0
    %1340 = vmatpush1.msra.mxu0 0.0
    %1341 = vmatprep.subr.mxu0 0.0
    %1342 = vmatpush1.msra.mxu0 0.0
    %1343 = vmatprep.subr.mxu0 0.0
    %1344 = vmatpush1.msra.mxu0 0.0
    %1345 = vmatprep.subr.mxu0 0.0
    %1346 = vmatpush1.msra.mxu0 0.0
    %1347 = vmatprep.subr.mxu0 0.0
    %1348 = vmatpush1.msra.mxu0 0.0
    %1349 = vmatprep.subr.mxu0 0.0
    %1350 = vmatpush1.msra.mxu0 0.0
    %1351 = vmatprep.subr.mxu0 0.0
    %1352 = vmatpush1.msra.mxu0 0.0
    %1353 = vmatprep.subr.mxu0 0.0
    %1354 = vmatpush1.msra.mxu0 0.0
    %1355 = vmatprep.subr.mxu0 0.0
    %1356 = vmatpush1.msra.mxu0 0.0
    %1357 = vmatprep.subr.mxu0 0.0
    %1358 = vmatpush1.msra.mxu0 0.0
    %1359 = vmatprep.subr.mxu0 0.0
    %1360 = vmatpush1.msra.mxu0 0.0
    %1361 = vmatprep.subr.mxu0 0.0
    %1362 = vmatpush1.msra.mxu0 0.0
    %1363 = vmatprep.subr.mxu0 0.0
    %1364 = vmatpush1.msra.mxu0 0.0
    %1365 = vmatprep.subr.mxu0 0.0
    %1366 = vmatpush1.msra.mxu0 0.0
    %1367 = vmatprep.subr.mxu0 0.0
    %1368 = vmatpush1.msra.mxu0 0.0
    %1369 = vmatprep.subr.mxu0 0.0
    %1370 = vmatpush1.msra.mxu0 0.0
    %1371 = vmatprep.subr.mxu0 0.0
    %1372 = vmatpush1.msra.mxu0 0.0
    %1373 = vmatprep.subr.mxu0 0.0
    %1374 = vmatpush1.msra.mxu0 0.0
    %1375 = vmatprep.subr.mxu0 0.0
    %1376 = vmatpush1.msra.mxu0 0.0
    %1377 = vmatprep.subr.mxu0 0.0
    %1378 = vmatpush1.msra.mxu0 0.0
    %1379 = vmatprep.subr.mxu0 0.0
    %1380 = vmatpush1.msra.mxu0 0.0
    %1381 = vmatprep.subr.mxu0 0.0
    %1382 = vmatpush1.msra.mxu0 0.0
    %1383 = vmatprep.subr.mxu0 0.0
    %1384 = vmatpush1.msra.mxu0 0.0
    %1385 = vmatprep.subr.mxu0 0.0
    %1386 = vmatpush1.msra.mxu0 0.0
    %1387 = vmatprep.subr.mxu0 0.0
    %1388 = vmatpush1.msra.mxu0 0.0
    %1389 = vmatprep.subr.mxu0 0.0
    %1390 = vmatpush1.msra.mxu0 0.0
    %1391 = vmatprep.subr.mxu0 0.0
    %1392 = vmatpush1.msra.mxu0 0.0
    %1393 = vmatprep.subr.mxu0 0.0
    %1394 = vmatpush1.msra.mxu0 0.0
    %1395 = vmatprep.mubr.f32.mxu0 0.0
    %1396 = vmatmul.mubr.f32.gmra.mrb[0].mxu0 %v1323
    %v1397 = vpop.f32.mrb[0].mxu0
    %v1398 = vadd.f32 %v1314, %v1397
    %v1399 = vpop.f32.mrb[0].mxu0
    %1400 = vmatprep.mubr.f32.mxu0 0.0
    %1401 = vmatmul.mubr.f32.gmra.mrb[0].mxu0 %v1326
    %v1402 = vpop.f32.mrb[0].mxu0
    %v1403 = vadd.f32 %v1319, %v1402
    %v1404 = vpop.f32.mrb[0].mxu0
    %1405 = vdwg.mxu0
    %s1406 = scalar_lea.vmem %s3, 64
    %v1407 = vld [vmem:[%s1406] sm:$0xff]
    %v1408 = vld [vmem:[%s1406 + $0x8] sm:$0xff]
    %v1409 = vld [vmem:[%s1406 + $0x10] sm:$0xff]
    %v1410 = vld [vmem:[%s1406 + $0x18] sm:$0xff]
    %1411 = vmatprep.subr.mxu0 0.0
    %1412 = vmatpush1.msra.mxu0 %v1407
    %1413 = vmatprep.subr.mxu0 0.0
    %1414 = vmatpush1.msra.mxu0 %v1408
    %1415 = vmatprep.subr.mxu0 0.0
    %1416 = vmatpush1.msra.mxu0 %v1409
    %1417 = vmatprep.subr.mxu0 0.0
    %1418 = vmatpush1.msra.mxu0 %v1410
    %1419 = vmatprep.subr.mxu0 0.0
    %1420 = vmatpush1.msra.mxu0 0.0
    %1421 = vmatprep.subr.mxu0 0.0
    %1422 = vmatpush1.msra.mxu0 0.0
    %1423 = vmatprep.subr.mxu0 0.0
    %1424 = vmatpush1.msra.mxu0 0.0
    %1425 = vmatprep.subr.mxu0 0.0
    %1426 = vmatpush1.msra.mxu0 0.0
    %1427 = vmatprep.subr.mxu0 0.0
    %1428 = vmatpush1.msra.mxu0 0.0
    %1429 = vmatprep.subr.mxu0 0.0
    %1430 = vmatpush1.msra.mxu0 0.0
    %1431 = vmatprep.subr.mxu0 0.0
    %1432 = vmatpush1.msra.mxu0 0.0
    %1433 = vmatprep.subr.mxu0 0.0
    %1434 = vmatpush1.msra.mxu0 0.0
    %1435 = vmatprep.subr.mxu0 0.0
    %1436 = vmatpush1.msra.mxu0 0.0
    %1437 = vmatprep.subr.mxu0 0.0
    %1438 = vmatpush1.msra.mxu0 0.0
    %1439 = vmatprep.subr.mxu0 0.0
    %1440 = vmatpush1.msra.mxu0 0.0
    %1441 = vmatprep.subr.mxu0 0.0
    %1442 = vmatpush1.msra.mxu0 0.0
    %1443 = vmatprep.subr.mxu0 0.0
    %1444 = vmatpush1.msra.mxu0 0.0
    %1445 = vmatprep.subr.mxu0 0.0
    %1446 = vmatpush1.msra.mxu0 0.0
    %1447 = vmatprep.subr.mxu0 0.0
    %1448 = vmatpush1.msra.mxu0 0.0
    %1449 = vmatprep.subr.mxu0 0.0
    %1450 = vmatpush1.msra.mxu0 0.0
    %1451 = vmatprep.subr.mxu0 0.0
    %1452 = vmatpush1.msra.mxu0 0.0
    %1453 = vmatprep.subr.mxu0 0.0
    %1454 = vmatpush1.msra.mxu0 0.0
    %1455 = vmatprep.subr.mxu0 0.0
    %1456 = vmatpush1.msra.mxu0 0.0
    %1457 = vmatprep.subr.mxu0 0.0
    %1458 = vmatpush1.msra.mxu0 0.0
    %1459 = vmatprep.subr.mxu0 0.0
    %1460 = vmatpush1.msra.mxu0 0.0
    %1461 = vmatprep.subr.mxu0 0.0
    %1462 = vmatpush1.msra.mxu0 0.0
    %1463 = vmatprep.subr.mxu0 0.0
    %1464 = vmatpush1.msra.mxu0 0.0
    %1465 = vmatprep.subr.mxu0 0.0
    %1466 = vmatpush1.msra.mxu0 0.0
    %1467 = vmatprep.subr.mxu0 0.0
    %1468 = vmatpush1.msra.mxu0 0.0
    %1469 = vmatprep.subr.mxu0 0.0
    %1470 = vmatpush1.msra.mxu0 0.0
    %1471 = vmatprep.subr.mxu0 0.0
    %1472 = vmatpush1.msra.mxu0 0.0
    %1473 = vmatprep.subr.mxu0 0.0
    %1474 = vmatpush1.msra.mxu0 0.0
    %1475 = vmatprep.mubr.f32.mxu0 0.0
    %1476 = vmatmul.mubr.f32.gmra.mrb[0].mxu0 %v106
    %v1477 = vpop.f32.mrb[0].mxu0
    %v1478 = vadd.f32 0.0, %v1477
    %v1479 = vpop.f32.mrb[0].mxu0
    %1480 = vmatprep.mubr.f32.mxu0 0.0
    %1481 = vmatmul.mubr.f32.gmra.mrb[0].mxu0 %v109
    %v1482 = vpop.f32.mrb[0].mxu0
    %v1483 = vadd.f32 0.0, %v1482
    %v1484 = vpop.f32.mrb[0].mxu0
    %1485 = vdwg.mxu0
    %s1486 = scalar_lea.vmem %s4, 64
    %v1487 = vld [vmem:[%s1486] sm:$0xff]
    %v1488 = vld [vmem:[%s1486 + $0x8] sm:$0xff]
    %v1489 = vld [vmem:[%s1486 + $0x10] sm:$0xff]
    %v1490 = vld [vmem:[%s1486 + $0x18] sm:$0xff]
    %1491 = vmatprep.subr.mxu0 0.0
    %1492 = vmatpush1.msra.mxu0 %v1487
    %1493 = vmatprep.subr.mxu0 0.0
    %1494 = vmatpush1.msra.mxu0 %v1488
    %1495 = vmatprep.subr.mxu0 0.0
    %1496 = vmatpush1.msra.mxu0 %v1489
    %1497 = vmatprep.subr.mxu0 0.0
    %1498 = vmatpush1.msra.mxu0 %v1490
    %1499 = vmatprep.subr.mxu0 0.0
    %1500 = vmatpush1.msra.mxu0 0.0
    %1501 = vmatprep.subr.mxu0 0.0
    %1502 = vmatpush1.msra.mxu0 0.0
    %1503 = vmatprep.subr.mxu0 0.0
    %1504 = vmatpush1.msra.mxu0 0.0
    %1505 = vmatprep.subr.mxu0 0.0
    %1506 = vmatpush1.msra.mxu0 0.0
    %1507 = vmatprep.subr.mxu0 0.0
    %1508 = vmatpush1.msra.mxu0 0.0
    %1509 = vmatprep.subr.mxu0 0.0
    %1510 = vmatpush1.msra.mxu0 0.0
    %1511 = vmatprep.subr.mxu0 0.0
    %1512 = vmatpush1.msra.mxu0 0.0
    %1513 = vmatprep.subr.mxu0 0.0
    %1514 = vmatpush1.msra.mxu0 0.0
    %1515 = vmatprep.subr.mxu0 0.0
    %1516 = vmatpush1.msra.mxu0 0.0
    %1517 = vmatprep.subr.mxu0 0.0
    %1518 = vmatpush1.msra.mxu0 0.0
    %1519 = vmatprep.subr.mxu0 0.0
    %1520 = vmatpush1.msra.mxu0 0.0
    %1521 = vmatprep.subr.mxu0 0.0
    %1522 = vmatpush1.msra.mxu0 0.0
    %1523 = vmatprep.subr.mxu0 0.0
    %1524 = vmatpush1.msra.mxu0 0.0
    %1525 = vmatprep.subr.mxu0 0.0
    %1526 = vmatpush1.msra.mxu0 0.0
    %1527 = vmatprep.subr.mxu0 0.0
    %1528 = vmatpush1.msra.mxu0 0.0
    %1529 = vmatprep.subr.mxu0 0.0
    %1530 = vmatpush1.msra.mxu0 0.0
    %1531 = vmatprep.subr.mxu0 0.0
    %1532 = vmatpush1.msra.mxu0 0.0
    %1533 = vmatprep.subr.mxu0 0.0
    %1534 = vmatpush1.msra.mxu0 0.0
    %1535 = vmatprep.subr.mxu0 0.0
    %1536 = vmatpush1.msra.mxu0 0.0
    %1537 = vmatprep.subr.mxu0 0.0
    %1538 = vmatpush1.msra.mxu0 0.0
    %1539 = vmatprep.subr.mxu0 0.0
    %1540 = vmatpush1.msra.mxu0 0.0
    %1541 = vmatprep.subr.mxu0 0.0
    %1542 = vmatpush1.msra.mxu0 0.0
    %1543 = vmatprep.subr.mxu0 0.0
    %1544 = vmatpush1.msra.mxu0 0.0
    %1545 = vmatprep.subr.mxu0 0.0
    %1546 = vmatpush1.msra.mxu0 0.0
    %1547 = vmatprep.subr.mxu0 0.0
    %1548 = vmatpush1.msra.mxu0 0.0
    %1549 = vmatprep.subr.mxu0 0.0
    %1550 = vmatpush1.msra.mxu0 0.0
    %1551 = vmatprep.subr.mxu0 0.0
    %1552 = vmatpush1.msra.mxu0 0.0
    %1553 = vmatprep.subr.mxu0 0.0
    %1554 = vmatpush1.msra.mxu0 0.0
    %1555 = vmatprep.mubr.f32.mxu0 0.0
    %1556 = vmatmul.mubr.f32.gmra.mrb[0].mxu0 %v106
    %v1557 = vpop.f32.mrb[0].mxu0
    %v1558 = vadd.f32 0.0, %v1557
    %v1559 = vpop.f32.mrb[0].mxu0
    %1560 = vmatprep.mubr.f32.mxu0 0.0
    %1561 = vmatmul.mubr.f32.gmra.mrb[0].mxu0 %v109
    %v1562 = vpop.f32.mrb[0].mxu0
    %v1563 = vadd.f32 0.0, %v1562
    %v1564 = vpop.f32.mrb[0].mxu0
    %1565 = vdwg.mxu0
    %s1566 = scalar_lea.vmem %s5, 64
    %v1567 = vld [vmem:[%s1566] sm:$0xff]
    %v1568 = vld [vmem:[%s1566 + $0x8] sm:$0xff]
    %v1569 = vld [vmem:[%s1566 + $0x10] sm:$0xff]
    %v1570 = vld [vmem:[%s1566 + $0x18] sm:$0xff]
    %1571 = vmatprep.subr.mxu0 0.0
    %1572 = vmatpush1.msra.mxu0 %v1567
    %1573 = vmatprep.subr.mxu0 0.0
    %1574 = vmatpush1.msra.mxu0 %v1568
    %1575 = vmatprep.subr.mxu0 0.0
    %1576 = vmatpush1.msra.mxu0 %v1569
    %1577 = vmatprep.subr.mxu0 0.0
    %1578 = vmatpush1.msra.mxu0 %v1570
    %1579 = vmatprep.subr.mxu0 0.0
    %1580 = vmatpush1.msra.mxu0 0.0
    %1581 = vmatprep.subr.mxu0 0.0
    %1582 = vmatpush1.msra.mxu0 0.0
    %1583 = vmatprep.subr.mxu0 0.0
    %1584 = vmatpush1.msra.mxu0 0.0
    %1585 = vmatprep.subr.mxu0 0.0
    %1586 = vmatpush1.msra.mxu0 0.0
    %1587 = vmatprep.subr.mxu0 0.0
    %1588 = vmatpush1.msra.mxu0 0.0
    %1589 = vmatprep.subr.mxu0 0.0
    %1590 = vmatpush1.msra.mxu0 0.0
    %1591 = vmatprep.subr.mxu0 0.0
    %1592 = vmatpush1.msra.mxu0 0.0
    %1593 = vmatprep.subr.mxu0 0.0
    %1594 = vmatpush1.msra.mxu0 0.0
    %1595 = vmatprep.subr.mxu0 0.0
    %1596 = vmatpush1.msra.mxu0 0.0
    %1597 = vmatprep.subr.mxu0 0.0
    %1598 = vmatpush1.msra.mxu0 0.0
    %1599 = vmatprep.subr.mxu0 0.0
    %1600 = vmatpush1.msra.mxu0 0.0
    %1601 = vmatprep.subr.mxu0 0.0
    %1602 = vmatpush1.msra.mxu0 0.0
    %1603 = vmatprep.subr.mxu0 0.0
    %1604 = vmatpush1.msra.mxu0 0.0
    %1605 = vmatprep.subr.mxu0 0.0
    %1606 = vmatpush1.msra.mxu0 0.0
    %1607 = vmatprep.subr.mxu0 0.0
    %1608 = vmatpush1.msra.mxu0 0.0
    %1609 = vmatprep.subr.mxu0 0.0
    %1610 = vmatpush1.msra.mxu0 0.0
    %1611 = vmatprep.subr.mxu0 0.0
    %1612 = vmatpush1.msra.mxu0 0.0
    %1613 = vmatprep.subr.mxu0 0.0
    %1614 = vmatpush1.msra.mxu0 0.0
    %1615 = vmatprep.subr.mxu0 0.0
    %1616 = vmatpush1.msra.mxu0 0.0
    %1617 = vmatprep.subr.mxu0 0.0
    %1618 = vmatpush1.msra.mxu0 0.0
    %1619 = vmatprep.subr.mxu0 0.0
    %1620 = vmatpush1.msra.mxu0 0.0
    %1621 = vmatprep.subr.mxu0 0.0
    %1622 = vmatpush1.msra.mxu0 0.0
    %1623 = vmatprep.subr.mxu0 0.0
    %1624 = vmatpush1.msra.mxu0 0.0
    %1625 = vmatprep.subr.mxu0 0.0
    %1626 = vmatpush1.msra.mxu0 0.0
    %1627 = vmatprep.subr.mxu0 0.0
    %1628 = vmatpush1.msra.mxu0 0.0
    %1629 = vmatprep.subr.mxu0 0.0
    %1630 = vmatpush1.msra.mxu0 0.0
    %1631 = vmatprep.subr.mxu0 0.0
    %1632 = vmatpush1.msra.mxu0 0.0
    %1633 = vmatprep.subr.mxu0 0.0
    %1634 = vmatpush1.msra.mxu0 0.0
    %1635 = vmatprep.mubr.f32.mxu0 0.0
    %1636 = vmatmul.mubr.f32.gmra.mrb[0].mxu0 %v106
    %v1637 = vpop.f32.mrb[0].mxu0
    %v1638 = vadd.f32 0.0, %v1637
    %v1639 = vpop.f32.mrb[0].mxu0
    %1640 = vmatprep.mubr.f32.mxu0 0.0
    %1641 = vmatmul.mubr.f32.gmra.mrb[0].mxu0 %v109
    %v1642 = vpop.f32.mrb[0].mxu0
    %v1643 = vadd.f32 0.0, %v1642
    %v1644 = vpop.f32.mrb[0].mxu0
    %1645 = vdwg.mxu0
    %v1647 = vsel %vm344, %v1478, 0
    %v1650 = vsel %vm344, %v1558, 0
    %1652 = vmatprep.subr.mxu0 0.0
    %1653 = vmatpush1.xpose.msra.mxu0 %v1650
    %1654 = vmatprep.subr.mxu0 0.0
    %1655 = vmatpush1.xpose.msra.mxu0 0.0
    %1656 = vmatprep.subr.mxu0 0.0
    %1657 = vmatpush1.xpose.msra.mxu0 0.0
    %1658 = vmatprep.subr.mxu0 0.0
    %1659 = vmatpush1.xpose.msra.mxu0 0.0
    %1660 = vmatprep.subr.mxu0 0.0
    %1661 = vmatpush1.xpose.msra.mxu0 0.0
    %1662 = vmatprep.subr.mxu0 0.0
    %1663 = vmatpush1.xpose.msra.mxu0 0.0
    %1664 = vmatprep.subr.mxu0 0.0
    %1665 = vmatpush1.xpose.msra.mxu0 0.0
    %1666 = vmatprep.subr.mxu0 0.0
    %1667 = vmatpush1.xpose.msra.mxu0 0.0
    %1668 = vmatprep.subr.mxu0 0.0
    %1669 = vmatpush1.xpose.msra.mxu0 0.0
    %1670 = vmatprep.subr.mxu0 0.0
    %1671 = vmatpush1.xpose.msra.mxu0 0.0
    %1672 = vmatprep.subr.mxu0 0.0
    %1673 = vmatpush1.xpose.msra.mxu0 0.0
    %1674 = vmatprep.subr.mxu0 0.0
    %1675 = vmatpush1.xpose.msra.mxu0 0.0
    %1676 = vmatprep.subr.mxu0 0.0
    %1677 = vmatpush1.xpose.msra.mxu0 0.0
    %1678 = vmatprep.subr.mxu0 0.0
    %1679 = vmatpush1.xpose.msra.mxu0 0.0
    %1680 = vmatprep.subr.mxu0 0.0
    %1681 = vmatpush1.xpose.msra.mxu0 0.0
    %1682 = vmatprep.subr.mxu0 0.0
    %1683 = vmatpush1.xpose.msra.mxu0 0.0
    %1684 = vmatprep.subr.mxu0 0.0
    %1685 = vmatpush1.xpose.msra.mxu0 0.0
    %1686 = vmatprep.subr.mxu0 0.0
    %1687 = vmatpush1.xpose.msra.mxu0 0.0
    %1688 = vmatprep.subr.mxu0 0.0
    %1689 = vmatpush1.xpose.msra.mxu0 0.0
    %1690 = vmatprep.subr.mxu0 0.0
    %1691 = vmatpush1.xpose.msra.mxu0 0.0
    %1692 = vmatprep.subr.mxu0 0.0
    %1693 = vmatpush1.xpose.msra.mxu0 0.0
    %1694 = vmatprep.subr.mxu0 0.0
    %1695 = vmatpush1.xpose.msra.mxu0 0.0
    %1696 = vmatprep.subr.mxu0 0.0
    %1697 = vmatpush1.xpose.msra.mxu0 0.0
    %1698 = vmatprep.subr.mxu0 0.0
    %1699 = vmatpush1.xpose.msra.mxu0 0.0
    %1700 = vmatprep.subr.mxu0 0.0
    %1701 = vmatpush1.xpose.msra.mxu0 0.0
    %1702 = vmatprep.subr.mxu0 0.0
    %1703 = vmatpush1.xpose.msra.mxu0 0.0
    %1704 = vmatprep.subr.mxu0 0.0
    %1705 = vmatpush1.xpose.msra.mxu0 0.0
    %1706 = vmatprep.subr.mxu0 0.0
    %1707 = vmatpush1.xpose.msra.mxu0 0.0
    %1708 = vmatprep.subr.mxu0 0.0
    %1709 = vmatpush1.xpose.msra.mxu0 0.0
    %1710 = vmatprep.subr.mxu0 0.0
    %1711 = vmatpush1.xpose.msra.mxu0 0.0
    %1712 = vmatprep.subr.mxu0 0.0
    %1713 = vmatpush1.xpose.msra.mxu0 0.0
    %1714 = vmatprep.subr.mxu0 0.0
    %1715 = vmatpush1.xpose.msra.mxu0 0.0
    %1716 = vmatprep.mubr.f32.mxu0 0.0
    %1717 = vmatmul.mubr.f32.gmra.mrb[0].mxu0 %v1647
    %v1718 = vpop.f32.mrb[0].mxu0
    %v1719 = vadd.f32 0.0, %v1718
    %v1720 = vpop.f32.mrb[0].mxu0
    %1721 = vdwg.mxu0
    %v1723 = vsel %vm344, %v1483, 0
    %v1726 = vsel %vm344, %v1563, 0
    %1728 = vmatprep.subr.mxu0 0.0
    %1729 = vmatpush1.xpose.msra.mxu0 %v1726
    %1730 = vmatprep.subr.mxu0 0.0
    %1731 = vmatpush1.xpose.msra.mxu0 0.0
    %1732 = vmatprep.subr.mxu0 0.0
    %1733 = vmatpush1.xpose.msra.mxu0 0.0
    %1734 = vmatprep.subr.mxu0 0.0
    %1735 = vmatpush1.xpose.msra.mxu0 0.0
    %1736 = vmatprep.subr.mxu0 0.0
    %1737 = vmatpush1.xpose.msra.mxu0 0.0
    %1738 = vmatprep.subr.mxu0 0.0
    %1739 = vmatpush1.xpose.msra.mxu0 0.0
    %1740 = vmatprep.subr.mxu0 0.0
    %1741 = vmatpush1.xpose.msra.mxu0 0.0
    %1742 = vmatprep.subr.mxu0 0.0
    %1743 = vmatpush1.xpose.msra.mxu0 0.0
    %1744 = vmatprep.subr.mxu0 0.0
    %1745 = vmatpush1.xpose.msra.mxu0 0.0
    %1746 = vmatprep.subr.mxu0 0.0
    %1747 = vmatpush1.xpose.msra.mxu0 0.0
    %1748 = vmatprep.subr.mxu0 0.0
    %1749 = vmatpush1.xpose.msra.mxu0 0.0
    %1750 = vmatprep.subr.mxu0 0.0
    %1751 = vmatpush1.xpose.msra.mxu0 0.0
    %1752 = vmatprep.subr.mxu0 0.0
    %1753 = vmatpush1.xpose.msra.mxu0 0.0
    %1754 = vmatprep.subr.mxu0 0.0
    %1755 = vmatpush1.xpose.msra.mxu0 0.0
    %1756 = vmatprep.subr.mxu0 0.0
    %1757 = vmatpush1.xpose.msra.mxu0 0.0
    %1758 = vmatprep.subr.mxu0 0.0
    %1759 = vmatpush1.xpose.msra.mxu0 0.0
    %1760 = vmatprep.subr.mxu0 0.0
    %1761 = vmatpush1.xpose.msra.mxu0 0.0
    %1762 = vmatprep.subr.mxu0 0.0
    %1763 = vmatpush1.xpose.msra.mxu0 0.0
    %1764 = vmatprep.subr.mxu0 0.0
    %1765 = vmatpush1.xpose.msra.mxu0 0.0
    %1766 = vmatprep.subr.mxu0 0.0
    %1767 = vmatpush1.xpose.msra.mxu0 0.0
    %1768 = vmatprep.subr.mxu0 0.0
    %1769 = vmatpush1.xpose.msra.mxu0 0.0
    %1770 = vmatprep.subr.mxu0 0.0
    %1771 = vmatpush1.xpose.msra.mxu0 0.0
    %1772 = vmatprep.subr.mxu0 0.0
    %1773 = vmatpush1.xpose.msra.mxu0 0.0
    %1774 = vmatprep.subr.mxu0 0.0
    %1775 = vmatpush1.xpose.msra.mxu0 0.0
    %1776 = vmatprep.subr.mxu0 0.0
    %1777 = vmatpush1.xpose.msra.mxu0 0.0
    %1778 = vmatprep.subr.mxu0 0.0
    %1779 = vmatpush1.xpose.msra.mxu0 0.0
    %1780 = vmatprep.subr.mxu0 0.0
    %1781 = vmatpush1.xpose.msra.mxu0 0.0
    %1782 = vmatprep.subr.mxu0 0.0
    %1783 = vmatpush1.xpose.msra.mxu0 0.0
    %1784 = vmatprep.subr.mxu0 0.0
    %1785 = vmatpush1.xpose.msra.mxu0 0.0
    %1786 = vmatprep.subr.mxu0 0.0
    %1787 = vmatpush1.xpose.msra.mxu0 0.0
    %1788 = vmatprep.subr.mxu0 0.0
    %1789 = vmatpush1.xpose.msra.mxu0 0.0
    %1790 = vmatprep.subr.mxu0 0.0
    %1791 = vmatpush1.xpose.msra.mxu0 0.0
    %1792 = vmatprep.mubr.f32.mxu0 0.0
    %1793 = vmatmul.mubr.f32.gmra.mrb[0].mxu0 %v1723
    %v1794 = vpop.f32.mrb[0].mxu0
    %v1795 = vadd.f32 0.0, %v1794
    %v1796 = vpop.f32.mrb[0].mxu0
    %1797 = vdwg.mxu0
    %v1798 = vmul.f32 %v1719, 0.4472136
    %v1799 = vmul.f32 %v1795, 0.4472136
    %v1800 = vsel %vm100, %v1798, -1e+30
    %v1801 = vsel %vm100, %v1799, -1e+30
    %v1802 = vsel %vm501, %v1800, -inf
    %1803 = vmax.xlane.f32.xlu0 %v1802
    %v1804 = vpop.xlane.xlu0 %1803
    %v1805 = vsel %vm501, %v1801, -inf
    %1806 = vmax.xlane.f32.xlu0 %v1805
    %v1807 = vpop.xlane.xlu0 %1806
    %v1808 = vsub.f32 %v1800, %v1804
    %v1809 = vsub.f32 %v1801, %v1807
    %v1810 = vmul.f32 %v1808, 1.442695
    %v1811 = vpow.pop %v1810
    %v1812 = vmul.f32 %v1809, 1.442695
    %v1813 = vpow.pop %v1812
    %v1814 = vsel %vm501, %v1811, 0.0
    %1815 = vadd.xlane.f32.xlu0 %v1814
    %v1816 = vpop.xlane.xlu0 %1815
    %v1817 = vsel %vm501, %v1813, 0.0
    %1818 = vadd.xlane.f32.xlu0 %v1817
    %v1819 = vpop.xlane.xlu0 %1818
    %v1820 = vrcp.pop %v1816
    %v1821 = vmul.f32 %v1811, %v1820
    %v1822 = vrcp.pop %v1819
    %v1823 = vmul.f32 %v1813, %v1822
    %v1825 = vsel %vm501, %v1821, 0
    %1827 = vmatprep.subr.mxu0 0.0
    %1828 = vmatpush1.msra.mxu0 %v1638
    %1829 = vmatprep.subr.mxu0 0.0
    %1830 = vmatpush1.msra.mxu0 0.0
    %1831 = vmatprep.subr.mxu0 0.0
    %1832 = vmatpush1.msra.mxu0 0.0
    %1833 = vmatprep.subr.mxu0 0.0
    %1834 = vmatpush1.msra.mxu0 0.0
    %1835 = vmatprep.subr.mxu0 0.0
    %1836 = vmatpush1.msra.mxu0 0.0
    %1837 = vmatprep.subr.mxu0 0.0
    %1838 = vmatpush1.msra.mxu0 0.0
    %1839 = vmatprep.subr.mxu0 0.0
    %1840 = vmatpush1.msra.mxu0 0.0
    %1841 = vmatprep.subr.mxu0 0.0
    %1842 = vmatpush1.msra.mxu0 0.0
    %1843 = vmatprep.subr.mxu0 0.0
    %1844 = vmatpush1.msra.mxu0 0.0
    %1845 = vmatprep.subr.mxu0 0.0
    %1846 = vmatpush1.msra.mxu0 0.0
    %1847 = vmatprep.subr.mxu0 0.0
    %1848 = vmatpush1.msra.mxu0 0.0
    %1849 = vmatprep.subr.mxu0 0.0
    %1850 = vmatpush1.msra.mxu0 0.0
    %1851 = vmatprep.subr.mxu0 0.0
    %1852 = vmatpush1.msra.mxu0 0.0
    %1853 = vmatprep.subr.mxu0 0.0
    %1854 = vmatpush1.msra.mxu0 0.0
    %1855 = vmatprep.subr.mxu0 0.0
    %1856 = vmatpush1.msra.mxu0 0.0
    %1857 = vmatprep.subr.mxu0 0.0
    %1858 = vmatpush1.msra.mxu0 0.0
    %1859 = vmatprep.subr.mxu0 0.0
    %1860 = vmatpush1.msra.mxu0 0.0
    %1861 = vmatprep.subr.mxu0 0.0
    %1862 = vmatpush1.msra.mxu0 0.0
    %1863 = vmatprep.subr.mxu0 0.0
    %1864 = vmatpush1.msra.mxu0 0.0
    %1865 = vmatprep.subr.mxu0 0.0
    %1866 = vmatpush1.msra.mxu0 0.0
    %1867 = vmatprep.subr.mxu0 0.0
    %1868 = vmatpush1.msra.mxu0 0.0
    %1869 = vmatprep.subr.mxu0 0.0
    %1870 = vmatpush1.msra.mxu0 0.0
    %1871 = vmatprep.subr.mxu0 0.0
    %1872 = vmatpush1.msra.mxu0 0.0
    %1873 = vmatprep.subr.mxu0 0.0
    %1874 = vmatpush1.msra.mxu0 0.0
    %1875 = vmatprep.subr.mxu0 0.0
    %1876 = vmatpush1.msra.mxu0 0.0
    %1877 = vmatprep.subr.mxu0 0.0
    %1878 = vmatpush1.msra.mxu0 0.0
    %1879 = vmatprep.subr.mxu0 0.0
    %1880 = vmatpush1.msra.mxu0 0.0
    %1881 = vmatprep.subr.mxu0 0.0
    %1882 = vmatpush1.msra.mxu0 0.0
    %1883 = vmatprep.subr.mxu0 0.0
    %1884 = vmatpush1.msra.mxu0 0.0
    %1885 = vmatprep.subr.mxu0 0.0
    %1886 = vmatpush1.msra.mxu0 0.0
    %1887 = vmatprep.subr.mxu0 0.0
    %1888 = vmatpush1.msra.mxu0 0.0
    %1889 = vmatprep.subr.mxu0 0.0
    %1890 = vmatpush1.msra.mxu0 0.0
    %1891 = vmatprep.mubr.f32.mxu0 0.0
    %1892 = vmatmul.mubr.f32.gmra.mrb[0].mxu0 %v1825
    %v1893 = vpop.f32.mrb[0].mxu0
    %v1894 = vadd.f32 0.0, %v1893
    %v1895 = vpop.f32.mrb[0].mxu0
    %1896 = vdwg.mxu0
    %v1898 = vsel %vm501, %v1823, 0
    %1900 = vmatprep.subr.mxu0 0.0
    %1901 = vmatpush1.msra.mxu0 %v1643
    %1902 = vmatprep.subr.mxu0 0.0
    %1903 = vmatpush1.msra.mxu0 0.0
    %1904 = vmatprep.subr.mxu0 0.0
    %1905 = vmatpush1.msra.mxu0 0.0
    %1906 = vmatprep.subr.mxu0 0.0
    %1907 = vmatpush1.msra.mxu0 0.0
    %1908 = vmatprep.subr.mxu0 0.0
    %1909 = vmatpush1.msra.mxu0 0.0
    %1910 = vmatprep.subr.mxu0 0.0
    %1911 = vmatpush1.msra.mxu0 0.0
    %1912 = vmatprep.subr.mxu0 0.0
    %1913 = vmatpush1.msra.mxu0 0.0
    %1914 = vmatprep.subr.mxu0 0.0
    %1915 = vmatpush1.msra.mxu0 0.0
    %1916 = vmatprep.subr.mxu0 0.0
    %1917 = vmatpush1.msra.mxu0 0.0
    %1918 = vmatprep.subr.mxu0 0.0
    %1919 = vmatpush1.msra.mxu0 0.0
    %1920 = vmatprep.subr.mxu0 0.0
    %1921 = vmatpush1.msra.mxu0 0.0
    %1922 = vmatprep.subr.mxu0 0.0
    %1923 = vmatpush1.msra.mxu0 0.0
    %1924 = vmatprep.subr.mxu0 0.0
    %1925 = vmatpush1.msra.mxu0 0.0
    %1926 = vmatprep.subr.mxu0 0.0
    %1927 = vmatpush1.msra.mxu0 0.0
    %1928 = vmatprep.subr.mxu0 0.0
    %1929 = vmatpush1.msra.mxu0 0.0
    %1930 = vmatprep.subr.mxu0 0.0
    %1931 = vmatpush1.msra.mxu0 0.0
    %1932 = vmatprep.subr.mxu0 0.0
    %1933 = vmatpush1.msra.mxu0 0.0
    %1934 = vmatprep.subr.mxu0 0.0
    %1935 = vmatpush1.msra.mxu0 0.0
    %1936 = vmatprep.subr.mxu0 0.0
    %1937 = vmatpush1.msra.mxu0 0.0
    %1938 = vmatprep.subr.mxu0 0.0
    %1939 = vmatpush1.msra.mxu0 0.0
    %1940 = vmatprep.subr.mxu0 0.0
    %1941 = vmatpush1.msra.mxu0 0.0
    %1942 = vmatprep.subr.mxu0 0.0
    %1943 = vmatpush1.msra.mxu0 0.0
    %1944 = vmatprep.subr.mxu0 0.0
    %1945 = vmatpush1.msra.mxu0 0.0
    %1946 = vmatprep.subr.mxu0 0.0
    %1947 = vmatpush1.msra.mxu0 0.0
    %1948 = vmatprep.subr.mxu0 0.0
    %1949 = vmatpush1.msra.mxu0 0.0
    %1950 = vmatprep.subr.mxu0 0.0
    %1951 = vmatpush1.msra.mxu0 0.0
    %1952 = vmatprep.subr.mxu0 0.0
    %1953 = vmatpush1.msra.mxu0 0.0
    %1954 = vmatprep.subr.mxu0 0.0
    %1955 = vmatpush1.msra.mxu0 0.0
    %1956 = vmatprep.subr.mxu0 0.0
    %1957 = vmatpush1.msra.mxu0 0.0
    %1958 = vmatprep.subr.mxu0 0.0
    %1959 = vmatpush1.msra.mxu0 0.0
    %1960 = vmatprep.subr.mxu0 0.0
    %1961 = vmatpush1.msra.mxu0 0.0
    %1962 = vmatprep.subr.mxu0 0.0
    %1963 = vmatpush1.msra.mxu0 0.0
    %1964 = vmatprep.mubr.f32.mxu0 0.0
    %1965 = vmatmul.mubr.f32.gmra.mrb[0].mxu0 %v1898
    %v1966 = vpop.f32.mrb[0].mxu0
    %v1967 = vadd.f32 0.0, %v1966
    %v1968 = vpop.f32.mrb[0].mxu0
    %1969 = vdwg.mxu0
    %s1970 = scalar_lea.vmem %s6, 16
    %v1971 = vld [vmem:[%s1970] sm:$0x1f]
    %v1973 = vsel %vm344, %v1894, 0
    %v1976 = vsel %vm344, %v1967, 0
    %v1979 = vsel %vm1243, %v1971, 0
    %1981 = vmatprep.subr.mxu0 0.0
    %1982 = vmatpush1.msra.mxu0 %v1979
    %1983 = vmatprep.subr.mxu0 0.0
    %1984 = vmatpush1.msra.mxu0 0.0
    %1985 = vmatprep.subr.mxu0 0.0
    %1986 = vmatpush1.msra.mxu0 0.0
    %1987 = vmatprep.subr.mxu0 0.0
    %1988 = vmatpush1.msra.mxu0 0.0
    %1989 = vmatprep.subr.mxu0 0.0
    %1990 = vmatpush1.msra.mxu0 0.0
    %1991 = vmatprep.subr.mxu0 0.0
    %1992 = vmatpush1.msra.mxu0 0.0
    %1993 = vmatprep.subr.mxu0 0.0
    %1994 = vmatpush1.msra.mxu0 0.0
    %1995 = vmatprep.subr.mxu0 0.0
    %1996 = vmatpush1.msra.mxu0 0.0
    %1997 = vmatprep.subr.mxu0 0.0
    %1998 = vmatpush1.msra.mxu0 0.0
    %1999 = vmatprep.subr.mxu0 0.0
    %2000 = vmatpush1.msra.mxu0 0.0
    %2001 = vmatprep.subr.mxu0 0.0
    %2002 = vmatpush1.msra.mxu0 0.0
    %2003 = vmatprep.subr.mxu0 0.0
    %2004 = vmatpush1.msra.mxu0 0.0
    %2005 = vmatprep.subr.mxu0 0.0
    %2006 = vmatpush1.msra.mxu0 0.0
    %2007 = vmatprep.subr.mxu0 0.0
    %2008 = vmatpush1.msra.mxu0 0.0
    %2009 = vmatprep.subr.mxu0 0.0
    %2010 = vmatpush1.msra.mxu0 0.0
    %2011 = vmatprep.subr.mxu0 0.0
    %2012 = vmatpush1.msra.mxu0 0.0
    %2013 = vmatprep.subr.mxu0 0.0
    %2014 = vmatpush1.msra.mxu0 0.0
    %2015 = vmatprep.subr.mxu0 0.0
    %2016 = vmatpush1.msra.mxu0 0.0
    %2017 = vmatprep.subr.mxu0 0.0
    %2018 = vmatpush1.msra.mxu0 0.0
    %2019 = vmatprep.subr.mxu0 0.0
    %2020 = vmatpush1.msra.mxu0 0.0
    %2021 = vmatprep.subr.mxu0 0.0
    %2022 = vmatpush1.msra.mxu0 0.0
    %2023 = vmatprep.subr.mxu0 0.0
    %2024 = vmatpush1.msra.mxu0 0.0
    %2025 = vmatprep.subr.mxu0 0.0
    %2026 = vmatpush1.msra.mxu0 0.0
    %2027 = vmatprep.subr.mxu0 0.0
    %2028 = vmatpush1.msra.mxu0 0.0
    %2029 = vmatprep.subr.mxu0 0.0
    %2030 = vmatpush1.msra.mxu0 0.0
    %2031 = vmatprep.subr.mxu0 0.0
    %2032 = vmatpush1.msra.mxu0 0.0
    %2033 = vmatprep.subr.mxu0 0.0
    %2034 = vmatpush1.msra.mxu0 0.0
    %2035 = vmatprep.subr.mxu0 0.0
    %2036 = vmatpush1.msra.mxu0 0.0
    %2037 = vmatprep.subr.mxu0 0.0
    %2038 = vmatpush1.msra.mxu0 0.0
    %2039 = vmatprep.subr.mxu0 0.0
    %2040 = vmatpush1.msra.mxu0 0.0
    %2041 = vmatprep.subr.mxu0 0.0
    %2042 = vmatpush1.msra.mxu0 0.0
    %2043 = vmatprep.subr.mxu0 0.0
    %2044 = vmatpush1.msra.mxu0 0.0
    %2045 = vmatprep.mubr.f32.mxu0 0.0
    %2046 = vmatmul.mubr.f32.gmra.mrb[0].mxu0 %v1973
    %v2047 = vpop.f32.mrb[0].mxu0
    %v2048 = vadd.f32 0.0, %v2047
    %v2049 = vpop.f32.mrb[0].mxu0
    %2050 = vmatprep.mubr.f32.mxu0 0.0
    %2051 = vmatmul.mubr.f32.gmra.mrb[0].mxu0 %v1976
    %v2052 = vpop.f32.mrb[0].mxu0
    %v2053 = vadd.f32 0.0, %v2052
    %v2054 = vpop.f32.mrb[0].mxu0
    %2055 = vdwg.mxu0
    %v2056 = vadd.f32 %v1398, %v2048
    %v2057 = vadd.f32 %v1403, %v2053
    %s2058 = scalar_lea.vmem %s3, 96
    %v2059 = vld [vmem:[%s2058] sm:$0xff]
    %v2060 = vld [vmem:[%s2058 + $0x8] sm:$0xff]
    %v2061 = vld [vmem:[%s2058 + $0x10] sm:$0xff]
    %v2062 = vld [vmem:[%s2058 + $0x18] sm:$0xff]
    %2063 = vmatprep.subr.mxu0 0.0
    %2064 = vmatpush1.msra.mxu0 %v2059
    %2065 = vmatprep.subr.mxu0 0.0
    %2066 = vmatpush1.msra.mxu0 %v2060
    %2067 = vmatprep.subr.mxu0 0.0
    %2068 = vmatpush1.msra.mxu0 %v2061
    %2069 = vmatprep.subr.mxu0 0.0
    %2070 = vmatpush1.msra.mxu0 %v2062
    %2071 = vmatprep.subr.mxu0 0.0
    %2072 = vmatpush1.msra.mxu0 0.0
    %2073 = vmatprep.subr.mxu0 0.0
    %2074 = vmatpush1.msra.mxu0 0.0
    %2075 = vmatprep.subr.mxu0 0.0
    %2076 = vmatpush1.msra.mxu0 0.0
    %2077 = vmatprep.subr.mxu0 0.0
    %2078 = vmatpush1.msra.mxu0 0.0
    %2079 = vmatprep.subr.mxu0 0.0
    %2080 = vmatpush1.msra.mxu0 0.0
    %2081 = vmatprep.subr.mxu0 0.0
    %2082 = vmatpush1.msra.mxu0 0.0
    %2083 = vmatprep.subr.mxu0 0.0
    %2084 = vmatpush1.msra.mxu0 0.0
    %2085 = vmatprep.subr.mxu0 0.0
    %2086 = vmatpush1.msra.mxu0 0.0
    %2087 = vmatprep.subr.mxu0 0.0
    %2088 = vmatpush1.msra.mxu0 0.0
    %2089 = vmatprep.subr.mxu0 0.0
    %2090 = vmatpush1.msra.mxu0 0.0
    %2091 = vmatprep.subr.mxu0 0.0
    %2092 = vmatpush1.msra.mxu0 0.0
    %2093 = vmatprep.subr.mxu0 0.0
    %2094 = vmatpush1.msra.mxu0 0.0
    %2095 = vmatprep.subr.mxu0 0.0
    %2096 = vmatpush1.msra.mxu0 0.0
    %2097 = vmatprep.subr.mxu0 0.0
    %2098 = vmatpush1.msra.mxu0 0.0
    %2099 = vmatprep.subr.mxu0 0.0
    %2100 = vmatpush1.msra.mxu0 0.0
    %2101 = vmatprep.subr.mxu0 0.0
    %2102 = vmatpush1.msra.mxu0 0.0
    %2103 = vmatprep.subr.mxu0 0.0
    %2104 = vmatpush1.msra.mxu0 0.0
    %2105 = vmatprep.subr.mxu0 0.0
    %2106 = vmatpush1.msra.mxu0 0.0
    %2107 = vmatprep.subr.mxu0 0.0
    %2108 = vmatpush1.msra.mxu0 0.0
    %2109 = vmatprep.subr.mxu0 0.0
    %2110 = vmatpush1.msra.mxu0 0.0
    %2111 = vmatprep.subr.mxu0 0.0
    %2112 = vmatpush1.msra.mxu0 0.0
    %2113 = vmatprep.subr.mxu0 0.0
    %2114 = vmatpush1.msra.mxu0 0.0
    %2115 = vmatprep.subr.mxu0 0.0
    %2116 = vmatpush1.msra.mxu0 0.0
    %2117 = vmatprep.subr.mxu0 0.0
    %2118 = vmatpush1.msra.mxu0 0.0
    %2119 = vmatprep.subr.mxu0 0.0
    %2120 = vmatpush1.msra.mxu0 0.0
    %2121 = vmatprep.subr.mxu0 0.0
    %2122 = vmatpush1.msra.mxu0 0.0
    %2123 = vmatprep.subr.mxu0 0.0
    %2124 = vmatpush1.msra.mxu0 0.0
    %2125 = vmatprep.subr.mxu0 0.0
    %2126 = vmatpush1.msra.mxu0 0.0
    %2127 = vmatprep.mubr.f32.mxu0 0.0
    %2128 = vmatmul.mubr.f32.gmra.mrb[0].mxu0 %v106
    %v2129 = vpop.f32.mrb[0].mxu0
    %v2130 = vadd.f32 0.0, %v2129
    %v2131 = vpop.f32.mrb[0].mxu0
    %2132 = vmatprep.mubr.f32.mxu0 0.0
    %2133 = vmatmul.mubr.f32.gmra.mrb[0].mxu0 %v109
    %v2134 = vpop.f32.mrb[0].mxu0
    %v2135 = vadd.f32 0.0, %v2134
    %v2136 = vpop.f32.mrb[0].mxu0
    %2137 = vdwg.mxu0
    %s2138 = scalar_lea.vmem %s4, 96
    %v2139 = vld [vmem:[%s2138] sm:$0xff]
    %v2140 = vld [vmem:[%s2138 + $0x8] sm:$0xff]
    %v2141 = vld [vmem:[%s2138 + $0x10] sm:$0xff]
    %v2142 = vld [vmem:[%s2138 + $0x18] sm:$0xff]
    %2143 = vmatprep.subr.mxu0 0.0
    %2144 = vmatpush1.msra.mxu0 %v2139
    %2145 = vmatprep.subr.mxu0 0.0
    %2146 = vmatpush1.msra.mxu0 %v2140
    %2147 = vmatprep.subr.mxu0 0.0
    %2148 = vmatpush1.msra.mxu0 %v2141
    %2149 = vmatprep.subr.mxu0 0.0
    %2150 = vmatpush1.msra.mxu0 %v2142
    %2151 = vmatprep.subr.mxu0 0.0
    %2152 = vmatpush1.msra.mxu0 0.0
    %2153 = vmatprep.subr.mxu0 0.0
    %2154 = vmatpush1.msra.mxu0 0.0
    %2155 = vmatprep.subr.mxu0 0.0
    %2156 = vmatpush1.msra.mxu0 0.0
    %2157 = vmatprep.subr.mxu0 0.0
    %2158 = vmatpush1.msra.mxu0 0.0
    %2159 = vmatprep.subr.mxu0 0.0
    %2160 = vmatpush1.msra.mxu0 0.0
    %2161 = vmatprep.subr.mxu0 0.0
    %2162 = vmatpush1.msra.mxu0 0.0
    %2163 = vmatprep.subr.mxu0 0.0
    %2164 = vmatpush1.msra.mxu0 0.0
    %2165 = vmatprep.subr.mxu0 0.0
    %2166 = vmatpush1.msra.mxu0 0.0
    %2167 = vmatprep.subr.mxu0 0.0
    %2168 = vmatpush1.msra.mxu0 0.0
    %2169 = vmatprep.subr.mxu0 0.0
    %2170 = vmatpush1.msra.mxu0 0.0
    %2171 = vmatprep.subr.mxu0 0.0
    %2172 = vmatpush1.msra.mxu0 0.0
    %2173 = vmatprep.subr.mxu0 0.0
    %2174 = vmatpush1.msra.mxu0 0.0
    %2175 = vmatprep.subr.mxu0 0.0
    %2176 = vmatpush1.msra.mxu0 0.0
    %2177 = vmatprep.subr.mxu0 0.0
    %2178 = vmatpush1.msra.mxu0 0.0
    %2179 = vmatprep.subr.mxu0 0.0
    %2180 = vmatpush1.msra.mxu0 0.0
    %2181 = vmatprep.subr.mxu0 0.0
    %2182 = vmatpush1.msra.mxu0 0.0
    %2183 = vmatprep.subr.mxu0 0.0
    %2184 = vmatpush1.msra.mxu0 0.0
    %2185 = vmatprep.subr.mxu0 0.0
    %2186 = vmatpush1.msra.mxu0 0.0
    %2187 = vmatprep.subr.mxu0 0.0
    %2188 = vmatpush1.msra.mxu0 0.0
    %2189 = vmatprep.subr.mxu0 0.0
    %2190 = vmatpush1.msra.mxu0 0.0
    %2191 = vmatprep.subr.mxu0 0.0
    %2192 = vmatpush1.msra.mxu0 0.0
    %2193 = vmatprep.subr.mxu0 0.0
    %2194 = vmatpush1.msra.mxu0 0.0
    %2195 = vmatprep.subr.mxu0 0.0
    %2196 = vmatpush1.msra.mxu0 0.0
    %2197 = vmatprep.subr.mxu0 0.0
    %2198 = vmatpush1.msra.mxu0 0.0
    %2199 = vmatprep.subr.mxu0 0.0
    %2200 = vmatpush1.msra.mxu0 0.0
    %2201 = vmatprep.subr.mxu0 0.0
    %2202 = vmatpush1.msra.mxu0 0.0
    %2203 = vmatprep.subr.mxu0 0.0
    %2204 = vmatpush1.msra.mxu0 0.0
    %2205 = vmatprep.subr.mxu0 0.0
    %2206 = vmatpush1.msra.mxu0 0.0
    %2207 = vmatprep.mubr.f32.mxu0 0.0
    %2208 = vmatmul.mubr.f32.gmra.mrb[0].mxu0 %v106
    %v2209 = vpop.f32.mrb[0].mxu0
    %v2210 = vadd.f32 0.0, %v2209
    %v2211 = vpop.f32.mrb[0].mxu0
    %2212 = vmatprep.mubr.f32.mxu0 0.0
    %2213 = vmatmul.mubr.f32.gmra.mrb[0].mxu0 %v109
    %v2214 = vpop.f32.mrb[0].mxu0
    %v2215 = vadd.f32 0.0, %v2214
    %v2216 = vpop.f32.mrb[0].mxu0
    %2217 = vdwg.mxu0
    %s2218 = scalar_lea.vmem %s5, 96
    %v2219 = vld [vmem:[%s2218] sm:$0xff]
    %v2220 = vld [vmem:[%s2218 + $0x8] sm:$0xff]
    %v2221 = vld [vmem:[%s2218 + $0x10] sm:$0xff]
    %v2222 = vld [vmem:[%s2218 + $0x18] sm:$0xff]
    %2223 = vmatprep.subr.mxu0 0.0
    %2224 = vmatpush1.msra.mxu0 %v2219
    %2225 = vmatprep.subr.mxu0 0.0
    %2226 = vmatpush1.msra.mxu0 %v2220
    %2227 = vmatprep.subr.mxu0 0.0
    %2228 = vmatpush1.msra.mxu0 %v2221
    %2229 = vmatprep.subr.mxu0 0.0
    %2230 = vmatpush1.msra.mxu0 %v2222
    %2231 = vmatprep.subr.mxu0 0.0
    %2232 = vmatpush1.msra.mxu0 0.0
    %2233 = vmatprep.subr.mxu0 0.0
    %2234 = vmatpush1.msra.mxu0 0.0
    %2235 = vmatprep.subr.mxu0 0.0
    %2236 = vmatpush1.msra.mxu0 0.0
    %2237 = vmatprep.subr.mxu0 0.0
    %2238 = vmatpush1.msra.mxu0 0.0
    %2239 = vmatprep.subr.mxu0 0.0
    %2240 = vmatpush1.msra.mxu0 0.0
    %2241 = vmatprep.subr.mxu0 0.0
    %2242 = vmatpush1.msra.mxu0 0.0
    %2243 = vmatprep.subr.mxu0 0.0
    %2244 = vmatpush1.msra.mxu0 0.0
    %2245 = vmatprep.subr.mxu0 0.0
    %2246 = vmatpush1.msra.mxu0 0.0
    %2247 = vmatprep.subr.mxu0 0.0
    %2248 = vmatpush1.msra.mxu0 0.0
    %2249 = vmatprep.subr.mxu0 0.0
    %2250 = vmatpush1.msra.mxu0 0.0
    %2251 = vmatprep.subr.mxu0 0.0
    %2252 = vmatpush1.msra.mxu0 0.0
    %2253 = vmatprep.subr.mxu0 0.0
    %2254 = vmatpush1.msra.mxu0 0.0
    %2255 = vmatprep.subr.mxu0 0.0
    %2256 = vmatpush1.msra.mxu0 0.0
    %2257 = vmatprep.subr.mxu0 0.0
    %2258 = vmatpush1.msra.mxu0 0.0
    %2259 = vmatprep.subr.mxu0 0.0
    %2260 = vmatpush1.msra.mxu0 0.0
    %2261 = vmatprep.subr.mxu0 0.0
    %2262 = vmatpush1.msra.mxu0 0.0
    %2263 = vmatprep.subr.mxu0 0.0
    %2264 = vmatpush1.msra.mxu0 0.0
    %2265 = vmatprep.subr.mxu0 0.0
    %2266 = vmatpush1.msra.mxu0 0.0
    %2267 = vmatprep.subr.mxu0 0.0
    %2268 = vmatpush1.msra.mxu0 0.0
    %2269 = vmatprep.subr.mxu0 0.0
    %2270 = vmatpush1.msra.mxu0 0.0
    %2271 = vmatprep.subr.mxu0 0.0
    %2272 = vmatpush1.msra.mxu0 0.0
    %2273 = vmatprep.subr.mxu0 0.0
    %2274 = vmatpush1.msra.mxu0 0.0
    %2275 = vmatprep.subr.mxu0 0.0
    %2276 = vmatpush1.msra.mxu0 0.0
    %2277 = vmatprep.subr.mxu0 0.0
    %2278 = vmatpush1.msra.mxu0 0.0
    %2279 = vmatprep.subr.mxu0 0.0
    %2280 = vmatpush1.msra.mxu0 0.0
    %2281 = vmatprep.subr.mxu0 0.0
    %2282 = vmatpush1.msra.mxu0 0.0
    %2283 = vmatprep.subr.mxu0 0.0
    %2284 = vmatpush1.msra.mxu0 0.0
    %2285 = vmatprep.subr.mxu0 0.0
    %2286 = vmatpush1.msra.mxu0 0.0
    %2287 = vmatprep.mubr.f32.mxu0 0.0
    %2288 = vmatmul.mubr.f32.gmra.mrb[0].mxu0 %v106
    %v2289 = vpop.f32.mrb[0].mxu0
    %v2290 = vadd.f32 0.0, %v2289
    %v2291 = vpop.f32.mrb[0].mxu0
    %2292 = vmatprep.mubr.f32.mxu0 0.0
    %2293 = vmatmul.mubr.f32.gmra.mrb[0].mxu0 %v109
    %v2294 = vpop.f32.mrb[0].mxu0
    %v2295 = vadd.f32 0.0, %v2294
    %v2296 = vpop.f32.mrb[0].mxu0
    %2297 = vdwg.mxu0
    %v2299 = vsel %vm344, %v2130, 0
    %v2302 = vsel %vm344, %v2210, 0
    %2304 = vmatprep.subr.mxu0 0.0
    %2305 = vmatpush1.xpose.msra.mxu0 %v2302
    %2306 = vmatprep.subr.mxu0 0.0
    %2307 = vmatpush1.xpose.msra.mxu0 0.0
    %2308 = vmatprep.subr.mxu0 0.0
    %2309 = vmatpush1.xpose.msra.mxu0 0.0
    %2310 = vmatprep.subr.mxu0 0.0
    %2311 = vmatpush1.xpose.msra.mxu0 0.0
    %2312 = vmatprep.subr.mxu0 0.0
    %2313 = vmatpush1.xpose.msra.mxu0 0.0
    %2314 = vmatprep.subr.mxu0 0.0
    %2315 = vmatpush1.xpose.msra.mxu0 0.0
    %2316 = vmatprep.subr.mxu0 0.0
    %2317 = vmatpush1.xpose.msra.mxu0 0.0
    %2318 = vmatprep.subr.mxu0 0.0
    %2319 = vmatpush1.xpose.msra.mxu0 0.0
    %2320 = vmatprep.subr.mxu0 0.0
    %2321 = vmatpush1.xpose.msra.mxu0 0.0
    %2322 = vmatprep.subr.mxu0 0.0
    %2323 = vmatpush1.xpose.msra.mxu0 0.0
    %2324 = vmatprep.subr.mxu0 0.0
    %2325 = vmatpush1.xpose.msra.mxu0 0.0
    %2326 = vmatprep.subr.mxu0 0.0
    %2327 = vmatpush1.xpose.msra.mxu0 0.0
    %2328 = vmatprep.subr.mxu0 0.0
    %2329 = vmatpush1.xpose.msra.mxu0 0.0
    %2330 = vmatprep.subr.mxu0 0.0
    %2331 = vmatpush1.xpose.msra.mxu0 0.0
    %2332 = vmatprep.subr.mxu0 0.0
    %2333 = vmatpush1.xpose.msra.mxu0 0.0
    %2334 = vmatprep.subr.mxu0 0.0
    %2335 = vmatpush1.xpose.msra.mxu0 0.0
    %2336 = vmatprep.subr.mxu0 0.0
    %2337 = vmatpush1.xpose.msra.mxu0 0.0
    %2338 = vmatprep.subr.mxu0 0.0
    %2339 = vmatpush1.xpose.msra.mxu0 0.0
    %2340 = vmatprep.subr.mxu0 0.0
    %2341 = vmatpush1.xpose.msra.mxu0 0.0
    %2342 = vmatprep.subr.mxu0 0.0
    %2343 = vmatpush1.xpose.msra.mxu0 0.0
    %2344 = vmatprep.subr.mxu0 0.0
    %2345 = vmatpush1.xpose.msra.mxu0 0.0
    %2346 = vmatprep.subr.mxu0 0.0
    %2347 = vmatpush1.xpose.msra.mxu0 0.0
    %2348 = vmatprep.subr.mxu0 0.0
    %2349 = vmatpush1.xpose.msra.mxu0 0.0
    %2350 = vmatprep.subr.mxu0 0.0
    %2351 = vmatpush1.xpose.msra.mxu0 0.0
    %2352 = vmatprep.subr.mxu0 0.0
    %2353 = vmatpush1.xpose.msra.mxu0 0.0
    %2354 = vmatprep.subr.mxu0 0.0
    %2355 = vmatpush1.xpose.msra.mxu0 0.0
    %2356 = vmatprep.subr.mxu0 0.0
    %2357 = vmatpush1.xpose.msra.mxu0 0.0
    %2358 = vmatprep.subr.mxu0 0.0
    %2359 = vmatpush1.xpose.msra.mxu0 0.0
    %2360 = vmatprep.subr.mxu0 0.0
    %2361 = vmatpush1.xpose.msra.mxu0 0.0
    %2362 = vmatprep.subr.mxu0 0.0
    %2363 = vmatpush1.xpose.msra.mxu0 0.0
    %2364 = vmatprep.subr.mxu0 0.0
    %2365 = vmatpush1.xpose.msra.mxu0 0.0
    %2366 = vmatprep.subr.mxu0 0.0
    %2367 = vmatpush1.xpose.msra.mxu0 0.0
    %2368 = vmatprep.mubr.f32.mxu0 0.0
    %2369 = vmatmul.mubr.f32.gmra.mrb[0].mxu0 %v2299
    %v2370 = vpop.f32.mrb[0].mxu0
    %v2371 = vadd.f32 0.0, %v2370
    %v2372 = vpop.f32.mrb[0].mxu0
    %2373 = vdwg.mxu0
    %v2375 = vsel %vm344, %v2135, 0
    %v2378 = vsel %vm344, %v2215, 0
    %2380 = vmatprep.subr.mxu0 0.0
    %2381 = vmatpush1.xpose.msra.mxu0 %v2378
    %2382 = vmatprep.subr.mxu0 0.0
    %2383 = vmatpush1.xpose.msra.mxu0 0.0
    %2384 = vmatprep.subr.mxu0 0.0
    %2385 = vmatpush1.xpose.msra.mxu0 0.0
    %2386 = vmatprep.subr.mxu0 0.0
    %2387 = vmatpush1.xpose.msra.mxu0 0.0
    %2388 = vmatprep.subr.mxu0 0.0
    %2389 = vmatpush1.xpose.msra.mxu0 0.0
    %2390 = vmatprep.subr.mxu0 0.0
    %2391 = vmatpush1.xpose.msra.mxu0 0.0
    %2392 = vmatprep.subr.mxu0 0.0
    %2393 = vmatpush1.xpose.msra.mxu0 0.0
    %2394 = vmatprep.subr.mxu0 0.0
    %2395 = vmatpush1.xpose.msra.mxu0 0.0
    %2396 = vmatprep.subr.mxu0 0.0
    %2397 = vmatpush1.xpose.msra.mxu0 0.0
    %2398 = vmatprep.subr.mxu0 0.0
    %2399 = vmatpush1.xpose.msra.mxu0 0.0
    %2400 = vmatprep.subr.mxu0 0.0
    %2401 = vmatpush1.xpose.msra.mxu0 0.0
    %2402 = vmatprep.subr.mxu0 0.0
    %2403 = vmatpush1.xpose.msra.mxu0 0.0
    %2404 = vmatprep.subr.mxu0 0.0
    %2405 = vmatpush1.xpose.msra.mxu0 0.0
    %2406 = vmatprep.subr.mxu0 0.0
    %2407 = vmatpush1.xpose.msra.mxu0 0.0
    %2408 = vmatprep.subr.mxu0 0.0
    %2409 = vmatpush1.xpose.msra.mxu0 0.0
    %2410 = vmatprep.subr.mxu0 0.0
    %2411 = vmatpush1.xpose.msra.mxu0 0.0
    %2412 = vmatprep.subr.mxu0 0.0
    %2413 = vmatpush1.xpose.msra.mxu0 0.0
    %2414 = vmatprep.subr.mxu0 0.0
    %2415 = vmatpush1.xpose.msra.mxu0 0.0
    %2416 = vmatprep.subr.mxu0 0.0
    %2417 = vmatpush1.xpose.msra.mxu0 0.0
    %2418 = vmatprep.subr.mxu0 0.0
    %2419 = vmatpush1.xpose.msra.mxu0 0.0
    %2420 = vmatprep.subr.mxu0 0.0
    %2421 = vmatpush1.xpose.msra.mxu0 0.0
    %2422 = vmatprep.subr.mxu0 0.0
    %2423 = vmatpush1.xpose.msra.mxu0 0.0
    %2424 = vmatprep.subr.mxu0 0.0
    %2425 = vmatpush1.xpose.msra.mxu0 0.0
    %2426 = vmatprep.subr.mxu0 0.0
    %2427 = vmatpush1.xpose.msra.mxu0 0.0
    %2428 = vmatprep.subr.mxu0 0.0
    %2429 = vmatpush1.xpose.msra.mxu0 0.0
    %2430 = vmatprep.subr.mxu0 0.0
    %2431 = vmatpush1.xpose.msra.mxu0 0.0
    %2432 = vmatprep.subr.mxu0 0.0
    %2433 = vmatpush1.xpose.msra.mxu0 0.0
    %2434 = vmatprep.subr.mxu0 0.0
    %2435 = vmatpush1.xpose.msra.mxu0 0.0
    %2436 = vmatprep.subr.mxu0 0.0
    %2437 = vmatpush1.xpose.msra.mxu0 0.0
    %2438 = vmatprep.subr.mxu0 0.0
    %2439 = vmatpush1.xpose.msra.mxu0 0.0
    %2440 = vmatprep.subr.mxu0 0.0
    %2441 = vmatpush1.xpose.msra.mxu0 0.0
    %2442 = vmatprep.subr.mxu0 0.0
    %2443 = vmatpush1.xpose.msra.mxu0 0.0
    %2444 = vmatprep.mubr.f32.mxu0 0.0
    %2445 = vmatmul.mubr.f32.gmra.mrb[0].mxu0 %v2375
    %v2446 = vpop.f32.mrb[0].mxu0
    %v2447 = vadd.f32 0.0, %v2446
    %v2448 = vpop.f32.mrb[0].mxu0
    %2449 = vdwg.mxu0
    %v2450 = vmul.f32 %v2371, 0.4472136
    %v2451 = vmul.f32 %v2447, 0.4472136
    %v2452 = vsel %vm100, %v2450, -1e+30
    %v2453 = vsel %vm100, %v2451, -1e+30
    %v2454 = vsel %vm501, %v2452, -inf
    %2455 = vmax.xlane.f32.xlu0 %v2454
    %v2456 = vpop.xlane.xlu0 %2455
    %v2457 = vsel %vm501, %v2453, -inf
    %2458 = vmax.xlane.f32.xlu0 %v2457
    %v2459 = vpop.xlane.xlu0 %2458
    %v2460 = vsub.f32 %v2452, %v2456
    %v2461 = vsub.f32 %v2453, %v2459
    %v2462 = vmul.f32 %v2460, 1.442695
    %v2463 = vpow.pop %v2462
    %v2464 = vmul.f32 %v2461, 1.442695
    %v2465 = vpow.pop %v2464
    %v2466 = vsel %vm501, %v2463, 0.0
    %2467 = vadd.xlane.f32.xlu0 %v2466
    %v2468 = vpop.xlane.xlu0 %2467
    %v2469 = vsel %vm501, %v2465, 0.0
    %2470 = vadd.xlane.f32.xlu0 %v2469
    %v2471 = vpop.xlane.xlu0 %2470
    %v2472 = vrcp.pop %v2468
    %v2473 = vmul.f32 %v2463, %v2472
    %v2474 = vrcp.pop %v2471
    %v2475 = vmul.f32 %v2465, %v2474
    %v2477 = vsel %vm501, %v2473, 0
    %2479 = vmatprep.subr.mxu0 0.0
    %2480 = vmatpush1.msra.mxu0 %v2290
    %2481 = vmatprep.subr.mxu0 0.0
    %2482 = vmatpush1.msra.mxu0 0.0
    %2483 = vmatprep.subr.mxu0 0.0
    %2484 = vmatpush1.msra.mxu0 0.0
    %2485 = vmatprep.subr.mxu0 0.0
    %2486 = vmatpush1.msra.mxu0 0.0
    %2487 = vmatprep.subr.mxu0 0.0
    %2488 = vmatpush1.msra.mxu0 0.0
    %2489 = vmatprep.subr.mxu0 0.0
    %2490 = vmatpush1.msra.mxu0 0.0
    %2491 = vmatprep.subr.mxu0 0.0
    %2492 = vmatpush1.msra.mxu0 0.0
    %2493 = vmatprep.subr.mxu0 0.0
    %2494 = vmatpush1.msra.mxu0 0.0
    %2495 = vmatprep.subr.mxu0 0.0
    %2496 = vmatpush1.msra.mxu0 0.0
    %2497 = vmatprep.subr.mxu0 0.0
    %2498 = vmatpush1.msra.mxu0 0.0
    %2499 = vmatprep.subr.mxu0 0.0
    %2500 = vmatpush1.msra.mxu0 0.0
    %2501 = vmatprep.subr.mxu0 0.0
    %2502 = vmatpush1.msra.mxu0 0.0
    %2503 = vmatprep.subr.mxu0 0.0
    %2504 = vmatpush1.msra.mxu0 0.0
    %2505 = vmatprep.subr.mxu0 0.0
    %2506 = vmatpush1.msra.mxu0 0.0
    %2507 = vmatprep.subr.mxu0 0.0
    %2508 = vmatpush1.msra.mxu0 0.0
    %2509 = vmatprep.subr.mxu0 0.0
    %2510 = vmatpush1.msra.mxu0 0.0
    %2511 = vmatprep.subr.mxu0 0.0
    %2512 = vmatpush1.msra.mxu0 0.0
    %2513 = vmatprep.subr.mxu0 0.0
    %2514 = vmatpush1.msra.mxu0 0.0
    %2515 = vmatprep.subr.mxu0 0.0
    %2516 = vmatpush1.msra.mxu0 0.0
    %2517 = vmatprep.subr.mxu0 0.0
    %2518 = vmatpush1.msra.mxu0 0.0
    %2519 = vmatprep.subr.mxu0 0.0
    %2520 = vmatpush1.msra.mxu0 0.0
    %2521 = vmatprep.subr.mxu0 0.0
    %2522 = vmatpush1.msra.mxu0 0.0
    %2523 = vmatprep.subr.mxu0 0.0
    %2524 = vmatpush1.msra.mxu0 0.0
    %2525 = vmatprep.subr.mxu0 0.0
    %2526 = vmatpush1.msra.mxu0 0.0
    %2527 = vmatprep.subr.mxu0 0.0
    %2528 = vmatpush1.msra.mxu0 0.0
    %2529 = vmatprep.subr.mxu0 0.0
    %2530 = vmatpush1.msra.mxu0 0.0
    %2531 = vmatprep.subr.mxu0 0.0
    %2532 = vmatpush1.msra.mxu0 0.0
    %2533 = vmatprep.subr.mxu0 0.0
    %2534 = vmatpush1.msra.mxu0 0.0
    %2535 = vmatprep.subr.mxu0 0.0
    %2536 = vmatpush1.msra.mxu0 0.0
    %2537 = vmatprep.subr.mxu0 0.0
    %2538 = vmatpush1.msra.mxu0 0.0
    %2539 = vmatprep.subr.mxu0 0.0
    %2540 = vmatpush1.msra.mxu0 0.0
    %2541 = vmatprep.subr.mxu0 0.0
    %2542 = vmatpush1.msra.mxu0 0.0
    %2543 = vmatprep.mubr.f32.mxu0 0.0
    %2544 = vmatmul.mubr.f32.gmra.mrb[0].mxu0 %v2477
    %v2545 = vpop.f32.mrb[0].mxu0
    %v2546 = vadd.f32 0.0, %v2545
    %v2547 = vpop.f32.mrb[0].mxu0
    %2548 = vdwg.mxu0
    %v2550 = vsel %vm501, %v2475, 0
    %2552 = vmatprep.subr.mxu0 0.0
    %2553 = vmatpush1.msra.mxu0 %v2295
    %2554 = vmatprep.subr.mxu0 0.0
    %2555 = vmatpush1.msra.mxu0 0.0
    %2556 = vmatprep.subr.mxu0 0.0
    %2557 = vmatpush1.msra.mxu0 0.0
    %2558 = vmatprep.subr.mxu0 0.0
    %2559 = vmatpush1.msra.mxu0 0.0
    %2560 = vmatprep.subr.mxu0 0.0
    %2561 = vmatpush1.msra.mxu0 0.0
    %2562 = vmatprep.subr.mxu0 0.0
    %2563 = vmatpush1.msra.mxu0 0.0
    %2564 = vmatprep.subr.mxu0 0.0
    %2565 = vmatpush1.msra.mxu0 0.0
    %2566 = vmatprep.subr.mxu0 0.0
    %2567 = vmatpush1.msra.mxu0 0.0
    %2568 = vmatprep.subr.mxu0 0.0
    %2569 = vmatpush1.msra.mxu0 0.0
    %2570 = vmatprep.subr.mxu0 0.0
    %2571 = vmatpush1.msra.mxu0 0.0
    %2572 = vmatprep.subr.mxu0 0.0
    %2573 = vmatpush1.msra.mxu0 0.0
    %2574 = vmatprep.subr.mxu0 0.0
    %2575 = vmatpush1.msra.mxu0 0.0
    %2576 = vmatprep.subr.mxu0 0.0
    %2577 = vmatpush1.msra.mxu0 0.0
    %2578 = vmatprep.subr.mxu0 0.0
    %2579 = vmatpush1.msra.mxu0 0.0
    %2580 = vmatprep.subr.mxu0 0.0
    %2581 = vmatpush1.msra.mxu0 0.0
    %2582 = vmatprep.subr.mxu0 0.0
    %2583 = vmatpush1.msra.mxu0 0.0
    %2584 = vmatprep.subr.mxu0 0.0
    %2585 = vmatpush1.msra.mxu0 0.0
    %2586 = vmatprep.subr.mxu0 0.0
    %2587 = vmatpush1.msra.mxu0 0.0
    %2588 = vmatprep.subr.mxu0 0.0
    %2589 = vmatpush1.msra.mxu0 0.0
    %2590 = vmatprep.subr.mxu0 0.0
    %2591 = vmatpush1.msra.mxu0 0.0
    %2592 = vmatprep.subr.mxu0 0.0
    %2593 = vmatpush1.msra.mxu0 0.0
    %2594 = vmatprep.subr.mxu0 0.0
    %2595 = vmatpush1.msra.mxu0 0.0
    %2596 = vmatprep.subr.mxu0 0.0
    %2597 = vmatpush1.msra.mxu0 0.0
    %2598 = vmatprep.subr.mxu0 0.0
    %2599 = vmatpush1.msra.mxu0 0.0
    %2600 = vmatprep.subr.mxu0 0.0
    %2601 = vmatpush1.msra.mxu0 0.0
    %2602 = vmatprep.subr.mxu0 0.0
    %2603 = vmatpush1.msra.mxu0 0.0
    %2604 = vmatprep.subr.mxu0 0.0
    %2605 = vmatpush1.msra.mxu0 0.0
    %2606 = vmatprep.subr.mxu0 0.0
    %2607 = vmatpush1.msra.mxu0 0.0
    %2608 = vmatprep.subr.mxu0 0.0
    %2609 = vmatpush1.msra.mxu0 0.0
    %2610 = vmatprep.subr.mxu0 0.0
    %2611 = vmatpush1.msra.mxu0 0.0
    %2612 = vmatprep.subr.mxu0 0.0
    %2613 = vmatpush1.msra.mxu0 0.0
    %2614 = vmatprep.subr.mxu0 0.0
    %2615 = vmatpush1.msra.mxu0 0.0
    %2616 = vmatprep.mubr.f32.mxu0 0.0
    %2617 = vmatmul.mubr.f32.gmra.mrb[0].mxu0 %v2550
    %v2618 = vpop.f32.mrb[0].mxu0
    %v2619 = vadd.f32 0.0, %v2618
    %v2620 = vpop.f32.mrb[0].mxu0
    %2621 = vdwg.mxu0
    %s2622 = scalar_lea.vmem %s6, 24
    %v2623 = vld [vmem:[%s2622] sm:$0x1f]
    %v2625 = vsel %vm344, %v2546, 0
    %v2628 = vsel %vm344, %v2619, 0
    %v2631 = vsel %vm1243, %v2623, 0
    %2633 = vmatprep.subr.mxu0 0.0
    %2634 = vmatpush1.msra.mxu0 %v2631
    %2635 = vmatprep.subr.mxu0 0.0
    %2636 = vmatpush1.msra.mxu0 0.0
    %2637 = vmatprep.subr.mxu0 0.0
    %2638 = vmatpush1.msra.mxu0 0.0
    %2639 = vmatprep.subr.mxu0 0.0
    %2640 = vmatpush1.msra.mxu0 0.0
    %2641 = vmatprep.subr.mxu0 0.0
    %2642 = vmatpush1.msra.mxu0 0.0
    %2643 = vmatprep.subr.mxu0 0.0
    %2644 = vmatpush1.msra.mxu0 0.0
    %2645 = vmatprep.subr.mxu0 0.0
    %2646 = vmatpush1.msra.mxu0 0.0
    %2647 = vmatprep.subr.mxu0 0.0
    %2648 = vmatpush1.msra.mxu0 0.0
    %2649 = vmatprep.subr.mxu0 0.0
    %2650 = vmatpush1.msra.mxu0 0.0
    %2651 = vmatprep.subr.mxu0 0.0
    %2652 = vmatpush1.msra.mxu0 0.0
    %2653 = vmatprep.subr.mxu0 0.0
    %2654 = vmatpush1.msra.mxu0 0.0
    %2655 = vmatprep.subr.mxu0 0.0
    %2656 = vmatpush1.msra.mxu0 0.0
    %2657 = vmatprep.subr.mxu0 0.0
    %2658 = vmatpush1.msra.mxu0 0.0
    %2659 = vmatprep.subr.mxu0 0.0
    %2660 = vmatpush1.msra.mxu0 0.0
    %2661 = vmatprep.subr.mxu0 0.0
    %2662 = vmatpush1.msra.mxu0 0.0
    %2663 = vmatprep.subr.mxu0 0.0
    %2664 = vmatpush1.msra.mxu0 0.0
    %2665 = vmatprep.subr.mxu0 0.0
    %2666 = vmatpush1.msra.mxu0 0.0
    %2667 = vmatprep.subr.mxu0 0.0
    %2668 = vmatpush1.msra.mxu0 0.0
    %2669 = vmatprep.subr.mxu0 0.0
    %2670 = vmatpush1.msra.mxu0 0.0
    %2671 = vmatprep.subr.mxu0 0.0
    %2672 = vmatpush1.msra.mxu0 0.0
    %2673 = vmatprep.subr.mxu0 0.0
    %2674 = vmatpush1.msra.mxu0 0.0
    %2675 = vmatprep.subr.mxu0 0.0
    %2676 = vmatpush1.msra.mxu0 0.0
    %2677 = vmatprep.subr.mxu0 0.0
    %2678 = vmatpush1.msra.mxu0 0.0
    %2679 = vmatprep.subr.mxu0 0.0
    %2680 = vmatpush1.msra.mxu0 0.0
    %2681 = vmatprep.subr.mxu0 0.0
    %2682 = vmatpush1.msra.mxu0 0.0
    %2683 = vmatprep.subr.mxu0 0.0
    %2684 = vmatpush1.msra.mxu0 0.0
    %2685 = vmatprep.subr.mxu0 0.0
    %2686 = vmatpush1.msra.mxu0 0.0
    %2687 = vmatprep.subr.mxu0 0.0
    %2688 = vmatpush1.msra.mxu0 0.0
    %2689 = vmatprep.subr.mxu0 0.0
    %2690 = vmatpush1.msra.mxu0 0.0
    %2691 = vmatprep.subr.mxu0 0.0
    %2692 = vmatpush1.msra.mxu0 0.0
    %2693 = vmatprep.subr.mxu0 0.0
    %2694 = vmatpush1.msra.mxu0 0.0
    %2695 = vmatprep.subr.mxu0 0.0
    %2696 = vmatpush1.msra.mxu0 0.0
    %2697 = vmatprep.mubr.f32.mxu0 0.0
    %2698 = vmatmul.mubr.f32.gmra.mrb[0].mxu0 %v2625
    %v2699 = vpop.f32.mrb[0].mxu0
    %v2700 = vadd.f32 0.0, %v2699
    %v2701 = vpop.f32.mrb[0].mxu0
    %2702 = vmatprep.mubr.f32.mxu0 0.0
    %2703 = vmatmul.mubr.f32.gmra.mrb[0].mxu0 %v2628
    %v2704 = vpop.f32.mrb[0].mxu0
    %v2705 = vadd.f32 0.0, %v2704
    %v2706 = vpop.f32.mrb[0].mxu0
    %2707 = vdwg.mxu0
    %v2708 = vadd.f32 %v2056, %v2700
    %v2709 = vadd.f32 %v2057, %v2705
    %s2710 = scalar_lea.vmem %s3, 128
    %v2711 = vld [vmem:[%s2710] sm:$0xff]
    %v2712 = vld [vmem:[%s2710 + $0x8] sm:$0xff]
    %v2713 = vld [vmem:[%s2710 + $0x10] sm:$0xff]
    %v2714 = vld [vmem:[%s2710 + $0x18] sm:$0xff]
    %2715 = vmatprep.subr.mxu0 0.0
    %2716 = vmatpush1.msra.mxu0 %v2711
    %2717 = vmatprep.subr.mxu0 0.0
    %2718 = vmatpush1.msra.mxu0 %v2712
    %2719 = vmatprep.subr.mxu0 0.0
    %2720 = vmatpush1.msra.mxu0 %v2713
    %2721 = vmatprep.subr.mxu0 0.0
    %2722 = vmatpush1.msra.mxu0 %v2714
    %2723 = vmatprep.subr.mxu0 0.0
    %2724 = vmatpush1.msra.mxu0 0.0
    %2725 = vmatprep.subr.mxu0 0.0
    %2726 = vmatpush1.msra.mxu0 0.0
    %2727 = vmatprep.subr.mxu0 0.0
    %2728 = vmatpush1.msra.mxu0 0.0
    %2729 = vmatprep.subr.mxu0 0.0
    %2730 = vmatpush1.msra.mxu0 0.0
    %2731 = vmatprep.subr.mxu0 0.0
    %2732 = vmatpush1.msra.mxu0 0.0
    %2733 = vmatprep.subr.mxu0 0.0
    %2734 = vmatpush1.msra.mxu0 0.0
    %2735 = vmatprep.subr.mxu0 0.0
    %2736 = vmatpush1.msra.mxu0 0.0
    %2737 = vmatprep.subr.mxu0 0.0
    %2738 = vmatpush1.msra.mxu0 0.0
    %2739 = vmatprep.subr.mxu0 0.0
    %2740 = vmatpush1.msra.mxu0 0.0
    %2741 = vmatprep.subr.mxu0 0.0
    %2742 = vmatpush1.msra.mxu0 0.0
    %2743 = vmatprep.subr.mxu0 0.0
    %2744 = vmatpush1.msra.mxu0 0.0
    %2745 = vmatprep.subr.mxu0 0.0
    %2746 = vmatpush1.msra.mxu0 0.0
    %2747 = vmatprep.subr.mxu0 0.0
    %2748 = vmatpush1.msra.mxu0 0.0
    %2749 = vmatprep.subr.mxu0 0.0
    %2750 = vmatpush1.msra.mxu0 0.0
    %2751 = vmatprep.subr.mxu0 0.0
    %2752 = vmatpush1.msra.mxu0 0.0
    %2753 = vmatprep.subr.mxu0 0.0
    %2754 = vmatpush1.msra.mxu0 0.0
    %2755 = vmatprep.subr.mxu0 0.0
    %2756 = vmatpush1.msra.mxu0 0.0
    %2757 = vmatprep.subr.mxu0 0.0
    %2758 = vmatpush1.msra.mxu0 0.0
    %2759 = vmatprep.subr.mxu0 0.0
    %2760 = vmatpush1.msra.mxu0 0.0
    %2761 = vmatprep.subr.mxu0 0.0
    %2762 = vmatpush1.msra.mxu0 0.0
    %2763 = vmatprep.subr.mxu0 0.0
    %2764 = vmatpush1.msra.mxu0 0.0
    %2765 = vmatprep.subr.mxu0 0.0
    %2766 = vmatpush1.msra.mxu0 0.0
    %2767 = vmatprep.subr.mxu0 0.0
    %2768 = vmatpush1.msra.mxu0 0.0
    %2769 = vmatprep.subr.mxu0 0.0
    %2770 = vmatpush1.msra.mxu0 0.0
    %2771 = vmatprep.subr.mxu0 0.0
    %2772 = vmatpush1.msra.mxu0 0.0
    %2773 = vmatprep.subr.mxu0 0.0
    %2774 = vmatpush1.msra.mxu0 0.0
    %2775 = vmatprep.subr.mxu0 0.0
    %2776 = vmatpush1.msra.mxu0 0.0
    %2777 = vmatprep.subr.mxu0 0.0
    %2778 = vmatpush1.msra.mxu0 0.0
    %2779 = vmatprep.mubr.f32.mxu0 0.0
    %2780 = vmatmul.mubr.f32.gmra.mrb[0].mxu0 %v106
    %v2781 = vpop.f32.mrb[0].mxu0
    %v2782 = vadd.f32 0.0, %v2781
    %v2783 = vpop.f32.mrb[0].mxu0
    %2784 = vmatprep.mubr.f32.mxu0 0.0
    %2785 = vmatmul.mubr.f32.gmra.mrb[0].mxu0 %v109
    %v2786 = vpop.f32.mrb[0].mxu0
    %v2787 = vadd.f32 0.0, %v2786
    %v2788 = vpop.f32.mrb[0].mxu0
    %2789 = vdwg.mxu0
    %s2790 = scalar_lea.vmem %s4, 128
    %v2791 = vld [vmem:[%s2790] sm:$0xff]
    %v2792 = vld [vmem:[%s2790 + $0x8] sm:$0xff]
    %v2793 = vld [vmem:[%s2790 + $0x10] sm:$0xff]
    %v2794 = vld [vmem:[%s2790 + $0x18] sm:$0xff]
    %2795 = vmatprep.subr.mxu0 0.0
    %2796 = vmatpush1.msra.mxu0 %v2791
    %2797 = vmatprep.subr.mxu0 0.0
    %2798 = vmatpush1.msra.mxu0 %v2792
    %2799 = vmatprep.subr.mxu0 0.0
    %2800 = vmatpush1.msra.mxu0 %v2793
    %2801 = vmatprep.subr.mxu0 0.0
    %2802 = vmatpush1.msra.mxu0 %v2794
    %2803 = vmatprep.subr.mxu0 0.0
    %2804 = vmatpush1.msra.mxu0 0.0
    %2805 = vmatprep.subr.mxu0 0.0
    %2806 = vmatpush1.msra.mxu0 0.0
    %2807 = vmatprep.subr.mxu0 0.0
    %2808 = vmatpush1.msra.mxu0 0.0
    %2809 = vmatprep.subr.mxu0 0.0
    %2810 = vmatpush1.msra.mxu0 0.0
    %2811 = vmatprep.subr.mxu0 0.0
    %2812 = vmatpush1.msra.mxu0 0.0
    %2813 = vmatprep.subr.mxu0 0.0
    %2814 = vmatpush1.msra.mxu0 0.0
    %2815 = vmatprep.subr.mxu0 0.0
    %2816 = vmatpush1.msra.mxu0 0.0
    %2817 = vmatprep.subr.mxu0 0.0
    %2818 = vmatpush1.msra.mxu0 0.0
    %2819 = vmatprep.subr.mxu0 0.0
    %2820 = vmatpush1.msra.mxu0 0.0
    %2821 = vmatprep.subr.mxu0 0.0
    %2822 = vmatpush1.msra.mxu0 0.0
    %2823 = vmatprep.subr.mxu0 0.0
    %2824 = vmatpush1.msra.mxu0 0.0
    %2825 = vmatprep.subr.mxu0 0.0
    %2826 = vmatpush1.msra.mxu0 0.0
    %2827 = vmatprep.subr.mxu0 0.0
    %2828 = vmatpush1.msra.mxu0 0.0
    %2829 = vmatprep.subr.mxu0 0.0
    %2830 = vmatpush1.msra.mxu0 0.0
    %2831 = vmatprep.subr.mxu0 0.0
    %2832 = vmatpush1.msra.mxu0 0.0
    %2833 = vmatprep.subr.mxu0 0.0
    %2834 = vmatpush1.msra.mxu0 0.0
    %2835 = vmatprep.subr.mxu0 0.0
    %2836 = vmatpush1.msra.mxu0 0.0
    %2837 = vmatprep.subr.mxu0 0.0
    %2838 = vmatpush1.msra.mxu0 0.0
    %2839 = vmatprep.subr.mxu0 0.0
    %2840 = vmatpush1.msra.mxu0 0.0
    %2841 = vmatprep.subr.mxu0 0.0
    %2842 = vmatpush1.msra.mxu0 0.0
    %2843 = vmatprep.subr.mxu0 0.0
    %2844 = vmatpush1.msra.mxu0 0.0
    %2845 = vmatprep.subr.mxu0 0.0
    %2846 = vmatpush1.msra.mxu0 0.0
    %2847 = vmatprep.subr.mxu0 0.0
    %2848 = vmatpush1.msra.mxu0 0.0
    %2849 = vmatprep.subr.mxu0 0.0
    %2850 = vmatpush1.msra.mxu0 0.0
    %2851 = vmatprep.subr.mxu0 0.0
    %2852 = vmatpush1.msra.mxu0 0.0
    %2853 = vmatprep.subr.mxu0 0.0
    %2854 = vmatpush1.msra.mxu0 0.0
    %2855 = vmatprep.subr.mxu0 0.0
    %2856 = vmatpush1.msra.mxu0 0.0
    %2857 = vmatprep.subr.mxu0 0.0
    %2858 = vmatpush1.msra.mxu0 0.0
    %2859 = vmatprep.mubr.f32.mxu0 0.0
    %2860 = vmatmul.mubr.f32.gmra.mrb[0].mxu0 %v106
    %v2861 = vpop.f32.mrb[0].mxu0
    %v2862 = vadd.f32 0.0, %v2861
    %v2863 = vpop.f32.mrb[0].mxu0
    %2864 = vmatprep.mubr.f32.mxu0 0.0
    %2865 = vmatmul.mubr.f32.gmra.mrb[0].mxu0 %v109
    %v2866 = vpop.f32.mrb[0].mxu0
    %v2867 = vadd.f32 0.0, %v2866
    %v2868 = vpop.f32.mrb[0].mxu0
    %2869 = vdwg.mxu0
    %s2870 = scalar_lea.vmem %s5, 128
    %v2871 = vld [vmem:[%s2870] sm:$0xff]
    %v2872 = vld [vmem:[%s2870 + $0x8] sm:$0xff]
    %v2873 = vld [vmem:[%s2870 + $0x10] sm:$0xff]
    %v2874 = vld [vmem:[%s2870 + $0x18] sm:$0xff]
    %2875 = vmatprep.subr.mxu0 0.0
    %2876 = vmatpush1.msra.mxu0 %v2871
    %2877 = vmatprep.subr.mxu0 0.0
    %2878 = vmatpush1.msra.mxu0 %v2872
    %2879 = vmatprep.subr.mxu0 0.0
    %2880 = vmatpush1.msra.mxu0 %v2873
    %2881 = vmatprep.subr.mxu0 0.0
    %2882 = vmatpush1.msra.mxu0 %v2874
    %2883 = vmatprep.subr.mxu0 0.0
    %2884 = vmatpush1.msra.mxu0 0.0
    %2885 = vmatprep.subr.mxu0 0.0
    %2886 = vmatpush1.msra.mxu0 0.0
    %2887 = vmatprep.subr.mxu0 0.0
    %2888 = vmatpush1.msra.mxu0 0.0
    %2889 = vmatprep.subr.mxu0 0.0
    %2890 = vmatpush1.msra.mxu0 0.0
    %2891 = vmatprep.subr.mxu0 0.0
    %2892 = vmatpush1.msra.mxu0 0.0
    %2893 = vmatprep.subr.mxu0 0.0
    %2894 = vmatpush1.msra.mxu0 0.0
    %2895 = vmatprep.subr.mxu0 0.0
    %2896 = vmatpush1.msra.mxu0 0.0
    %2897 = vmatprep.subr.mxu0 0.0
    %2898 = vmatpush1.msra.mxu0 0.0
    %2899 = vmatprep.subr.mxu0 0.0
    %2900 = vmatpush1.msra.mxu0 0.0
    %2901 = vmatprep.subr.mxu0 0.0
    %2902 = vmatpush1.msra.mxu0 0.0
    %2903 = vmatprep.subr.mxu0 0.0
    %2904 = vmatpush1.msra.mxu0 0.0
    %2905 = vmatprep.subr.mxu0 0.0
    %2906 = vmatpush1.msra.mxu0 0.0
    %2907 = vmatprep.subr.mxu0 0.0
    %2908 = vmatpush1.msra.mxu0 0.0
    %2909 = vmatprep.subr.mxu0 0.0
    %2910 = vmatpush1.msra.mxu0 0.0
    %2911 = vmatprep.subr.mxu0 0.0
    %2912 = vmatpush1.msra.mxu0 0.0
    %2913 = vmatprep.subr.mxu0 0.0
    %2914 = vmatpush1.msra.mxu0 0.0
    %2915 = vmatprep.subr.mxu0 0.0
    %2916 = vmatpush1.msra.mxu0 0.0
    %2917 = vmatprep.subr.mxu0 0.0
    %2918 = vmatpush1.msra.mxu0 0.0
    %2919 = vmatprep.subr.mxu0 0.0
    %2920 = vmatpush1.msra.mxu0 0.0
    %2921 = vmatprep.subr.mxu0 0.0
    %2922 = vmatpush1.msra.mxu0 0.0
    %2923 = vmatprep.subr.mxu0 0.0
    %2924 = vmatpush1.msra.mxu0 0.0
    %2925 = vmatprep.subr.mxu0 0.0
    %2926 = vmatpush1.msra.mxu0 0.0
    %2927 = vmatprep.subr.mxu0 0.0
    %2928 = vmatpush1.msra.mxu0 0.0
    %2929 = vmatprep.subr.mxu0 0.0
    %2930 = vmatpush1.msra.mxu0 0.0
    %2931 = vmatprep.subr.mxu0 0.0
    %2932 = vmatpush1.msra.mxu0 0.0
    %2933 = vmatprep.subr.mxu0 0.0
    %2934 = vmatpush1.msra.mxu0 0.0
    %2935 = vmatprep.subr.mxu0 0.0
    %2936 = vmatpush1.msra.mxu0 0.0
    %2937 = vmatprep.subr.mxu0 0.0
    %2938 = vmatpush1.msra.mxu0 0.0
    %2939 = vmatprep.mubr.f32.mxu0 0.0
    %2940 = vmatmul.mubr.f32.gmra.mrb[0].mxu0 %v106
    %v2941 = vpop.f32.mrb[0].mxu0
    %v2942 = vadd.f32 0.0, %v2941
    %v2943 = vpop.f32.mrb[0].mxu0
    %2944 = vmatprep.mubr.f32.mxu0 0.0
    %2945 = vmatmul.mubr.f32.gmra.mrb[0].mxu0 %v109
    %v2946 = vpop.f32.mrb[0].mxu0
    %v2947 = vadd.f32 0.0, %v2946
    %v2948 = vpop.f32.mrb[0].mxu0
    %2949 = vdwg.mxu0
    %v2951 = vsel %vm344, %v2782, 0
    %v2954 = vsel %vm344, %v2862, 0
    %2956 = vmatprep.subr.mxu0 0.0
    %2957 = vmatpush1.xpose.msra.mxu0 %v2954
    %2958 = vmatprep.subr.mxu0 0.0
    %2959 = vmatpush1.xpose.msra.mxu0 0.0
    %2960 = vmatprep.subr.mxu0 0.0
    %2961 = vmatpush1.xpose.msra.mxu0 0.0
    %2962 = vmatprep.subr.mxu0 0.0
    %2963 = vmatpush1.xpose.msra.mxu0 0.0
    %2964 = vmatprep.subr.mxu0 0.0
    %2965 = vmatpush1.xpose.msra.mxu0 0.0
    %2966 = vmatprep.subr.mxu0 0.0
    %2967 = vmatpush1.xpose.msra.mxu0 0.0
    %2968 = vmatprep.subr.mxu0 0.0
    %2969 = vmatpush1.xpose.msra.mxu0 0.0
    %2970 = vmatprep.subr.mxu0 0.0
    %2971 = vmatpush1.xpose.msra.mxu0 0.0
    %2972 = vmatprep.subr.mxu0 0.0
    %2973 = vmatpush1.xpose.msra.mxu0 0.0
    %2974 = vmatprep.subr.mxu0 0.0
    %2975 = vmatpush1.xpose.msra.mxu0 0.0
    %2976 = vmatprep.subr.mxu0 0.0
    %2977 = vmatpush1.xpose.msra.mxu0 0.0
    %2978 = vmatprep.subr.mxu0 0.0
    %2979 = vmatpush1.xpose.msra.mxu0 0.0
    %2980 = vmatprep.subr.mxu0 0.0
    %2981 = vmatpush1.xpose.msra.mxu0 0.0
    %2982 = vmatprep.subr.mxu0 0.0
    %2983 = vmatpush1.xpose.msra.mxu0 0.0
    %2984 = vmatprep.subr.mxu0 0.0
    %2985 = vmatpush1.xpose.msra.mxu0 0.0
    %2986 = vmatprep.subr.mxu0 0.0
    %2987 = vmatpush1.xpose.msra.mxu0 0.0
    %2988 = vmatprep.subr.mxu0 0.0
    %2989 = vmatpush1.xpose.msra.mxu0 0.0
    %2990 = vmatprep.subr.mxu0 0.0
    %2991 = vmatpush1.xpose.msra.mxu0 0.0
    %2992 = vmatprep.subr.mxu0 0.0
    %2993 = vmatpush1.xpose.msra.mxu0 0.0
    %2994 = vmatprep.subr.mxu0 0.0
    %2995 = vmatpush1.xpose.msra.mxu0 0.0
    %2996 = vmatprep.subr.mxu0 0.0
    %2997 = vmatpush1.xpose.msra.mxu0 0.0
    %2998 = vmatprep.subr.mxu0 0.0
    %2999 = vmatpush1.xpose.msra.mxu0 0.0
    %3000 = vmatprep.subr.mxu0 0.0
    %3001 = vmatpush1.xpose.msra.mxu0 0.0
    %3002 = vmatprep.subr.mxu0 0.0
    %3003 = vmatpush1.xpose.msra.mxu0 0.0
    %3004 = vmatprep.subr.mxu0 0.0
    %3005 = vmatpush1.xpose.msra.mxu0 0.0
    %3006 = vmatprep.subr.mxu0 0.0
    %3007 = vmatpush1.xpose.msra.mxu0 0.0
    %3008 = vmatprep.subr.mxu0 0.0
    %3009 = vmatpush1.xpose.msra.mxu0 0.0
    %3010 = vmatprep.subr.mxu0 0.0
    %3011 = vmatpush1.xpose.msra.mxu0 0.0
    %3012 = vmatprep.subr.mxu0 0.0
    %3013 = vmatpush1.xpose.msra.mxu0 0.0
    %3014 = vmatprep.subr.mxu0 0.0
    %3015 = vmatpush1.xpose.msra.mxu0 0.0
    %3016 = vmatprep.subr.mxu0 0.0
    %3017 = vmatpush1.xpose.msra.mxu0 0.0
    %3018 = vmatprep.subr.mxu0 0.0
    %3019 = vmatpush1.xpose.msra.mxu0 0.0
    %3020 = vmatprep.mubr.f32.mxu0 0.0
    %3021 = vmatmul.mubr.f32.gmra.mrb[0].mxu0 %v2951
    %v3022 = vpop.f32.mrb[0].mxu0
    %v3023 = vadd.f32 0.0, %v3022
    %v3024 = vpop.f32.mrb[0].mxu0
    %3025 = vdwg.mxu0
    %v3027 = vsel %vm344, %v2787, 0
    %v3030 = vsel %vm344, %v2867, 0
    %3032 = vmatprep.subr.mxu0 0.0
    %3033 = vmatpush1.xpose.msra.mxu0 %v3030
    %3034 = vmatprep.subr.mxu0 0.0
    %3035 = vmatpush1.xpose.msra.mxu0 0.0
    %3036 = vmatprep.subr.mxu0 0.0
    %3037 = vmatpush1.xpose.msra.mxu0 0.0
    %3038 = vmatprep.subr.mxu0 0.0
    %3039 = vmatpush1.xpose.msra.mxu0 0.0
    %3040 = vmatprep.subr.mxu0 0.0
    %3041 = vmatpush1.xpose.msra.mxu0 0.0
    %3042 = vmatprep.subr.mxu0 0.0
    %3043 = vmatpush1.xpose.msra.mxu0 0.0
    %3044 = vmatprep.subr.mxu0 0.0
    %3045 = vmatpush1.xpose.msra.mxu0 0.0
    %3046 = vmatprep.subr.mxu0 0.0
    %3047 = vmatpush1.xpose.msra.mxu0 0.0
    %3048 = vmatprep.subr.mxu0 0.0
    %3049 = vmatpush1.xpose.msra.mxu0 0.0
    %3050 = vmatprep.subr.mxu0 0.0
    %3051 = vmatpush1.xpose.msra.mxu0 0.0
    %3052 = vmatprep.subr.mxu0 0.0
    %3053 = vmatpush1.xpose.msra.mxu0 0.0
    %3054 = vmatprep.subr.mxu0 0.0
    %3055 = vmatpush1.xpose.msra.mxu0 0.0
    %3056 = vmatprep.subr.mxu0 0.0
    %3057 = vmatpush1.xpose.msra.mxu0 0.0
    %3058 = vmatprep.subr.mxu0 0.0
    %3059 = vmatpush1.xpose.msra.mxu0 0.0
    %3060 = vmatprep.subr.mxu0 0.0
    %3061 = vmatpush1.xpose.msra.mxu0 0.0
    %3062 = vmatprep.subr.mxu0 0.0
    %3063 = vmatpush1.xpose.msra.mxu0 0.0
    %3064 = vmatprep.subr.mxu0 0.0
    %3065 = vmatpush1.xpose.msra.mxu0 0.0
    %3066 = vmatprep.subr.mxu0 0.0
    %3067 = vmatpush1.xpose.msra.mxu0 0.0
    %3068 = vmatprep.subr.mxu0 0.0
    %3069 = vmatpush1.xpose.msra.mxu0 0.0
    %3070 = vmatprep.subr.mxu0 0.0
    %3071 = vmatpush1.xpose.msra.mxu0 0.0
    %3072 = vmatprep.subr.mxu0 0.0
    %3073 = vmatpush1.xpose.msra.mxu0 0.0
    %3074 = vmatprep.subr.mxu0 0.0
    %3075 = vmatpush1.xpose.msra.mxu0 0.0
    %3076 = vmatprep.subr.mxu0 0.0
    %3077 = vmatpush1.xpose.msra.mxu0 0.0
    %3078 = vmatprep.subr.mxu0 0.0
    %3079 = vmatpush1.xpose.msra.mxu0 0.0
    %3080 = vmatprep.subr.mxu0 0.0
    %3081 = vmatpush1.xpose.msra.mxu0 0.0
    %3082 = vmatprep.subr.mxu0 0.0
    %3083 = vmatpush1.xpose.msra.mxu0 0.0
    %3084 = vmatprep.subr.mxu0 0.0
    %3085 = vmatpush1.xpose.msra.mxu0 0.0
    %3086 = vmatprep.subr.mxu0 0.0
    %3087 = vmatpush1.xpose.msra.mxu0 0.0
    %3088 = vmatprep.subr.mxu0 0.0
    %3089 = vmatpush1.xpose.msra.mxu0 0.0
    %3090 = vmatprep.subr.mxu0 0.0
    %3091 = vmatpush1.xpose.msra.mxu0 0.0
    %3092 = vmatprep.subr.mxu0 0.0
    %3093 = vmatpush1.xpose.msra.mxu0 0.0
    %3094 = vmatprep.subr.mxu0 0.0
    %3095 = vmatpush1.xpose.msra.mxu0 0.0
    %3096 = vmatprep.mubr.f32.mxu0 0.0
    %3097 = vmatmul.mubr.f32.gmra.mrb[0].mxu0 %v3027
    %v3098 = vpop.f32.mrb[0].mxu0
    %v3099 = vadd.f32 0.0, %v3098
    %v3100 = vpop.f32.mrb[0].mxu0
    %3101 = vdwg.mxu0
    %v3102 = vmul.f32 %v3023, 0.4472136
    %v3103 = vmul.f32 %v3099, 0.4472136
    %v3104 = vsel %vm100, %v3102, -1e+30
    %v3105 = vsel %vm100, %v3103, -1e+30
    %v3106 = vsel %vm501, %v3104, -inf
    %3107 = vmax.xlane.f32.xlu0 %v3106
    %v3108 = vpop.xlane.xlu0 %3107
    %v3109 = vsel %vm501, %v3105, -inf
    %3110 = vmax.xlane.f32.xlu0 %v3109
    %v3111 = vpop.xlane.xlu0 %3110
    %v3112 = vsub.f32 %v3104, %v3108
    %v3113 = vsub.f32 %v3105, %v3111
    %v3114 = vmul.f32 %v3112, 1.442695
    %v3115 = vpow.pop %v3114
    %v3116 = vmul.f32 %v3113, 1.442695
    %v3117 = vpow.pop %v3116
    %v3118 = vsel %vm501, %v3115, 0.0
    %3119 = vadd.xlane.f32.xlu0 %v3118
    %v3120 = vpop.xlane.xlu0 %3119
    %v3121 = vsel %vm501, %v3117, 0.0
    %3122 = vadd.xlane.f32.xlu0 %v3121
    %v3123 = vpop.xlane.xlu0 %3122
    %v3124 = vrcp.pop %v3120
    %v3125 = vmul.f32 %v3115, %v3124
    %v3126 = vrcp.pop %v3123
    %v3127 = vmul.f32 %v3117, %v3126
    %v3129 = vsel %vm501, %v3125, 0
    %3131 = vmatprep.subr.mxu0 0.0
    %3132 = vmatpush1.msra.mxu0 %v2942
    %3133 = vmatprep.subr.mxu0 0.0
    %3134 = vmatpush1.msra.mxu0 0.0
    %3135 = vmatprep.subr.mxu0 0.0
    %3136 = vmatpush1.msra.mxu0 0.0
    %3137 = vmatprep.subr.mxu0 0.0
    %3138 = vmatpush1.msra.mxu0 0.0
    %3139 = vmatprep.subr.mxu0 0.0
    %3140 = vmatpush1.msra.mxu0 0.0
    %3141 = vmatprep.subr.mxu0 0.0
    %3142 = vmatpush1.msra.mxu0 0.0
    %3143 = vmatprep.subr.mxu0 0.0
    %3144 = vmatpush1.msra.mxu0 0.0
    %3145 = vmatprep.subr.mxu0 0.0
    %3146 = vmatpush1.msra.mxu0 0.0
    %3147 = vmatprep.subr.mxu0 0.0
    %3148 = vmatpush1.msra.mxu0 0.0
    %3149 = vmatprep.subr.mxu0 0.0
    %3150 = vmatpush1.msra.mxu0 0.0
    %3151 = vmatprep.subr.mxu0 0.0
    %3152 = vmatpush1.msra.mxu0 0.0
    %3153 = vmatprep.subr.mxu0 0.0
    %3154 = vmatpush1.msra.mxu0 0.0
    %3155 = vmatprep.subr.mxu0 0.0
    %3156 = vmatpush1.msra.mxu0 0.0
    %3157 = vmatprep.subr.mxu0 0.0
    %3158 = vmatpush1.msra.mxu0 0.0
    %3159 = vmatprep.subr.mxu0 0.0
    %3160 = vmatpush1.msra.mxu0 0.0
    %3161 = vmatprep.subr.mxu0 0.0
    %3162 = vmatpush1.msra.mxu0 0.0
    %3163 = vmatprep.subr.mxu0 0.0
    %3164 = vmatpush1.msra.mxu0 0.0
    %3165 = vmatprep.subr.mxu0 0.0
    %3166 = vmatpush1.msra.mxu0 0.0
    %3167 = vmatprep.subr.mxu0 0.0
    %3168 = vmatpush1.msra.mxu0 0.0
    %3169 = vmatprep.subr.mxu0 0.0
    %3170 = vmatpush1.msra.mxu0 0.0
    %3171 = vmatprep.subr.mxu0 0.0
    %3172 = vmatpush1.msra.mxu0 0.0
    %3173 = vmatprep.subr.mxu0 0.0
    %3174 = vmatpush1.msra.mxu0 0.0
    %3175 = vmatprep.subr.mxu0 0.0
    %3176 = vmatpush1.msra.mxu0 0.0
    %3177 = vmatprep.subr.mxu0 0.0
    %3178 = vmatpush1.msra.mxu0 0.0
    %3179 = vmatprep.subr.mxu0 0.0
    %3180 = vmatpush1.msra.mxu0 0.0
    %3181 = vmatprep.subr.mxu0 0.0
    %3182 = vmatpush1.msra.mxu0 0.0
    %3183 = vmatprep.subr.mxu0 0.0
    %3184 = vmatpush1.msra.mxu0 0.0
    %3185 = vmatprep.subr.mxu0 0.0
    %3186 = vmatpush1.msra.mxu0 0.0
    %3187 = vmatprep.subr.mxu0 0.0
    %3188 = vmatpush1.msra.mxu0 0.0
    %3189 = vmatprep.subr.mxu0 0.0
    %3190 = vmatpush1.msra.mxu0 0.0
    %3191 = vmatprep.subr.mxu0 0.0
    %3192 = vmatpush1.msra.mxu0 0.0
    %3193 = vmatprep.subr.mxu0 0.0
    %3194 = vmatpush1.msra.mxu0 0.0
    %3195 = vmatprep.mubr.f32.mxu0 0.0
    %3196 = vmatmul.mubr.f32.gmra.mrb[0].mxu0 %v3129
    %v3197 = vpop.f32.mrb[0].mxu0
    %v3198 = vadd.f32 0.0, %v3197
    %v3199 = vpop.f32.mrb[0].mxu0
    %3200 = vdwg.mxu0
    %v3202 = vsel %vm501, %v3127, 0
    %3204 = vmatprep.subr.mxu0 0.0
    %3205 = vmatpush1.msra.mxu0 %v2947
    %3206 = vmatprep.subr.mxu0 0.0
    %3207 = vmatpush1.msra.mxu0 0.0
    %3208 = vmatprep.subr.mxu0 0.0
    %3209 = vmatpush1.msra.mxu0 0.0
    %3210 = vmatprep.subr.mxu0 0.0
    %3211 = vmatpush1.msra.mxu0 0.0
    %3212 = vmatprep.subr.mxu0 0.0
    %3213 = vmatpush1.msra.mxu0 0.0
    %3214 = vmatprep.subr.mxu0 0.0
    %3215 = vmatpush1.msra.mxu0 0.0
    %3216 = vmatprep.subr.mxu0 0.0
    %3217 = vmatpush1.msra.mxu0 0.0
    %3218 = vmatprep.subr.mxu0 0.0
    %3219 = vmatpush1.msra.mxu0 0.0
    %3220 = vmatprep.subr.mxu0 0.0
    %3221 = vmatpush1.msra.mxu0 0.0
    %3222 = vmatprep.subr.mxu0 0.0
    %3223 = vmatpush1.msra.mxu0 0.0
    %3224 = vmatprep.subr.mxu0 0.0
    %3225 = vmatpush1.msra.mxu0 0.0
    %3226 = vmatprep.subr.mxu0 0.0
    %3227 = vmatpush1.msra.mxu0 0.0
    %3228 = vmatprep.subr.mxu0 0.0
    %3229 = vmatpush1.msra.mxu0 0.0
    %3230 = vmatprep.subr.mxu0 0.0
    %3231 = vmatpush1.msra.mxu0 0.0
    %3232 = vmatprep.subr.mxu0 0.0
    %3233 = vmatpush1.msra.mxu0 0.0
    %3234 = vmatprep.subr.mxu0 0.0
    %3235 = vmatpush1.msra.mxu0 0.0
    %3236 = vmatprep.subr.mxu0 0.0
    %3237 = vmatpush1.msra.mxu0 0.0
    %3238 = vmatprep.subr.mxu0 0.0
    %3239 = vmatpush1.msra.mxu0 0.0
    %3240 = vmatprep.subr.mxu0 0.0
    %3241 = vmatpush1.msra.mxu0 0.0
    %3242 = vmatprep.subr.mxu0 0.0
    %3243 = vmatpush1.msra.mxu0 0.0
    %3244 = vmatprep.subr.mxu0 0.0
    %3245 = vmatpush1.msra.mxu0 0.0
    %3246 = vmatprep.subr.mxu0 0.0
    %3247 = vmatpush1.msra.mxu0 0.0
    %3248 = vmatprep.subr.mxu0 0.0
    %3249 = vmatpush1.msra.mxu0 0.0
    %3250 = vmatprep.subr.mxu0 0.0
    %3251 = vmatpush1.msra.mxu0 0.0
    %3252 = vmatprep.subr.mxu0 0.0
    %3253 = vmatpush1.msra.mxu0 0.0
    %3254 = vmatprep.subr.mxu0 0.0
    %3255 = vmatpush1.msra.mxu0 0.0
    %3256 = vmatprep.subr.mxu0 0.0
    %3257 = vmatpush1.msra.mxu0 0.0
    %3258 = vmatprep.subr.mxu0 0.0
    %3259 = vmatpush1.msra.mxu0 0.0
    %3260 = vmatprep.subr.mxu0 0.0
    %3261 = vmatpush1.msra.mxu0 0.0
    %3262 = vmatprep.subr.mxu0 0.0
    %3263 = vmatpush1.msra.mxu0 0.0
    %3264 = vmatprep.subr.mxu0 0.0
    %3265 = vmatpush1.msra.mxu0 0.0
    %3266 = vmatprep.subr.mxu0 0.0
    %3267 = vmatpush1.msra.mxu0 0.0
    %3268 = vmatprep.mubr.f32.mxu0 0.0
    %3269 = vmatmul.mubr.f32.gmra.mrb[0].mxu0 %v3202
    %v3270 = vpop.f32.mrb[0].mxu0
    %v3271 = vadd.f32 0.0, %v3270
    %v3272 = vpop.f32.mrb[0].mxu0
    %3273 = vdwg.mxu0
    %s3274 = scalar_lea.vmem %s6, 32
    %v3275 = vld [vmem:[%s3274] sm:$0x1f]
    %v3277 = vsel %vm344, %v3198, 0
    %v3280 = vsel %vm344, %v3271, 0
    %v3283 = vsel %vm1243, %v3275, 0
    %3285 = vmatprep.subr.mxu0 0.0
    %3286 = vmatpush1.msra.mxu0 %v3283
    %3287 = vmatprep.subr.mxu0 0.0
    %3288 = vmatpush1.msra.mxu0 0.0
    %3289 = vmatprep.subr.mxu0 0.0
    %3290 = vmatpush1.msra.mxu0 0.0
    %3291 = vmatprep.subr.mxu0 0.0
    %3292 = vmatpush1.msra.mxu0 0.0
    %3293 = vmatprep.subr.mxu0 0.0
    %3294 = vmatpush1.msra.mxu0 0.0
    %3295 = vmatprep.subr.mxu0 0.0
    %3296 = vmatpush1.msra.mxu0 0.0
    %3297 = vmatprep.subr.mxu0 0.0
    %3298 = vmatpush1.msra.mxu0 0.0
    %3299 = vmatprep.subr.mxu0 0.0
    %3300 = vmatpush1.msra.mxu0 0.0
    %3301 = vmatprep.subr.mxu0 0.0
    %3302 = vmatpush1.msra.mxu0 0.0
    %3303 = vmatprep.subr.mxu0 0.0
    %3304 = vmatpush1.msra.mxu0 0.0
    %3305 = vmatprep.subr.mxu0 0.0
    %3306 = vmatpush1.msra.mxu0 0.0
    %3307 = vmatprep.subr.mxu0 0.0
    %3308 = vmatpush1.msra.mxu0 0.0
    %3309 = vmatprep.subr.mxu0 0.0
    %3310 = vmatpush1.msra.mxu0 0.0
    %3311 = vmatprep.subr.mxu0 0.0
    %3312 = vmatpush1.msra.mxu0 0.0
    %3313 = vmatprep.subr.mxu0 0.0
    %3314 = vmatpush1.msra.mxu0 0.0
    %3315 = vmatprep.subr.mxu0 0.0
    %3316 = vmatpush1.msra.mxu0 0.0
    %3317 = vmatprep.subr.mxu0 0.0
    %3318 = vmatpush1.msra.mxu0 0.0
    %3319 = vmatprep.subr.mxu0 0.0
    %3320 = vmatpush1.msra.mxu0 0.0
    %3321 = vmatprep.subr.mxu0 0.0
    %3322 = vmatpush1.msra.mxu0 0.0
    %3323 = vmatprep.subr.mxu0 0.0
    %3324 = vmatpush1.msra.mxu0 0.0
    %3325 = vmatprep.subr.mxu0 0.0
    %3326 = vmatpush1.msra.mxu0 0.0
    %3327 = vmatprep.subr.mxu0 0.0
    %3328 = vmatpush1.msra.mxu0 0.0
    %3329 = vmatprep.subr.mxu0 0.0
    %3330 = vmatpush1.msra.mxu0 0.0
    %3331 = vmatprep.subr.mxu0 0.0
    %3332 = vmatpush1.msra.mxu0 0.0
    %3333 = vmatprep.subr.mxu0 0.0
    %3334 = vmatpush1.msra.mxu0 0.0
    %3335 = vmatprep.subr.mxu0 0.0
    %3336 = vmatpush1.msra.mxu0 0.0
    %3337 = vmatprep.subr.mxu0 0.0
    %3338 = vmatpush1.msra.mxu0 0.0
    %3339 = vmatprep.subr.mxu0 0.0
    %3340 = vmatpush1.msra.mxu0 0.0
    %3341 = vmatprep.subr.mxu0 0.0
    %3342 = vmatpush1.msra.mxu0 0.0
    %3343 = vmatprep.subr.mxu0 0.0
    %3344 = vmatpush1.msra.mxu0 0.0
    %3345 = vmatprep.subr.mxu0 0.0
    %3346 = vmatpush1.msra.mxu0 0.0
    %3347 = vmatprep.subr.mxu0 0.0
    %3348 = vmatpush1.msra.mxu0 0.0
    %3349 = vmatprep.mubr.f32.mxu0 0.0
    %3350 = vmatmul.mubr.f32.gmra.mrb[0].mxu0 %v3277
    %v3351 = vpop.f32.mrb[0].mxu0
    %v3352 = vadd.f32 0.0, %v3351
    %v3353 = vpop.f32.mrb[0].mxu0
    %3354 = vmatprep.mubr.f32.mxu0 0.0
    %3355 = vmatmul.mubr.f32.gmra.mrb[0].mxu0 %v3280
    %v3356 = vpop.f32.mrb[0].mxu0
    %v3357 = vadd.f32 0.0, %v3356
    %v3358 = vpop.f32.mrb[0].mxu0
    %3359 = vdwg.mxu0
    %v3360 = vadd.f32 %v2708, %v3352
    %v3361 = vadd.f32 %v2709, %v3357
    %s3362 = scalar_lea.vmem %s3, 160
    %v3363 = vld [vmem:[%s3362] sm:$0xff]
    %v3364 = vld [vmem:[%s3362 + $0x8] sm:$0xff]
    %v3365 = vld [vmem:[%s3362 + $0x10] sm:$0xff]
    %v3366 = vld [vmem:[%s3362 + $0x18] sm:$0xff]
    %3367 = vmatprep.subr.mxu0 0.0
    %3368 = vmatpush1.msra.mxu0 %v3363
    %3369 = vmatprep.subr.mxu0 0.0
    %3370 = vmatpush1.msra.mxu0 %v3364
    %3371 = vmatprep.subr.mxu0 0.0
    %3372 = vmatpush1.msra.mxu0 %v3365
    %3373 = vmatprep.subr.mxu0 0.0
    %3374 = vmatpush1.msra.mxu0 %v3366
    %3375 = vmatprep.subr.mxu0 0.0
    %3376 = vmatpush1.msra.mxu0 0.0
    %3377 = vmatprep.subr.mxu0 0.0
    %3378 = vmatpush1.msra.mxu0 0.0
    %3379 = vmatprep.subr.mxu0 0.0
    %3380 = vmatpush1.msra.mxu0 0.0
    %3381 = vmatprep.subr.mxu0 0.0
    %3382 = vmatpush1.msra.mxu0 0.0
    %3383 = vmatprep.subr.mxu0 0.0
    %3384 = vmatpush1.msra.mxu0 0.0
    %3385 = vmatprep.subr.mxu0 0.0
    %3386 = vmatpush1.msra.mxu0 0.0
    %3387 = vmatprep.subr.mxu0 0.0
    %3388 = vmatpush1.msra.mxu0 0.0
    %3389 = vmatprep.subr.mxu0 0.0
    %3390 = vmatpush1.msra.mxu0 0.0
    %3391 = vmatprep.subr.mxu0 0.0
    %3392 = vmatpush1.msra.mxu0 0.0
    %3393 = vmatprep.subr.mxu0 0.0
    %3394 = vmatpush1.msra.mxu0 0.0
    %3395 = vmatprep.subr.mxu0 0.0
    %3396 = vmatpush1.msra.mxu0 0.0
    %3397 = vmatprep.subr.mxu0 0.0
    %3398 = vmatpush1.msra.mxu0 0.0
    %3399 = vmatprep.subr.mxu0 0.0
    %3400 = vmatpush1.msra.mxu0 0.0
    %3401 = vmatprep.subr.mxu0 0.0
    %3402 = vmatpush1.msra.mxu0 0.0
    %3403 = vmatprep.subr.mxu0 0.0
    %3404 = vmatpush1.msra.mxu0 0.0
    %3405 = vmatprep.subr.mxu0 0.0
    %3406 = vmatpush1.msra.mxu0 0.0
    %3407 = vmatprep.subr.mxu0 0.0
    %3408 = vmatpush1.msra.mxu0 0.0
    %3409 = vmatprep.subr.mxu0 0.0
    %3410 = vmatpush1.msra.mxu0 0.0
    %3411 = vmatprep.subr.mxu0 0.0
    %3412 = vmatpush1.msra.mxu0 0.0
    %3413 = vmatprep.subr.mxu0 0.0
    %3414 = vmatpush1.msra.mxu0 0.0
    %3415 = vmatprep.subr.mxu0 0.0
    %3416 = vmatpush1.msra.mxu0 0.0
    %3417 = vmatprep.subr.mxu0 0.0
    %3418 = vmatpush1.msra.mxu0 0.0
    %3419 = vmatprep.subr.mxu0 0.0
    %3420 = vmatpush1.msra.mxu0 0.0
    %3421 = vmatprep.subr.mxu0 0.0
    %3422 = vmatpush1.msra.mxu0 0.0
    %3423 = vmatprep.subr.mxu0 0.0
    %3424 = vmatpush1.msra.mxu0 0.0
    %3425 = vmatprep.subr.mxu0 0.0
    %3426 = vmatpush1.msra.mxu0 0.0
    %3427 = vmatprep.subr.mxu0 0.0
    %3428 = vmatpush1.msra.mxu0 0.0
    %3429 = vmatprep.subr.mxu0 0.0
    %3430 = vmatpush1.msra.mxu0 0.0
    %3431 = vmatprep.mubr.f32.mxu0 0.0
    %3432 = vmatmul.mubr.f32.gmra.mrb[0].mxu0 %v106
    %v3433 = vpop.f32.mrb[0].mxu0
    %v3434 = vadd.f32 0.0, %v3433
    %v3435 = vpop.f32.mrb[0].mxu0
    %3436 = vmatprep.mubr.f32.mxu0 0.0
    %3437 = vmatmul.mubr.f32.gmra.mrb[0].mxu0 %v109
    %v3438 = vpop.f32.mrb[0].mxu0
    %v3439 = vadd.f32 0.0, %v3438
    %v3440 = vpop.f32.mrb[0].mxu0
    %3441 = vdwg.mxu0
    %s3442 = scalar_lea.vmem %s4, 160
    %v3443 = vld [vmem:[%s3442] sm:$0xff]
    %v3444 = vld [vmem:[%s3442 + $0x8] sm:$0xff]
    %v3445 = vld [vmem:[%s3442 + $0x10] sm:$0xff]
    %v3446 = vld [vmem:[%s3442 + $0x18] sm:$0xff]
    %3447 = vmatprep.subr.mxu0 0.0
    %3448 = vmatpush1.msra.mxu0 %v3443
    %3449 = vmatprep.subr.mxu0 0.0
    %3450 = vmatpush1.msra.mxu0 %v3444
    %3451 = vmatprep.subr.mxu0 0.0
    %3452 = vmatpush1.msra.mxu0 %v3445
    %3453 = vmatprep.subr.mxu0 0.0
    %3454 = vmatpush1.msra.mxu0 %v3446
    %3455 = vmatprep.subr.mxu0 0.0
    %3456 = vmatpush1.msra.mxu0 0.0
    %3457 = vmatprep.subr.mxu0 0.0
    %3458 = vmatpush1.msra.mxu0 0.0
    %3459 = vmatprep.subr.mxu0 0.0
    %3460 = vmatpush1.msra.mxu0 0.0
    %3461 = vmatprep.subr.mxu0 0.0
    %3462 = vmatpush1.msra.mxu0 0.0
    %3463 = vmatprep.subr.mxu0 0.0
    %3464 = vmatpush1.msra.mxu0 0.0
    %3465 = vmatprep.subr.mxu0 0.0
    %3466 = vmatpush1.msra.mxu0 0.0
    %3467 = vmatprep.subr.mxu0 0.0
    %3468 = vmatpush1.msra.mxu0 0.0
    %3469 = vmatprep.subr.mxu0 0.0
    %3470 = vmatpush1.msra.mxu0 0.0
    %3471 = vmatprep.subr.mxu0 0.0
    %3472 = vmatpush1.msra.mxu0 0.0
    %3473 = vmatprep.subr.mxu0 0.0
    %3474 = vmatpush1.msra.mxu0 0.0
    %3475 = vmatprep.subr.mxu0 0.0
    %3476 = vmatpush1.msra.mxu0 0.0
    %3477 = vmatprep.subr.mxu0 0.0
    %3478 = vmatpush1.msra.mxu0 0.0
    %3479 = vmatprep.subr.mxu0 0.0
    %3480 = vmatpush1.msra.mxu0 0.0
    %3481 = vmatprep.subr.mxu0 0.0
    %3482 = vmatpush1.msra.mxu0 0.0
    %3483 = vmatprep.subr.mxu0 0.0
    %3484 = vmatpush1.msra.mxu0 0.0
    %3485 = vmatprep.subr.mxu0 0.0
    %3486 = vmatpush1.msra.mxu0 0.0
    %3487 = vmatprep.subr.mxu0 0.0
    %3488 = vmatpush1.msra.mxu0 0.0
    %3489 = vmatprep.subr.mxu0 0.0
    %3490 = vmatpush1.msra.mxu0 0.0
    %3491 = vmatprep.subr.mxu0 0.0
    %3492 = vmatpush1.msra.mxu0 0.0
    %3493 = vmatprep.subr.mxu0 0.0
    %3494 = vmatpush1.msra.mxu0 0.0
    %3495 = vmatprep.subr.mxu0 0.0
    %3496 = vmatpush1.msra.mxu0 0.0
    %3497 = vmatprep.subr.mxu0 0.0
    %3498 = vmatpush1.msra.mxu0 0.0
    %3499 = vmatprep.subr.mxu0 0.0
    %3500 = vmatpush1.msra.mxu0 0.0
    %3501 = vmatprep.subr.mxu0 0.0
    %3502 = vmatpush1.msra.mxu0 0.0
    %3503 = vmatprep.subr.mxu0 0.0
    %3504 = vmatpush1.msra.mxu0 0.0
    %3505 = vmatprep.subr.mxu0 0.0
    %3506 = vmatpush1.msra.mxu0 0.0
    %3507 = vmatprep.subr.mxu0 0.0
    %3508 = vmatpush1.msra.mxu0 0.0
    %3509 = vmatprep.subr.mxu0 0.0
    %3510 = vmatpush1.msra.mxu0 0.0
    %3511 = vmatprep.mubr.f32.mxu0 0.0
    %3512 = vmatmul.mubr.f32.gmra.mrb[0].mxu0 %v106
    %v3513 = vpop.f32.mrb[0].mxu0
    %v3514 = vadd.f32 0.0, %v3513
    %v3515 = vpop.f32.mrb[0].mxu0
    %3516 = vmatprep.mubr.f32.mxu0 0.0
    %3517 = vmatmul.mubr.f32.gmra.mrb[0].mxu0 %v109
    %v3518 = vpop.f32.mrb[0].mxu0
    %v3519 = vadd.f32 0.0, %v3518
    %v3520 = vpop.f32.mrb[0].mxu0
    %3521 = vdwg.mxu0
    %s3522 = scalar_lea.vmem %s5, 160
    %v3523 = vld [vmem:[%s3522] sm:$0xff]
    %v3524 = vld [vmem:[%s3522 + $0x8] sm:$0xff]
    %v3525 = vld [vmem:[%s3522 + $0x10] sm:$0xff]
    %v3526 = vld [vmem:[%s3522 + $0x18] sm:$0xff]
    %3527 = vmatprep.subr.mxu0 0.0
    %3528 = vmatpush1.msra.mxu0 %v3523
    %3529 = vmatprep.subr.mxu0 0.0
    %3530 = vmatpush1.msra.mxu0 %v3524
    %3531 = vmatprep.subr.mxu0 0.0
    %3532 = vmatpush1.msra.mxu0 %v3525
    %3533 = vmatprep.subr.mxu0 0.0
    %3534 = vmatpush1.msra.mxu0 %v3526
    %3535 = vmatprep.subr.mxu0 0.0
    %3536 = vmatpush1.msra.mxu0 0.0
    %3537 = vmatprep.subr.mxu0 0.0
    %3538 = vmatpush1.msra.mxu0 0.0
    %3539 = vmatprep.subr.mxu0 0.0
    %3540 = vmatpush1.msra.mxu0 0.0
    %3541 = vmatprep.subr.mxu0 0.0
    %3542 = vmatpush1.msra.mxu0 0.0
    %3543 = vmatprep.subr.mxu0 0.0
    %3544 = vmatpush1.msra.mxu0 0.0
    %3545 = vmatprep.subr.mxu0 0.0
    %3546 = vmatpush1.msra.mxu0 0.0
    %3547 = vmatprep.subr.mxu0 0.0
    %3548 = vmatpush1.msra.mxu0 0.0
    %3549 = vmatprep.subr.mxu0 0.0
    %3550 = vmatpush1.msra.mxu0 0.0
    %3551 = vmatprep.subr.mxu0 0.0
    %3552 = vmatpush1.msra.mxu0 0.0
    %3553 = vmatprep.subr.mxu0 0.0
    %3554 = vmatpush1.msra.mxu0 0.0
    %3555 = vmatprep.subr.mxu0 0.0
    %3556 = vmatpush1.msra.mxu0 0.0
    %3557 = vmatprep.subr.mxu0 0.0
    %3558 = vmatpush1.msra.mxu0 0.0
    %3559 = vmatprep.subr.mxu0 0.0
    %3560 = vmatpush1.msra.mxu0 0.0
    %3561 = vmatprep.subr.mxu0 0.0
    %3562 = vmatpush1.msra.mxu0 0.0
    %3563 = vmatprep.subr.mxu0 0.0
    %3564 = vmatpush1.msra.mxu0 0.0
    %3565 = vmatprep.subr.mxu0 0.0
    %3566 = vmatpush1.msra.mxu0 0.0
    %3567 = vmatprep.subr.mxu0 0.0
    %3568 = vmatpush1.msra.mxu0 0.0
    %3569 = vmatprep.subr.mxu0 0.0
    %3570 = vmatpush1.msra.mxu0 0.0
    %3571 = vmatprep.subr.mxu0 0.0
    %3572 = vmatpush1.msra.mxu0 0.0
    %3573 = vmatprep.subr.mxu0 0.0
    %3574 = vmatpush1.msra.mxu0 0.0
    %3575 = vmatprep.subr.mxu0 0.0
    %3576 = vmatpush1.msra.mxu0 0.0
    %3577 = vmatprep.subr.mxu0 0.0
    %3578 = vmatpush1.msra.mxu0 0.0
    %3579 = vmatprep.subr.mxu0 0.0
    %3580 = vmatpush1.msra.mxu0 0.0
    %3581 = vmatprep.subr.mxu0 0.0
    %3582 = vmatpush1.msra.mxu0 0.0
    %3583 = vmatprep.subr.mxu0 0.0
    %3584 = vmatpush1.msra.mxu0 0.0
    %3585 = vmatprep.subr.mxu0 0.0
    %3586 = vmatpush1.msra.mxu0 0.0
    %3587 = vmatprep.subr.mxu0 0.0
    %3588 = vmatpush1.msra.mxu0 0.0
    %3589 = vmatprep.subr.mxu0 0.0
    %3590 = vmatpush1.msra.mxu0 0.0
    %3591 = vmatprep.mubr.f32.mxu0 0.0
    %3592 = vmatmul.mubr.f32.gmra.mrb[0].mxu0 %v106
    %v3593 = vpop.f32.mrb[0].mxu0
    %v3594 = vadd.f32 0.0, %v3593
    %v3595 = vpop.f32.mrb[0].mxu0
    %3596 = vmatprep.mubr.f32.mxu0 0.0
    %3597 = vmatmul.mubr.f32.gmra.mrb[0].mxu0 %v109
    %v3598 = vpop.f32.mrb[0].mxu0
    %v3599 = vadd.f32 0.0, %v3598
    %v3600 = vpop.f32.mrb[0].mxu0
    %3601 = vdwg.mxu0
    %v3603 = vsel %vm344, %v3434, 0
    %v3606 = vsel %vm344, %v3514, 0
    %3608 = vmatprep.subr.mxu0 0.0
    %3609 = vmatpush1.xpose.msra.mxu0 %v3606
    %3610 = vmatprep.subr.mxu0 0.0
    %3611 = vmatpush1.xpose.msra.mxu0 0.0
    %3612 = vmatprep.subr.mxu0 0.0
    %3613 = vmatpush1.xpose.msra.mxu0 0.0
    %3614 = vmatprep.subr.mxu0 0.0
    %3615 = vmatpush1.xpose.msra.mxu0 0.0
    %3616 = vmatprep.subr.mxu0 0.0
    %3617 = vmatpush1.xpose.msra.mxu0 0.0
    %3618 = vmatprep.subr.mxu0 0.0
    %3619 = vmatpush1.xpose.msra.mxu0 0.0
    %3620 = vmatprep.subr.mxu0 0.0
    %3621 = vmatpush1.xpose.msra.mxu0 0.0
    %3622 = vmatprep.subr.mxu0 0.0
    %3623 = vmatpush1.xpose.msra.mxu0 0.0
    %3624 = vmatprep.subr.mxu0 0.0
    %3625 = vmatpush1.xpose.msra.mxu0 0.0
    %3626 = vmatprep.subr.mxu0 0.0
    %3627 = vmatpush1.xpose.msra.mxu0 0.0
    %3628 = vmatprep.subr.mxu0 0.0
    %3629 = vmatpush1.xpose.msra.mxu0 0.0
    %3630 = vmatprep.subr.mxu0 0.0
    %3631 = vmatpush1.xpose.msra.mxu0 0.0
    %3632 = vmatprep.subr.mxu0 0.0
    %3633 = vmatpush1.xpose.msra.mxu0 0.0
    %3634 = vmatprep.subr.mxu0 0.0
    %3635 = vmatpush1.xpose.msra.mxu0 0.0
    %3636 = vmatprep.subr.mxu0 0.0
    %3637 = vmatpush1.xpose.msra.mxu0 0.0
    %3638 = vmatprep.subr.mxu0 0.0
    %3639 = vmatpush1.xpose.msra.mxu0 0.0
    %3640 = vmatprep.subr.mxu0 0.0
    %3641 = vmatpush1.xpose.msra.mxu0 0.0
    %3642 = vmatprep.subr.mxu0 0.0
    %3643 = vmatpush1.xpose.msra.mxu0 0.0
    %3644 = vmatprep.subr.mxu0 0.0
    %3645 = vmatpush1.xpose.msra.mxu0 0.0
    %3646 = vmatprep.subr.mxu0 0.0
    %3647 = vmatpush1.xpose.msra.mxu0 0.0
    %3648 = vmatprep.subr.mxu0 0.0
    %3649 = vmatpush1.xpose.msra.mxu0 0.0
    %3650 = vmatprep.subr.mxu0 0.0
    %3651 = vmatpush1.xpose.msra.mxu0 0.0
    %3652 = vmatprep.subr.mxu0 0.0
    %3653 = vmatpush1.xpose.msra.mxu0 0.0
    %3654 = vmatprep.subr.mxu0 0.0
    %3655 = vmatpush1.xpose.msra.mxu0 0.0
    %3656 = vmatprep.subr.mxu0 0.0
    %3657 = vmatpush1.xpose.msra.mxu0 0.0
    %3658 = vmatprep.subr.mxu0 0.0
    %3659 = vmatpush1.xpose.msra.mxu0 0.0
    %3660 = vmatprep.subr.mxu0 0.0
    %3661 = vmatpush1.xpose.msra.mxu0 0.0
    %3662 = vmatprep.subr.mxu0 0.0
    %3663 = vmatpush1.xpose.msra.mxu0 0.0
    %3664 = vmatprep.subr.mxu0 0.0
    %3665 = vmatpush1.xpose.msra.mxu0 0.0
    %3666 = vmatprep.subr.mxu0 0.0
    %3667 = vmatpush1.xpose.msra.mxu0 0.0
    %3668 = vmatprep.subr.mxu0 0.0
    %3669 = vmatpush1.xpose.msra.mxu0 0.0
    %3670 = vmatprep.subr.mxu0 0.0
    %3671 = vmatpush1.xpose.msra.mxu0 0.0
    %3672 = vmatprep.mubr.f32.mxu0 0.0
    %3673 = vmatmul.mubr.f32.gmra.mrb[0].mxu0 %v3603
    %v3674 = vpop.f32.mrb[0].mxu0
    %v3675 = vadd.f32 0.0, %v3674
    %v3676 = vpop.f32.mrb[0].mxu0
    %3677 = vdwg.mxu0
    %v3679 = vsel %vm344, %v3439, 0
    %v3682 = vsel %vm344, %v3519, 0
    %3684 = vmatprep.subr.mxu0 0.0
    %3685 = vmatpush1.xpose.msra.mxu0 %v3682
    %3686 = vmatprep.subr.mxu0 0.0
    %3687 = vmatpush1.xpose.msra.mxu0 0.0
    %3688 = vmatprep.subr.mxu0 0.0
    %3689 = vmatpush1.xpose.msra.mxu0 0.0
    %3690 = vmatprep.subr.mxu0 0.0
    %3691 = vmatpush1.xpose.msra.mxu0 0.0
    %3692 = vmatprep.subr.mxu0 0.0
    %3693 = vmatpush1.xpose.msra.mxu0 0.0
    %3694 = vmatprep.subr.mxu0 0.0
    %3695 = vmatpush1.xpose.msra.mxu0 0.0
    %3696 = vmatprep.subr.mxu0 0.0
    %3697 = vmatpush1.xpose.msra.mxu0 0.0
    %3698 = vmatprep.subr.mxu0 0.0
    %3699 = vmatpush1.xpose.msra.mxu0 0.0
    %3700 = vmatprep.subr.mxu0 0.0
    %3701 = vmatpush1.xpose.msra.mxu0 0.0
    %3702 = vmatprep.subr.mxu0 0.0
    %3703 = vmatpush1.xpose.msra.mxu0 0.0
    %3704 = vmatprep.subr.mxu0 0.0
    %3705 = vmatpush1.xpose.msra.mxu0 0.0
    %3706 = vmatprep.subr.mxu0 0.0
    %3707 = vmatpush1.xpose.msra.mxu0 0.0
    %3708 = vmatprep.subr.mxu0 0.0
    %3709 = vmatpush1.xpose.msra.mxu0 0.0
    %3710 = vmatprep.subr.mxu0 0.0
    %3711 = vmatpush1.xpose.msra.mxu0 0.0
    %3712 = vmatprep.subr.mxu0 0.0
    %3713 = vmatpush1.xpose.msra.mxu0 0.0
    %3714 = vmatprep.subr.mxu0 0.0
    %3715 = vmatpush1.xpose.msra.mxu0 0.0
    %3716 = vmatprep.subr.mxu0 0.0
    %3717 = vmatpush1.xpose.msra.mxu0 0.0
    %3718 = vmatprep.subr.mxu0 0.0
    %3719 = vmatpush1.xpose.msra.mxu0 0.0
    %3720 = vmatprep.subr.mxu0 0.0
    %3721 = vmatpush1.xpose.msra.mxu0 0.0
    %3722 = vmatprep.subr.mxu0 0.0
    %3723 = vmatpush1.xpose.msra.mxu0 0.0
    %3724 = vmatprep.subr.mxu0 0.0
    %3725 = vmatpush1.xpose.msra.mxu0 0.0
    %3726 = vmatprep.subr.mxu0 0.0
    %3727 = vmatpush1.xpose.msra.mxu0 0.0
    %3728 = vmatprep.subr.mxu0 0.0
    %3729 = vmatpush1.xpose.msra.mxu0 0.0
    %3730 = vmatprep.subr.mxu0 0.0
    %3731 = vmatpush1.xpose.msra.mxu0 0.0
    %3732 = vmatprep.subr.mxu0 0.0
    %3733 = vmatpush1.xpose.msra.mxu0 0.0
    %3734 = vmatprep.subr.mxu0 0.0
    %3735 = vmatpush1.xpose.msra.mxu0 0.0
    %3736 = vmatprep.subr.mxu0 0.0
    %3737 = vmatpush1.xpose.msra.mxu0 0.0
    %3738 = vmatprep.subr.mxu0 0.0
    %3739 = vmatpush1.xpose.msra.mxu0 0.0
    %3740 = vmatprep.subr.mxu0 0.0
    %3741 = vmatpush1.xpose.msra.mxu0 0.0
    %3742 = vmatprep.subr.mxu0 0.0
    %3743 = vmatpush1.xpose.msra.mxu0 0.0
    %3744 = vmatprep.subr.mxu0 0.0
    %3745 = vmatpush1.xpose.msra.mxu0 0.0
    %3746 = vmatprep.subr.mxu0 0.0
    %3747 = vmatpush1.xpose.msra.mxu0 0.0
    %3748 = vmatprep.mubr.f32.mxu0 0.0
    %3749 = vmatmul.mubr.f32.gmra.mrb[0].mxu0 %v3679
    %v3750 = vpop.f32.mrb[0].mxu0
    %v3751 = vadd.f32 0.0, %v3750
    %v3752 = vpop.f32.mrb[0].mxu0
    %3753 = vdwg.mxu0
    %v3754 = vmul.f32 %v3675, 0.4472136
    %v3755 = vmul.f32 %v3751, 0.4472136
    %v3756 = vsel %vm100, %v3754, -1e+30
    %v3757 = vsel %vm100, %v3755, -1e+30
    %v3758 = vsel %vm501, %v3756, -inf
    %3759 = vmax.xlane.f32.xlu0 %v3758
    %v3760 = vpop.xlane.xlu0 %3759
    %v3761 = vsel %vm501, %v3757, -inf
    %3762 = vmax.xlane.f32.xlu0 %v3761
    %v3763 = vpop.xlane.xlu0 %3762
    %v3764 = vsub.f32 %v3756, %v3760
    %v3765 = vsub.f32 %v3757, %v3763
    %v3766 = vmul.f32 %v3764, 1.442695
    %v3767 = vpow.pop %v3766
    %v3768 = vmul.f32 %v3765, 1.442695
    %v3769 = vpow.pop %v3768
    %v3770 = vsel %vm501, %v3767, 0.0
    %3771 = vadd.xlane.f32.xlu0 %v3770
    %v3772 = vpop.xlane.xlu0 %3771
    %v3773 = vsel %vm501, %v3769, 0.0
    %3774 = vadd.xlane.f32.xlu0 %v3773
    %v3775 = vpop.xlane.xlu0 %3774
    %v3776 = vrcp.pop %v3772
    %v3777 = vmul.f32 %v3767, %v3776
    %v3778 = vrcp.pop %v3775
    %v3779 = vmul.f32 %v3769, %v3778
    %v3781 = vsel %vm501, %v3777, 0
    %3783 = vmatprep.subr.mxu0 0.0
    %3784 = vmatpush1.msra.mxu0 %v3594
    %3785 = vmatprep.subr.mxu0 0.0
    %3786 = vmatpush1.msra.mxu0 0.0
    %3787 = vmatprep.subr.mxu0 0.0
    %3788 = vmatpush1.msra.mxu0 0.0
    %3789 = vmatprep.subr.mxu0 0.0
    %3790 = vmatpush1.msra.mxu0 0.0
    %3791 = vmatprep.subr.mxu0 0.0
    %3792 = vmatpush1.msra.mxu0 0.0
    %3793 = vmatprep.subr.mxu0 0.0
    %3794 = vmatpush1.msra.mxu0 0.0
    %3795 = vmatprep.subr.mxu0 0.0
    %3796 = vmatpush1.msra.mxu0 0.0
    %3797 = vmatprep.subr.mxu0 0.0
    %3798 = vmatpush1.msra.mxu0 0.0
    %3799 = vmatprep.subr.mxu0 0.0
    %3800 = vmatpush1.msra.mxu0 0.0
    %3801 = vmatprep.subr.mxu0 0.0
    %3802 = vmatpush1.msra.mxu0 0.0
    %3803 = vmatprep.subr.mxu0 0.0
    %3804 = vmatpush1.msra.mxu0 0.0
    %3805 = vmatprep.subr.mxu0 0.0
    %3806 = vmatpush1.msra.mxu0 0.0
    %3807 = vmatprep.subr.mxu0 0.0
    %3808 = vmatpush1.msra.mxu0 0.0
    %3809 = vmatprep.subr.mxu0 0.0
    %3810 = vmatpush1.msra.mxu0 0.0
    %3811 = vmatprep.subr.mxu0 0.0
    %3812 = vmatpush1.msra.mxu0 0.0
    %3813 = vmatprep.subr.mxu0 0.0
    %3814 = vmatpush1.msra.mxu0 0.0
    %3815 = vmatprep.subr.mxu0 0.0
    %3816 = vmatpush1.msra.mxu0 0.0
    %3817 = vmatprep.subr.mxu0 0.0
    %3818 = vmatpush1.msra.mxu0 0.0
    %3819 = vmatprep.subr.mxu0 0.0
    %3820 = vmatpush1.msra.mxu0 0.0
    %3821 = vmatprep.subr.mxu0 0.0
    %3822 = vmatpush1.msra.mxu0 0.0
    %3823 = vmatprep.subr.mxu0 0.0
    %3824 = vmatpush1.msra.mxu0 0.0
    %3825 = vmatprep.subr.mxu0 0.0
    %3826 = vmatpush1.msra.mxu0 0.0
    %3827 = vmatprep.subr.mxu0 0.0
    %3828 = vmatpush1.msra.mxu0 0.0
    %3829 = vmatprep.subr.mxu0 0.0
    %3830 = vmatpush1.msra.mxu0 0.0
    %3831 = vmatprep.subr.mxu0 0.0
    %3832 = vmatpush1.msra.mxu0 0.0
    %3833 = vmatprep.subr.mxu0 0.0
    %3834 = vmatpush1.msra.mxu0 0.0
    %3835 = vmatprep.subr.mxu0 0.0
    %3836 = vmatpush1.msra.mxu0 0.0
    %3837 = vmatprep.subr.mxu0 0.0
    %3838 = vmatpush1.msra.mxu0 0.0
    %3839 = vmatprep.subr.mxu0 0.0
    %3840 = vmatpush1.msra.mxu0 0.0
    %3841 = vmatprep.subr.mxu0 0.0
    %3842 = vmatpush1.msra.mxu0 0.0
    %3843 = vmatprep.subr.mxu0 0.0
    %3844 = vmatpush1.msra.mxu0 0.0
    %3845 = vmatprep.subr.mxu0 0.0
    %3846 = vmatpush1.msra.mxu0 0.0
    %3847 = vmatprep.mubr.f32.mxu0 0.0
    %3848 = vmatmul.mubr.f32.gmra.mrb[0].mxu0 %v3781
    %v3849 = vpop.f32.mrb[0].mxu0
    %v3850 = vadd.f32 0.0, %v3849
    %v3851 = vpop.f32.mrb[0].mxu0
    %3852 = vdwg.mxu0
    %v3854 = vsel %vm501, %v3779, 0
    %3856 = vmatprep.subr.mxu0 0.0
    %3857 = vmatpush1.msra.mxu0 %v3599
    %3858 = vmatprep.subr.mxu0 0.0
    %3859 = vmatpush1.msra.mxu0 0.0
    %3860 = vmatprep.subr.mxu0 0.0
    %3861 = vmatpush1.msra.mxu0 0.0
    %3862 = vmatprep.subr.mxu0 0.0
    %3863 = vmatpush1.msra.mxu0 0.0
    %3864 = vmatprep.subr.mxu0 0.0
    %3865 = vmatpush1.msra.mxu0 0.0
    %3866 = vmatprep.subr.mxu0 0.0
    %3867 = vmatpush1.msra.mxu0 0.0
    %3868 = vmatprep.subr.mxu0 0.0
    %3869 = vmatpush1.msra.mxu0 0.0
    %3870 = vmatprep.subr.mxu0 0.0
    %3871 = vmatpush1.msra.mxu0 0.0
    %3872 = vmatprep.subr.mxu0 0.0
    %3873 = vmatpush1.msra.mxu0 0.0
    %3874 = vmatprep.subr.mxu0 0.0
    %3875 = vmatpush1.msra.mxu0 0.0
    %3876 = vmatprep.subr.mxu0 0.0
    %3877 = vmatpush1.msra.mxu0 0.0
    %3878 = vmatprep.subr.mxu0 0.0
    %3879 = vmatpush1.msra.mxu0 0.0
    %3880 = vmatprep.subr.mxu0 0.0
    %3881 = vmatpush1.msra.mxu0 0.0
    %3882 = vmatprep.subr.mxu0 0.0
    %3883 = vmatpush1.msra.mxu0 0.0
    %3884 = vmatprep.subr.mxu0 0.0
    %3885 = vmatpush1.msra.mxu0 0.0
    %3886 = vmatprep.subr.mxu0 0.0
    %3887 = vmatpush1.msra.mxu0 0.0
    %3888 = vmatprep.subr.mxu0 0.0
    %3889 = vmatpush1.msra.mxu0 0.0
    %3890 = vmatprep.subr.mxu0 0.0
    %3891 = vmatpush1.msra.mxu0 0.0
    %3892 = vmatprep.subr.mxu0 0.0
    %3893 = vmatpush1.msra.mxu0 0.0
    %3894 = vmatprep.subr.mxu0 0.0
    %3895 = vmatpush1.msra.mxu0 0.0
    %3896 = vmatprep.subr.mxu0 0.0
    %3897 = vmatpush1.msra.mxu0 0.0
    %3898 = vmatprep.subr.mxu0 0.0
    %3899 = vmatpush1.msra.mxu0 0.0
    %3900 = vmatprep.subr.mxu0 0.0
    %3901 = vmatpush1.msra.mxu0 0.0
    %3902 = vmatprep.subr.mxu0 0.0
    %3903 = vmatpush1.msra.mxu0 0.0
    %3904 = vmatprep.subr.mxu0 0.0
    %3905 = vmatpush1.msra.mxu0 0.0
    %3906 = vmatprep.subr.mxu0 0.0
    %3907 = vmatpush1.msra.mxu0 0.0
    %3908 = vmatprep.subr.mxu0 0.0
    %3909 = vmatpush1.msra.mxu0 0.0
    %3910 = vmatprep.subr.mxu0 0.0
    %3911 = vmatpush1.msra.mxu0 0.0
    %3912 = vmatprep.subr.mxu0 0.0
    %3913 = vmatpush1.msra.mxu0 0.0
    %3914 = vmatprep.subr.mxu0 0.0
    %3915 = vmatpush1.msra.mxu0 0.0
    %3916 = vmatprep.subr.mxu0 0.0
    %3917 = vmatpush1.msra.mxu0 0.0
    %3918 = vmatprep.subr.mxu0 0.0
    %3919 = vmatpush1.msra.mxu0 0.0
    %3920 = vmatprep.mubr.f32.mxu0 0.0
    %3921 = vmatmul.mubr.f32.gmra.mrb[0].mxu0 %v3854
    %v3922 = vpop.f32.mrb[0].mxu0
    %v3923 = vadd.f32 0.0, %v3922
    %v3924 = vpop.f32.mrb[0].mxu0
    %3925 = vdwg.mxu0
    %s3926 = scalar_lea.vmem %s6, 40
    %v3927 = vld [vmem:[%s3926] sm:$0x1f]
    %v3929 = vsel %vm344, %v3850, 0
    %v3932 = vsel %vm344, %v3923, 0
    %v3935 = vsel %vm1243, %v3927, 0
    %3937 = vmatprep.subr.mxu0 0.0
    %3938 = vmatpush1.msra.mxu0 %v3935
    %3939 = vmatprep.subr.mxu0 0.0
    %3940 = vmatpush1.msra.mxu0 0.0
    %3941 = vmatprep.subr.mxu0 0.0
    %3942 = vmatpush1.msra.mxu0 0.0
    %3943 = vmatprep.subr.mxu0 0.0
    %3944 = vmatpush1.msra.mxu0 0.0
    %3945 = vmatprep.subr.mxu0 0.0
    %3946 = vmatpush1.msra.mxu0 0.0
    %3947 = vmatprep.subr.mxu0 0.0
    %3948 = vmatpush1.msra.mxu0 0.0
    %3949 = vmatprep.subr.mxu0 0.0
    %3950 = vmatpush1.msra.mxu0 0.0
    %3951 = vmatprep.subr.mxu0 0.0
    %3952 = vmatpush1.msra.mxu0 0.0
    %3953 = vmatprep.subr.mxu0 0.0
    %3954 = vmatpush1.msra.mxu0 0.0
    %3955 = vmatprep.subr.mxu0 0.0
    %3956 = vmatpush1.msra.mxu0 0.0
    %3957 = vmatprep.subr.mxu0 0.0
    %3958 = vmatpush1.msra.mxu0 0.0
    %3959 = vmatprep.subr.mxu0 0.0
    %3960 = vmatpush1.msra.mxu0 0.0
    %3961 = vmatprep.subr.mxu0 0.0
    %3962 = vmatpush1.msra.mxu0 0.0
    %3963 = vmatprep.subr.mxu0 0.0
    %3964 = vmatpush1.msra.mxu0 0.0
    %3965 = vmatprep.subr.mxu0 0.0
    %3966 = vmatpush1.msra.mxu0 0.0
    %3967 = vmatprep.subr.mxu0 0.0
    %3968 = vmatpush1.msra.mxu0 0.0
    %3969 = vmatprep.subr.mxu0 0.0
    %3970 = vmatpush1.msra.mxu0 0.0
    %3971 = vmatprep.subr.mxu0 0.0
    %3972 = vmatpush1.msra.mxu0 0.0
    %3973 = vmatprep.subr.mxu0 0.0
    %3974 = vmatpush1.msra.mxu0 0.0
    %3975 = vmatprep.subr.mxu0 0.0
    %3976 = vmatpush1.msra.mxu0 0.0
    %3977 = vmatprep.subr.mxu0 0.0
    %3978 = vmatpush1.msra.mxu0 0.0
    %3979 = vmatprep.subr.mxu0 0.0
    %3980 = vmatpush1.msra.mxu0 0.0
    %3981 = vmatprep.subr.mxu0 0.0
    %3982 = vmatpush1.msra.mxu0 0.0
    %3983 = vmatprep.subr.mxu0 0.0
    %3984 = vmatpush1.msra.mxu0 0.0
    %3985 = vmatprep.subr.mxu0 0.0
    %3986 = vmatpush1.msra.mxu0 0.0
    %3987 = vmatprep.subr.mxu0 0.0
    %3988 = vmatpush1.msra.mxu0 0.0
    %3989 = vmatprep.subr.mxu0 0.0
    %3990 = vmatpush1.msra.mxu0 0.0
    %3991 = vmatprep.subr.mxu0 0.0
    %3992 = vmatpush1.msra.mxu0 0.0
    %3993 = vmatprep.subr.mxu0 0.0
    %3994 = vmatpush1.msra.mxu0 0.0
    %3995 = vmatprep.subr.mxu0 0.0
    %3996 = vmatpush1.msra.mxu0 0.0
    %3997 = vmatprep.subr.mxu0 0.0
    %3998 = vmatpush1.msra.mxu0 0.0
    %3999 = vmatprep.subr.mxu0 0.0
    %4000 = vmatpush1.msra.mxu0 0.0
    %4001 = vmatprep.mubr.f32.mxu0 0.0
    %4002 = vmatmul.mubr.f32.gmra.mrb[0].mxu0 %v3929
    %v4003 = vpop.f32.mrb[0].mxu0
    %v4004 = vadd.f32 0.0, %v4003
    %v4005 = vpop.f32.mrb[0].mxu0
    %4006 = vmatprep.mubr.f32.mxu0 0.0
    %4007 = vmatmul.mubr.f32.gmra.mrb[0].mxu0 %v3932
    %v4008 = vpop.f32.mrb[0].mxu0
    %v4009 = vadd.f32 0.0, %v4008
    %v4010 = vpop.f32.mrb[0].mxu0
    %4011 = vdwg.mxu0
    %v4012 = vadd.f32 %v3360, %v4004
    %v4013 = vadd.f32 %v3361, %v4009
    %v4014 = vld [vmem:[%s7] sm:$0x1]
    %v4016 = vlaneseq
    %v4017 = vshrl.u32 %v4016, 7
    %v4018 = vsub.s32 0, %v4017
    %v4019 = vrot.slane %v4014, %v4018
    %v4021 = vadd.f32 %v4012, %v4019
    %v4022 = vadd.f32 %v4013, %v4019
    %v4023 = vadd.f32 %v48, %v4021
    %v4024 = vadd.f32 %v49, %v4022
    %v4025 = vld [vmem:[%s8] sm:$0x1]
    %v4026 = vld [vmem:[%s9] sm:$0x1]
    %v4027 = vsel %vm52, %v4023, 0.0
    %4028 = vadd.xlane.f32.xlu0 %v4027
    %v4029 = vpop.xlane.xlu0 %4028
    %v4030 = vsel %vm52, %v4024, 0.0
    %4031 = vadd.xlane.f32.xlu0 %v4030
    %v4032 = vpop.xlane.xlu0 %4031
    %v4033 = vmul.f32 %v4029, %v59
    %v4034 = vmul.f32 %v4032, %v59
    %v4035 = vsub.f32 %v4023, %v4033
    %v4036 = vsub.f32 %v4024, %v4034
    %v4037 = vmul.f32 %v4035, %v4035
    %v4038 = vmul.f32 %v4036, %v4036
    %v4039 = vsel %vm52, %v4037, 0.0
    %4040 = vadd.xlane.f32.xlu0 %v4039
    %v4041 = vpop.xlane.xlu0 %4040
    %v4042 = vsel %vm52, %v4038, 0.0
    %4043 = vadd.xlane.f32.xlu0 %v4042
    %v4044 = vpop.xlane.xlu0 %4043
    %v4045 = vmul.f32 %v4041, %v59
    %v4046 = vmul.f32 %v4044, %v59
    %v4047 = vadd.f32 %v4045, 1e-05
    %v4048 = vadd.f32 %v4046, 1e-05
    %v4049 = vrsqrt.pop %v4047
    %v4050 = vrsqrt.pop %v4048
    %v4051 = vmul.f32 %v4035, %v4049
    %v4052 = vmul.f32 %v4036, %v4050
    %v4054 = vlaneseq
    %v4055 = vshrl.u32 %v4054, 7
    %v4056 = vsub.s32 0, %v4055
    %v4057 = vrot.slane %v4025, %v4056
    %v4059 = vmul.f32 %v4051, %v4057
    %v4060 = vmul.f32 %v4052, %v4057
    %v4062 = vlaneseq
    %v4063 = vshrl.u32 %v4062, 7
    %v4064 = vsub.s32 0, %v4063
    %v4065 = vrot.slane %v4026, %v4064
    %v4067 = vadd.f32 %v4059, %v4065
    %v4068 = vadd.f32 %v4060, %v4065
    %v4069 = vld [vmem:[%s10] sm:$0xff]
    %v4070 = vld [vmem:[%s10 + $0x8] sm:$0xff]
    %v4071 = vld [vmem:[%s10 + $0x10] sm:$0xff]
    %v4072 = vld [vmem:[%s10 + $0x18] sm:$0xff]
    %v4073 = vld [vmem:[%s11] sm:$0x1]
    %v4075 = vlaneseq
    %v4076 = vshrl.u32 %v4075, 7
    %v4077 = vsub.s32 0, %v4076
    %v4078 = vrot.slane %v4073, %v4077
    %v4081 = vsel %vm52, %v4067, 0
    %v4084 = vsel %vm52, %v4068, 0
    %4086 = vmatprep.subr.mxu0 0.0
    %4087 = vmatpush1.msra.mxu0 %v4069
    %4088 = vmatprep.subr.mxu0 0.0
    %4089 = vmatpush1.msra.mxu0 %v4070
    %4090 = vmatprep.subr.mxu0 0.0
    %4091 = vmatpush1.msra.mxu0 %v4071
    %4092 = vmatprep.subr.mxu0 0.0
    %4093 = vmatpush1.msra.mxu0 %v4072
    %4094 = vmatprep.subr.mxu0 0.0
    %4095 = vmatpush1.msra.mxu0 0.0
    %4096 = vmatprep.subr.mxu0 0.0
    %4097 = vmatpush1.msra.mxu0 0.0
    %4098 = vmatprep.subr.mxu0 0.0
    %4099 = vmatpush1.msra.mxu0 0.0
    %4100 = vmatprep.subr.mxu0 0.0
    %4101 = vmatpush1.msra.mxu0 0.0
    %4102 = vmatprep.subr.mxu0 0.0
    %4103 = vmatpush1.msra.mxu0 0.0
    %4104 = vmatprep.subr.mxu0 0.0
    %4105 = vmatpush1.msra.mxu0 0.0
    %4106 = vmatprep.subr.mxu0 0.0
    %4107 = vmatpush1.msra.mxu0 0.0
    %4108 = vmatprep.subr.mxu0 0.0
    %4109 = vmatpush1.msra.mxu0 0.0
    %4110 = vmatprep.subr.mxu0 0.0
    %4111 = vmatpush1.msra.mxu0 0.0
    %4112 = vmatprep.subr.mxu0 0.0
    %4113 = vmatpush1.msra.mxu0 0.0
    %4114 = vmatprep.subr.mxu0 0.0
    %4115 = vmatpush1.msra.mxu0 0.0
    %4116 = vmatprep.subr.mxu0 0.0
    %4117 = vmatpush1.msra.mxu0 0.0
    %4118 = vmatprep.subr.mxu0 0.0
    %4119 = vmatpush1.msra.mxu0 0.0
    %4120 = vmatprep.subr.mxu0 0.0
    %4121 = vmatpush1.msra.mxu0 0.0
    %4122 = vmatprep.subr.mxu0 0.0
    %4123 = vmatpush1.msra.mxu0 0.0
    %4124 = vmatprep.subr.mxu0 0.0
    %4125 = vmatpush1.msra.mxu0 0.0
    %4126 = vmatprep.subr.mxu0 0.0
    %4127 = vmatpush1.msra.mxu0 0.0
    %4128 = vmatprep.subr.mxu0 0.0
    %4129 = vmatpush1.msra.mxu0 0.0
    %4130 = vmatprep.subr.mxu0 0.0
    %4131 = vmatpush1.msra.mxu0 0.0
    %4132 = vmatprep.subr.mxu0 0.0
    %4133 = vmatpush1.msra.mxu0 0.0
    %4134 = vmatprep.subr.mxu0 0.0
    %4135 = vmatpush1.msra.mxu0 0.0
    %4136 = vmatprep.subr.mxu0 0.0
    %4137 = vmatpush1.msra.mxu0 0.0
    %4138 = vmatprep.subr.mxu0 0.0
    %4139 = vmatpush1.msra.mxu0 0.0
    %4140 = vmatprep.subr.mxu0 0.0
    %4141 = vmatpush1.msra.mxu0 0.0
    %4142 = vmatprep.subr.mxu0 0.0
    %4143 = vmatpush1.msra.mxu0 0.0
    %4144 = vmatprep.subr.mxu0 0.0
    %4145 = vmatpush1.msra.mxu0 0.0
    %4146 = vmatprep.subr.mxu0 0.0
    %4147 = vmatpush1.msra.mxu0 0.0
    %4148 = vmatprep.subr.mxu0 0.0
    %4149 = vmatpush1.msra.mxu0 0.0
    %4150 = vmatprep.mubr.f32.mxu0 0.0
    %4151 = vmatmul.mubr.f32.gmra.mrb[0].mxu0 %v4081
    %v4152 = vpop.f32.mrb[0].mxu0
    %v4153 = vadd.f32 %v4078, %v4152
    %v4154 = vpop.f32.mrb[0].mxu0
    %4155 = vmatprep.mubr.f32.mxu0 0.0
    %4156 = vmatmul.mubr.f32.gmra.mrb[0].mxu0 %v4084
    %v4157 = vpop.f32.mrb[0].mxu0
    %v4158 = vadd.f32 %v4078, %v4157
    %v4159 = vpop.f32.mrb[0].mxu0
    %4160 = vdwg.mxu0
    %v4161 = vmax.f32 %v4153, 0.0
    %v4162 = vmax.f32 %v4158, 0.0
    %v4163 = vld [vmem:[%s12] sm:$0xff]
    %v4164 = vld [vmem:[%s12 + $0x8] sm:$0xff]
    %v4165 = vld [vmem:[%s12 + $0x10] sm:$0xff]
    %v4166 = vld [vmem:[%s12 + $0x18] sm:$0xff]
    %v4167 = vld [vmem:[%s12 + $0x20] sm:$0xff]
    %v4168 = vld [vmem:[%s12 + $0x28] sm:$0xff]
    %v4169 = vld [vmem:[%s12 + $0x30] sm:$0xff]
    %v4170 = vld [vmem:[%s12 + $0x38] sm:$0xff]
    %v4171 = vld [vmem:[%s12 + $0x40] sm:$0xff]
    %v4172 = vld [vmem:[%s12 + $0x48] sm:$0xff]
    %v4173 = vld [vmem:[%s12 + $0x50] sm:$0xff]
    %v4174 = vld [vmem:[%s12 + $0x58] sm:$0xff]
    %v4175 = vld [vmem:[%s12 + $0x60] sm:$0xff]
    %v4176 = vld [vmem:[%s12 + $0x68] sm:$0xff]
    %v4177 = vld [vmem:[%s12 + $0x70] sm:$0xff]
    %v4178 = vld [vmem:[%s12 + $0x78] sm:$0xff]
    %v4179 = vld [vmem:[%s13] sm:$0x1]
    %v4181 = vlaneseq
    %v4182 = vshrl.u32 %v4181, 7
    %v4183 = vsub.s32 0, %v4182
    %v4184 = vrot.slane %v4179, %v4183
    %4186 = vmatprep.subr.mxu0 0.0
    %4187 = vmatpush1.msra.mxu0 %v4163
    %4188 = vmatprep.subr.mxu0 0.0
    %4189 = vmatpush1.msra.mxu0 %v4164
    %4190 = vmatprep.subr.mxu0 0.0
    %4191 = vmatpush1.msra.mxu0 %v4165
    %4192 = vmatprep.subr.mxu0 0.0
    %4193 = vmatpush1.msra.mxu0 %v4166
    %4194 = vmatprep.subr.mxu0 0.0
    %4195 = vmatpush1.msra.mxu0 %v4167
    %4196 = vmatprep.subr.mxu0 0.0
    %4197 = vmatpush1.msra.mxu0 %v4168
    %4198 = vmatprep.subr.mxu0 0.0
    %4199 = vmatpush1.msra.mxu0 %v4169
    %4200 = vmatprep.subr.mxu0 0.0
    %4201 = vmatpush1.msra.mxu0 %v4170
    %4202 = vmatprep.subr.mxu0 0.0
    %4203 = vmatpush1.msra.mxu0 %v4171
    %4204 = vmatprep.subr.mxu0 0.0
    %4205 = vmatpush1.msra.mxu0 %v4172
    %4206 = vmatprep.subr.mxu0 0.0
    %4207 = vmatpush1.msra.mxu0 %v4173
    %4208 = vmatprep.subr.mxu0 0.0
    %4209 = vmatpush1.msra.mxu0 %v4174
    %4210 = vmatprep.subr.mxu0 0.0
    %4211 = vmatpush1.msra.mxu0 %v4175
    %4212 = vmatprep.subr.mxu0 0.0
    %4213 = vmatpush1.msra.mxu0 %v4176
    %4214 = vmatprep.subr.mxu0 0.0
    %4215 = vmatpush1.msra.mxu0 %v4177
    %4216 = vmatprep.subr.mxu0 0.0
    %4217 = vmatpush1.msra.mxu0 %v4178
    %4218 = vmatprep.subr.mxu0 0.0
    %4219 = vmatpush1.msra.mxu0 0.0
    %4220 = vmatprep.subr.mxu0 0.0
    %4221 = vmatpush1.msra.mxu0 0.0
    %4222 = vmatprep.subr.mxu0 0.0
    %4223 = vmatpush1.msra.mxu0 0.0
    %4224 = vmatprep.subr.mxu0 0.0
    %4225 = vmatpush1.msra.mxu0 0.0
    %4226 = vmatprep.subr.mxu0 0.0
    %4227 = vmatpush1.msra.mxu0 0.0
    %4228 = vmatprep.subr.mxu0 0.0
    %4229 = vmatpush1.msra.mxu0 0.0
    %4230 = vmatprep.subr.mxu0 0.0
    %4231 = vmatpush1.msra.mxu0 0.0
    %4232 = vmatprep.subr.mxu0 0.0
    %4233 = vmatpush1.msra.mxu0 0.0
    %4234 = vmatprep.subr.mxu0 0.0
    %4235 = vmatpush1.msra.mxu0 0.0
    %4236 = vmatprep.subr.mxu0 0.0
    %4237 = vmatpush1.msra.mxu0 0.0
    %4238 = vmatprep.subr.mxu0 0.0
    %4239 = vmatpush1.msra.mxu0 0.0
    %4240 = vmatprep.subr.mxu0 0.0
    %4241 = vmatpush1.msra.mxu0 0.0
    %4242 = vmatprep.subr.mxu0 0.0
    %4243 = vmatpush1.msra.mxu0 0.0
    %4244 = vmatprep.subr.mxu0 0.0
    %4245 = vmatpush1.msra.mxu0 0.0
    %4246 = vmatprep.subr.mxu0 0.0
    %4247 = vmatpush1.msra.mxu0 0.0
    %4248 = vmatprep.subr.mxu0 0.0
    %4249 = vmatpush1.msra.mxu0 0.0
    %4250 = vmatprep.mubr.f32.mxu0 0.0
    %4251 = vmatmul.mubr.f32.gmra.mrb[0].mxu0 %v4161
    %v4252 = vpop.f32.mrb[0].mxu0
    %v4253 = vadd.f32 %v4184, %v4252
    %v4254 = vpop.f32.mrb[0].mxu0
    %4255 = vmatprep.mubr.f32.mxu0 0.0
    %4256 = vmatmul.mubr.f32.gmra.mrb[0].mxu0 %v4162
    %v4257 = vpop.f32.mrb[0].mxu0
    %v4258 = vadd.f32 %v4184, %v4257
    %v4259 = vpop.f32.mrb[0].mxu0
    %4260 = vdwg.mxu0
    %v4261 = vadd.f32 %v4023, %v4253
    %v4262 = vadd.f32 %v4024, %v4258
    %4263 = vst.msk [vmem:[#allocation2] sm:$0xff] %vm52, %v4261
    %4264 = vst.msk [vmem:[#allocation2 + $0x8] sm:$0xff] %vm52, %v4262
    // Predicated region
    $region58: #{tpu_custom_call.1} parent=1 // pred_check
      _
    $region59: #{tpu_custom_call.1} parent=1 // pred_check_branch
      %4266 = sbr.rel (0) target = $region61
    $region60: #{tpu_custom_call.1} parent=1 // pred_region
      %s4268 = ssub.s32 256, 256
      %4269 = vsyncadd [#allocation3], %s4268
      %s4270 = sshll.u32 [#allocation2], 4
      %s4271 = int_to_ptr.vmem [resolvable:$true] %s4270
      %4276 = dma.vmem_to_hbm [thread:$0]  %s4271, 256, %s14, [#allocation3], 128, 128, 8
    $region61: #{tpu_custom_call.1} parent=1 // pred_fallthru
      _
    // Predicated region
    $region62: #{tpu_custom_call.1} parent=1 // pred_check
      _
    $region63: #{tpu_custom_call.1} parent=1 // pred_check_branch
      %4278 = sbr.rel (0) target = $region65
    $region64: #{tpu_custom_call.1} parent=1 // pred_region
      %4279 = dma.done [#allocation3], 256
    $region65: #{tpu_custom_call.1} parent=1 // pred_fallthru
      _
    %4280 = vsyncpa [#allocation3], 1

</llo_original>
